<compile_context>
chip_gen: v6e
topology: v6e:2x2x1
jax: 0.10.0
libtpu: 0.0.40
codegen_flags: <defaults>
</compile_context>

<pallas_src>
import jax
import jax.numpy as jnp
from jax.experimental import pallas as pl
from jax.experimental.pallas import tpu as pltpu


_LANES = 128
_SUBLANES = 8


def _round_up(x, m):
    return (x + m - 1) // m * m


def _device_kind():
    try:
        return jax.devices()[0].device_kind.lower()
    except Exception:  # pragma: no cover
        return ""


def _tpu_params():
    """Generation-aware knobs.

    v7x: 64 MiB VMEM/TC, 2 TCs/chip, 256-wide MXU  -> tight budget, split 1-step grids.
    v6e: 128 MiB VMEM, 256-wide MXU                -> big batch tiles.
    v5e/v5p: 128 MiB VMEM, 128-wide MXU.
    Unknown: conservative defaults.
    """
    kind = _device_kind()
    if "v7" in kind:
        return dict(vmem_budget=40 << 20, vmem_limit=48 << 20,
                    n_mult=256, block_b=512, two_tc=True)
    if "v6" in kind:
        return dict(vmem_budget=90 << 20, vmem_limit=110 << 20,
                    n_mult=256, block_b=1024, two_tc=False)
    if "v5" in kind:
        return dict(vmem_budget=90 << 20, vmem_limit=110 << 20,
                    n_mult=128, block_b=1024, two_tc=False)
    return dict(vmem_budget=40 << 20, vmem_limit=64 << 20,
                n_mult=128, block_b=512, two_tc=False)


def init_hermite_coeffs(key, input_dim, output_dim, degree):
    """Deterministic init matching nn.init.normal_(std=1/(input_dim*(degree+1)))."""
    std = 1.0 / (input_dim * (degree + 1))
    return std * jax.random.normal(
        key, (input_dim, output_dim, degree + 1), dtype=jnp.float32)


def prepare_hermite_coeffs(coeffs, *, compute_dtype=jnp.float32, n_multiple=None):
    """One-time conversion of the PyTorch parameter (I, O, D+1) into the kernel layout
    ((D+1)*I_pad, O_pad):
      * degree-major, I zero-padded to a multiple of 128 so every per-degree basis
        write in the kernel is lane-aligned and one large-K matmul covers all degrees,
      * O zero-padded to the MXU N width (256 on v6e/v7x, 128 otherwise) so output
        stores are lane-dense and the MXU N dimension is full.
    Padded coefficient rows/columns are zero, so padded basis columns contribute
    nothing and padded outputs are exactly zero (sliced off by the wrapper).
    Do this once at parameter-setup time, NOT per forward.

    compute_dtype: dtype fed to the MXU.  float32 (default) keeps ~1e-6 accuracy;
    jnp.bfloat16 halves coefficient DMA/VMEM and uses the native bf16 MXU path on
    v6e/v7x at ~1e-2 relative accuracy (recurrence / accumulation stay f32)."""
    input_dim, output_dim, deg_p1 = coeffs.shape
    if n_multiple is None:
        n_multiple = _tpu_params()["n_mult"]
    i_pad = _round_up(input_dim, _LANES)
    o_pad = _round_up(max(output_dim, 1), n_multiple)
    c = jnp.transpose(coeffs, (2, 0, 1))                        # (D+1, I, O)
    c = jnp.pad(c, ((0, 0), (0, i_pad - input_dim), (0, o_pad - output_dim)))
    return c.astype(compute_dtype).reshape(deg_p1 * i_pad, o_pad)


def _make_kernel(degree, i_real, i_pad, cache_basis):
    """Fused kernel: build the Hermite basis slab in VMEM scratch, one big matmul.

    cache_basis=True  -> grid is (B, O); the basis depends only on the batch tile, so
                         it is computed only when program_id(1)==0 and reused for every
                         O tile of that batch tile.
    cache_basis=False -> grid is (O, B); the coefficient tile stays resident across the
                         inner B loop and the basis is (re)built every step.
    """
    deg_p1 = degree + 1
    pad = i_pad - i_real

    def compute_basis(x_ref, basis_ref):
        cd = basis_ref.dtype
        x = jnp.tanh(x_ref[...].astype(jnp.float32))
        zpad = jnp.zeros((x.shape[0], pad), cd) if pad else None  # hoisted once

        def store(d, h_cd):
            lo = d * i_pad
            basis_ref[:, lo:lo + i_real] = h_cd
            if pad:
                # keep padded basis columns exactly zero (coeffs there are zero too,
                # but uninitialized VMEM could hold inf/nan -> 0*inf hazard).
                basis_ref[:, lo + i_real:lo + i_pad] = zpad

        ones = jnp.ones(x.shape, jnp.float32)
        store(0, ones.astype(cd))                                # H_0
        if degree > 0:
            two_x = x + x                                        # reused every degree
            h_prev2 = ones
            h_prev1 = two_x                                      # H_1
            store(1, h_prev1.astype(cd))
            for d in range(2, deg_p1):
                h = two_x * h_prev1 - (2.0 * (d - 1)) * h_prev2
                store(d, h.astype(cd))
                h_prev2, h_prev1 = h_prev1, h

    def kernel(x_ref, c_ref, o_ref, basis_ref):
        if cache_basis:
            @pl.when(pl.program_id(1) == 0)
            def _():
                compute_basis(x_ref, basis_ref)
        else:
            compute_basis(x_ref, basis_ref)
        prec = (jax.lax.Precision.HIGHEST
                if basis_ref.dtype == jnp.float32 else None)
        o_ref[...] = jnp.dot(basis_ref[...], c_ref[...],
                             preferred_element_type=jnp.float32,
                             precision=prec).astype(o_ref.dtype)

    return kernel


def _vmem_bytes(tb, i_real, i_pad, deg_p1, tn, x_itemsize, c_itemsize):
    """Per-step VMEM working set: pipeline buffers + basis slab + live temporaries."""
    k_pad = deg_p1 * i_pad
    x_bytes = 2 * tb * i_real * x_itemsize        # double-buffered input tile
    c_bytes = 2 * k_pad * tn * c_itemsize         # double-buffered coefficient tile
    o_bytes = 2 * tb * tn * 4                     # double-buffered f32 output tile
    basis_bytes = tb * k_pad * c_itemsize         # basis scratch slab (single buffer)
    tmp_bytes = (5 * tb * i_real + tb * tn) * 4   # x, 2x, H_{d-1}, H_{d-2}, H_d, acc
    return x_bytes + c_bytes + o_bytes + basis_bytes + tmp_bytes


def hermite_kan_linear_prepared(x, c_prepared, degree, input_dim, output_dim, *,
                                block_b=None, block_o=512,
                                prefer_cached_basis=None,
                                vmem_budget_bytes=None, vmem_limit_bytes=None):
    """Forward pass given coefficients already in kernel layout (prepare_hermite_coeffs).
    Returns (B, output_dim) float32."""
    params = _tpu_params()
    if block_b is None:
        block_b = params["block_b"]
    if vmem_budget_bytes is None:
        vmem_budget_bytes = params["vmem_budget"]
    if vmem_limit_bytes is None:
        vmem_limit_bytes = params["vmem_limit"]

    deg_p1 = degree + 1
    k_pad, o_pad = c_prepared.shape
    assert k_pad % deg_p1 == 0, "coeffs not in prepared layout"
    i_pad = k_pad // deg_p1
    assert i_pad >= input_dim and i_pad % _LANES == 0

    # No dtype cast of x here: the kernel upcasts after the DMA.
    x2 = jnp.reshape(x, (-1, input_dim))
    b = x2.shape[0]

    # ---- batch tile ----------------------------------------------------------
    if b <= block_b:
        tb = b
    else:
        tb = max(_SUBLANES, (block_b // _SUBLANES) * _SUBLANES)

    # ---- output tile: multiple of 128 dividing o_pad; since o_pad is a multiple
    # of the MXU N width, the search never lands below it ----------------------
    tn = min(_round_up(block_o, _LANES), o_pad)
    while o_pad % tn:
        tn -= _LANES
    n_min = min(params["n_mult"], o_pad)

    x_itemsize = jnp.dtype(x2.dtype).itemsize
    c_itemsize = jnp.dtype(c_prepared.dtype).itemsize

    def fits(tb_, tn_):
        return _vmem_bytes(tb_, input_dim, i_pad, deg_p1, tn_,
                           x_itemsize, c_itemsize) <= vmem_budget_bytes

    while not fits(tb, tn) and tb > 2 * _SUBLANES:
        tb = max(_SUBLANES, ((tb // 2) // _SUBLANES) * _SUBLANES)
    while not fits(tb, tn) and tn > n_min:
        cand = tn - _LANES
        while cand > n_min and o_pad % cand:
            cand -= _LANES
        if cand < n_min or cand <= 0 or o_pad % cand:
            break
        tn = cand

    # ---- avoid a padded HBM copy of x when a nearby divisor of B exists -------
    if tb < b and b % tb:
        for cand in range(tb, max(tb // 2, _SUBLANES) - 1, -_SUBLANES):
            if b % cand == 0:
                tb = cand
                break
    pad_b = (-b) % tb
    if pad_b:
        # TODO(synk): a masked ragged last batch tile would avoid this HBM copy of x.
        x2 = jnp.pad(x2, ((0, pad_b), (0, 0)))
    bp = b + pad_b

    grid_b = bp // tb
    grid_o = o_pad // tn

    # v7x only: split a single-step grid so both TensorCores get work.
    # TODO(synk): switch to pltpu.CORE_PARALLEL / pl.core_map once robust everywhere.
    if (params["two_tc"] and grid_b * grid_o == 1
            and tb >= 2 * _SUBLANES and tb % (2 * _SUBLANES) == 0):
        tb //= 2
        grid_b = bp // tb

    # ---- loop-order selection by HBM traffic ----------------------------------
    # cached (B outer, O inner): x read once, coeffs re-streamed per B tile (unless
    #   grid_o == 1, in which case Pallas fetches the constant-index block once).
    # coeff-resident (O outer, B inner): coeffs read once per O tile, x re-read and
    #   tanh + recurrence recomputed once per O tile.
    x_bytes_total = bp * input_dim * x_itemsize
    c_bytes_total = k_pad * o_pad * c_itemsize
    cached_traffic = x_bytes_total + (c_bytes_total if grid_o == 1
                                      else grid_b * c_bytes_total)
    oouter_traffic = c_bytes_total + (x_bytes_total if grid_b == 1
                                      else grid_o * x_bytes_total)
    if prefer_cached_basis is None:
        cache_basis = cached_traffic <= oouter_traffic
    else:
        cache_basis = bool(prefer_cached_basis)

    kernel = _make_kernel(degree, input_dim, i_pad, cache_basis)

    if cache_basis:
        grid = (grid_b, grid_o)
        x_spec = pl.BlockSpec((tb, input_dim), lambda bi, oi: (bi, 0))
        c_spec = pl.BlockSpec((k_pad, tn), lambda bi, oi: (0, oi))
        out_spec = pl.BlockSpec((tb, tn), lambda bi, oi: (bi, oi))
        semantics = ("parallel", "arbitrary")   # O carries the basis-scratch dep
    else:
        grid = (grid_o, grid_b)
        x_spec = pl.BlockSpec((tb, input_dim), lambda oi, bi: (bi, 0))
        c_spec = pl.BlockSpec((k_pad, tn), lambda oi, bi: (0, oi))
        out_spec = pl.BlockSpec((tb, tn), lambda oi, bi: (bi, oi))
        semantics = ("arbitrary", "parallel")

    cost = pl.CostEstimate(
        flops=int(2 * bp * k_pad * o_pad),
        transcendentals=int(bp * input_dim),
        bytes_accessed=int(bp * input_dim * x_itemsize
                           + k_pad * o_pad * c_itemsize
                           + bp * o_pad * 4),
    )

    out = pl.pallas_call(
        kernel,
        out_shape=jax.ShapeDtypeStruct((bp, o_pad), jnp.float32),
        grid_spec=pltpu.PrefetchScalarGridSpec(
            num_scalar_prefetch=0,
            grid=grid,
            in_specs=[x_spec, c_spec],
            out_specs=out_spec,
            scratch_shapes=[pltpu.VMEM((tb, k_pad), c_prepared.dtype)],
        ),
        compiler_params=pltpu.CompilerParams(
            dimension_semantics=semantics,
            vmem_limit_bytes=vmem_limit_bytes,
        ),
        cost_estimate=cost,
    )(x2, c_prepared)

    if pad_b == 0 and o_pad == output_dim:
        return out
    return out[:b, :output_dim]


def hermite_kan_linear(x, coeffs, degree=None, *, compute_dtype=jnp.float32, **kwargs):
    """Convenience wrapper taking the raw PyTorch parameter layout (I, O, D+1).
    For repeated forwards, hoist prepare_hermite_coeffs out of the hot path and call
    hermite_kan_linear_prepared directly."""
    input_dim, output_dim, deg_p1 = coeffs.shape
    if degree is None:
        degree = deg_p1 - 1
    c = prepare_hermite_coeffs(coeffs, compute_dtype=compute_dtype)
    return hermite_kan_linear_prepared(x, c, degree, input_dim, output_dim, **kwargs)


# TODO(synk): the module's einsum=False branch (returning the raw (B, I, D+1) Hermite
# basis tensor) is not kernelized; only the parameterized einsum=True forward is.


def _reference(x, coeffs, degree):
    """Pure-JAX reference mirroring the PyTorch forward (full-precision einsum)."""
    input_dim = coeffs.shape[0]
    xf = jnp.tanh(jnp.reshape(x, (-1, input_dim)).astype(jnp.float32))
    herm = [jnp.ones_like(xf)]
    if degree > 0:
        herm.append(2.0 * xf)
    for i in range(2, degree + 1):
        herm.append(2.0 * xf * herm[i - 1] - 2.0 * (i - 1) * herm[i - 2])
    hermite = jnp.stack(herm, axis=-1)                           # (B, I, D+1)
    return jnp.einsum("bid,iod->bo", hermite, coeffs.astype(jnp.float32),
                      precision=jax.lax.Precision.HIGHEST)


if __name__ == "__main__":
    key = jax.random.PRNGKey(0)
    k_x1, k_c1, k_x2, k_c2, k_x3, k_c3 = jax.random.split(key, 6)
    TOL = dict(atol=1e-4, rtol=1e-4)

    # Case 1: natural module shape: x (2, 4, 16, 16), input_dim=16 -> B = 128 rows.
    i1, o1, d1 = 16, 32, 4
    x1 = jax.random.normal(k_x1, (2, 4, 16, 16), dtype=jnp.float32)
    coeffs1 = init_hermite_coeffs(k_c1, i1, o1, d1)
    c1_prep = prepare_hermite_coeffs(coeffs1)                    # hoisted, done once
    y1 = jax.block_until_ready(
        hermite_kan_linear_prepared(x1, c1_prep, d1, i1, o1))
    y1_ref = _reference(x1, coeffs1, d1)
    assert y1.shape == (128, o1), y1.shape
    assert jnp.allclose(y1, y1_ref, **TOL), "mismatch vs reference (case 1)"

    # Convenience wrapper (raw PyTorch layout).
    y1c = jax.block_until_ready(hermite_kan_linear(x1, coeffs1, d1))
    assert jnp.allclose(y1c, y1_ref, **TOL), "mismatch vs reference (wrapper)"

    # Case 2: lane-aligned input_dim (no padded basis columns).
    i2, o2, d2 = 128, 64, 3
    x2 = jax.random.normal(k_x2, (4, 8, i2), dtype=jnp.float32)
    coeffs2 = init_hermite_coeffs(k_c2, i2, o2, d2)
    y2 = jax.block_until_ready(
        hermite_kan_linear_prepared(x2, prepare_hermite_coeffs(coeffs2), d2, i2, o2))
    y2_ref = _reference(x2, coeffs2, d2)
    assert y2.shape == (32, o2), y2.shape
    assert jnp.allclose(y2, y2_ref, **TOL), "mismatch vs reference (case 2)"

    # Case 3: multi-tile grid, both loop orders (cached basis and coeff-resident).
    i3, o3, d3 = 16, 200, 3
    x3 = jax.random.normal(k_x3, (3, 16, 16), dtype=jnp.float32)  # B = 48
    coeffs3 = init_hermite_coeffs(k_c3, i3, o3, d3)
    c3_prep = prepare_hermite_coeffs(coeffs3)
    y3_ref = _reference(x3, coeffs3, d3)
    for prefer in (True, False):
        y3 = jax.block_until_ready(
            hermite_kan_linear_prepared(x3, c3_prep, d3, i3, o3,
                                        block_b=16, block_o=128,
                                        prefer_cached_basis=prefer))
        assert y3.shape == (48, o3), y3.shape
        assert jnp.allclose(y3, y3_ref, **TOL), f"mismatch (case 3, cached={prefer})"

    print("KERNEL_OK")
</pallas_src>

<mosaic_0001>
module attributes {stable_mosaic.version = 11 : i64} {
  func.func @kernel(%arg0: i32, %arg1: i32, %arg2: memref<128x16xf32, #tpu.memory_space<vmem>>, %arg3: memref<640x128xf32, #tpu.memory_space<vmem>>, %arg4: memref<128x128xf32, #tpu.memory_space<vmem>>, %arg5: memref<128x640xf32, #tpu.memory_space<vmem>>) attributes {dimension_semantics = [#tpu.dimension_semantics<parallel>, #tpu.dimension_semantics<arbitrary>], iteration_bounds = array<i64: 1, 1>, scalar_prefetch = 0 : i64, scratch_operands = 1 : i64, tpu.core_type = #tpu.core_type<tc>, window_params = [{transform_indices = @transform_0, window_bounds = array<i64: 128, 16>}, {transform_indices = @transform_1, window_bounds = array<i64: 640, 128>}, {transform_indices = @transform_2, window_bounds = array<i64: 128, 128>}]} {
    %c0_i32 = arith.constant 0 : i32
    %0 = arith.cmpi eq, %arg1, %c0_i32 : i32
    %1 = arith.extui %0 : i1 to i32
    %c0_i32_0 = arith.constant 0 : i32
    %2 = arith.cmpi ne, %1, %c0_i32_0 : i32
    scf.if %2 {
      %c0_6 = arith.constant 0 : index
      %c0_7 = arith.constant 0 : index
      %7 = vector.load %arg2[%c0_6, %c0_7] : memref<128x16xf32, #tpu.memory_space<vmem>>, vector<128x16xf32>
      %8 = math.tanh %7 : vector<128x16xf32>
      %cst_8 = arith.constant 0.000000e+00 : f32
      %9 = vector.broadcast %cst_8 : f32 to vector<128x112xf32>
      %cst_9 = arith.constant 1.000000e+00 : f32
      %10 = vector.broadcast %cst_9 : f32 to vector<128x16xf32>
      %c0_10 = arith.constant 0 : index
      %c0_11 = arith.constant 0 : index
      %11 = vector.load %arg5[%c0_10, %c0_11] : memref<128x640xf32, #tpu.memory_space<vmem>>, vector<128x16xf32>
      tpu.vector_store %arg5[%c0_10, %c0_11], %10 {strides = array<i32>} : memref<128x640xf32, #tpu.memory_space<vmem>>, vector<128x16xf32>,
      %c0_12 = arith.constant 0 : index
      %c16 = arith.constant 16 : index
      %12 = vector.load %arg5[%c0_12, %c16] : memref<128x640xf32, #tpu.memory_space<vmem>>, vector<128x112xf32>
      tpu.vector_store %arg5[%c0_12, %c16], %9 {strides = array<i32>} : memref<128x640xf32, #tpu.memory_space<vmem>>, vector<128x112xf32>,
      %13 = arith.addf %8, %8 : vector<128x16xf32>
      %c0_13 = arith.constant 0 : index
      %c128 = arith.constant 128 : index
      %14 = vector.load %arg5[%c0_13, %c128] : memref<128x640xf32, #tpu.memory_space<vmem>>, vector<128x16xf32>
      tpu.vector_store %arg5[%c0_13, %c128], %13 {strides = array<i32>} : memref<128x640xf32, #tpu.memory_space<vmem>>, vector<128x16xf32>,
      %c0_14 = arith.constant 0 : index
      %c144 = arith.constant 144 : index
      %15 = vector.load %arg5[%c0_14, %c144] : memref<128x640xf32, #tpu.memory_space<vmem>>, vector<128x112xf32>
      tpu.vector_store %arg5[%c0_14, %c144], %9 {strides = array<i32>} : memref<128x640xf32, #tpu.memory_space<vmem>>, vector<128x112xf32>,
      %16 = arith.mulf %13, %13 : vector<128x16xf32>
      %cst_15 = arith.constant 2.000000e+00 : f32
      %17 = vector.broadcast %cst_15 : f32 to vector<128x16xf32>
      %18 = arith.mulf %17, %10 : vector<128x16xf32>
      %19 = arith.subf %16, %18 : vector<128x16xf32>
      %c0_16 = arith.constant 0 : index
      %c256 = arith.constant 256 : index
      %20 = vector.load %arg5[%c0_16, %c256] : memref<128x640xf32, #tpu.memory_space<vmem>>, vector<128x16xf32>
      tpu.vector_store %arg5[%c0_16, %c256], %19 {strides = array<i32>} : memref<128x640xf32, #tpu.memory_space<vmem>>, vector<128x16xf32>,
      %c0_17 = arith.constant 0 : index
      %c272 = arith.constant 272 : index
      %21 = vector.load %arg5[%c0_17, %c272] : memref<128x640xf32, #tpu.memory_space<vmem>>, vector<128x112xf32>
      tpu.vector_store %arg5[%c0_17, %c272], %9 {strides = array<i32>} : memref<128x640xf32, #tpu.memory_space<vmem>>, vector<128x112xf32>,
      %22 = arith.mulf %13, %19 : vector<128x16xf32>
      %cst_18 = arith.constant 4.000000e+00 : f32
      %23 = vector.broadcast %cst_18 : f32 to vector<128x16xf32>
      %24 = arith.mulf %23, %13 : vector<128x16xf32>
      %25 = arith.subf %22, %24 : vector<128x16xf32>
      %c0_19 = arith.constant 0 : index
      %c384 = arith.constant 384 : index
      %26 = vector.load %arg5[%c0_19, %c384] : memref<128x640xf32, #tpu.memory_space<vmem>>, vector<128x16xf32>
      tpu.vector_store %arg5[%c0_19, %c384], %25 {strides = array<i32>} : memref<128x640xf32, #tpu.memory_space<vmem>>, vector<128x16xf32>,
      %c0_20 = arith.constant 0 : index
      %c400 = arith.constant 400 : index
      %27 = vector.load %arg5[%c0_20, %c400] : memref<128x640xf32, #tpu.memory_space<vmem>>, vector<128x112xf32>
      tpu.vector_store %arg5[%c0_20, %c400], %9 {strides = array<i32>} : memref<128x640xf32, #tpu.memory_space<vmem>>, vector<128x112xf32>,
      %28 = arith.mulf %13, %25 : vector<128x16xf32>
      %cst_21 = arith.constant 6.000000e+00 : f32
      %29 = vector.broadcast %cst_21 : f32 to vector<128x16xf32>
      %30 = arith.mulf %29, %19 : vector<128x16xf32>
      %31 = arith.subf %28, %30 : vector<128x16xf32>
      %c0_22 = arith.constant 0 : index
      %c512 = arith.constant 512 : index
      %32 = vector.load %arg5[%c0_22, %c512] : memref<128x640xf32, #tpu.memory_space<vmem>>, vector<128x16xf32>
      tpu.vector_store %arg5[%c0_22, %c512], %31 {strides = array<i32>} : memref<128x640xf32, #tpu.memory_space<vmem>>, vector<128x16xf32>,
      %c0_23 = arith.constant 0 : index
      %c528 = arith.constant 528 : index
      %33 = vector.load %arg5[%c0_23, %c528] : memref<128x640xf32, #tpu.memory_space<vmem>>, vector<128x112xf32>
      tpu.vector_store %arg5[%c0_23, %c528], %9 {strides = array<i32>} : memref<128x640xf32, #tpu.memory_space<vmem>>, vector<128x112xf32>,
    } else {
    }
    %c0 = arith.constant 0 : index
    %c0_1 = arith.constant 0 : index
    %3 = vector.load %arg5[%c0, %c0_1] : memref<128x640xf32, #tpu.memory_space<vmem>>, vector<128x640xf32>
    %c0_2 = arith.constant 0 : index
    %c0_3 = arith.constant 0 : index
    %4 = vector.load %arg3[%c0_2, %c0_3] : memref<640x128xf32, #tpu.memory_space<vmem>>, vector<640x128xf32>
    %cst = arith.constant dense<0.000000e+00> : vector<128x128xf32>
    %5 = tpu.matmul %3, %4, %cst {dimension_numbers = #tpu.dot_dimension_numbers<[1], [0], [0], [1], [0, 0, 1, 1], [], []>, precision = #tpu.contract_precision<fp32>} : vector<128x640xf32>, vector<640x128xf32>, vector<128x128xf32> -> vector<128x128xf32>
    %c0_4 = arith.constant 0 : index
    %c0_5 = arith.constant 0 : index
    %6 = vector.load %arg4[%c0_4, %c0_5] : memref<128x128xf32, #tpu.memory_space<vmem>>, vector<128x128xf32>
    tpu.vector_store %arg4[%c0_4, %c0_5], %5 {strides = array<i32>} : memref<128x128xf32, #tpu.memory_space<vmem>>, vector<128x128xf32>,
    return
  }
  func.func @transform_0(%arg0: i32, %arg1: i32) -> (i32, i32) {
    %c0_i32 = arith.constant 0 : i32
    %c0_i32_0 = arith.constant 0 : i32
    return %arg0, %c0_i32 : i32, i32
  }
  func.func @transform_1(%arg0: i32, %arg1: i32) -> (i32, i32) {
    %c0_i32 = arith.constant 0 : i32
    %c0_i32_0 = arith.constant 0 : i32
    return %c0_i32, %arg1 : i32, i32
  }
  func.func @transform_2(%arg0: i32, %arg1: i32) -> (i32, i32) {
    %c0_i32 = arith.constant 0 : i32
    return %arg0, %arg1 : i32, i32
  }
}

</mosaic_0001>

<llo_original>
// kernel: tpu_custom_call.1
$region0: #{tpu_custom_call.1}
  #allocation0 [shape = 'u32[]', space=smem, size = 0x4, offset = 0x4, fixed_abs, tag = 'smem constant byte address 0x4 - core index']
  #allocation1 [shape = 'u32[144,128]{1,0:T(1,128)}', space=vmem, size = 0x12000, scoped, tag = 'internal scratch']
  #allocation2 [shape = 'f32[128,640]{1,0:T(8,128)}', space=vmem, size = 0x50000, scoped, tag = 'scratch operand']
  %s0 = inlined_call_operand.vmem [shape: f32[128,16], index: 0, kind: input, shape index: {}]
  %s1 = inlined_call_operand.hbm [shape: f32[640,128], index: 1, kind: input, shape index: {}]
  %s2 = inlined_call_operand.hbm [shape: f32[128,128], index: 2, kind: output, shape index: {}]
  %s3 = sld [smem:[#allocation0]]
  $region26: #{tpu_custom_call.1} parent=0
    _
  %s5 = ssub.s32 1, %s3
  %s6 = scalar_select 0, %s5, %s3
  $region1: #{tpu_custom_call.1} parent=0
    #allocation3 [shape = 'u8[327680]{0}', space=vmem, size = 0x50000, scoped, tag = 'input window, operand 1, single buffered']
    #allocation4 [shape = 's32[1]{0}', space=sflag, size = 0x4, scoped, tag = 'scoped memory for tpu_custom_call.1']
    #allocation5 [shape = 's32[1]{0}', space=sflag, size = 0x4, scoped, tag = 'scoped memory for tpu_custom_call.1']
    #allocation6 [shape = 'u8[65536]{0}', space=vmem, size = 0x10000, scoped, tag = 'output window, operand 0, single buffered']
    %7 = vsyncpa [#allocation4], 0
    %8 = vsyncpa [#allocation5], 0
    // Predicated region
    $region2: #{tpu_custom_call.1} parent=1 // pred_check
      _
    $region3: #{tpu_custom_call.1} parent=1 // pred_check_branch
      %10 = sbr.rel (0) target = $region5
    $region4: #{tpu_custom_call.1} parent=1 // pred_region
      _
    $region5: #{tpu_custom_call.1} parent=1 // pred_fallthru
      _
    // Predicated region
    $region6: #{tpu_custom_call.1} parent=1 // pred_check
      _
    $region7: #{tpu_custom_call.1} parent=1 // pred_check_branch
      %12 = sbr.rel (0) target = $region9
    $region8: #{tpu_custom_call.1} parent=1 // pred_region
      %s14 = ssub.s32 10240, 10240
      %15 = vsyncadd [#allocation4], %s14
      %s16 = sshll.u32 [#allocation3], 4
      %s17 = int_to_ptr.vmem [resolvable:$true] %s16
      %22 = dma.hbm_to_vmem [thread:$0]  %s1, 10240, %s17, [#allocation4], 128, 128, 8
    $region9: #{tpu_custom_call.1} parent=1 // pred_fallthru
      _
    // Predicated region
    $region10: #{tpu_custom_call.1} parent=1 // pred_check
      _
    $region11: #{tpu_custom_call.1} parent=1 // pred_check_branch
      %24 = sbr.rel (0) target = $region13
    $region12: #{tpu_custom_call.1} parent=1 // pred_region
      %25 = dma.done [#allocation4], 10240
    $region13: #{tpu_custom_call.1} parent=1 // pred_fallthru
      _
    %p26 = scmp.eq.s32.totalorder 0, 0
    // Predicated region
    $region14: #{tpu_custom_call.1} parent=1 // pred_check
      %p27 = pneg %p26
    $region15: #{tpu_custom_call.1} parent=1 // pred_check_branch
      %29 = sbr.rel (%p27) target = $region17
    $region16: #{tpu_custom_call.1} parent=1 // pred_region
      %v30 = vld [vmem:[%s0] sm:$0xff]
      %v31 = vld [vmem:[%s0 + $0x8] sm:$0xff]
      %v32 = vld [vmem:[%s0 + $0x10] sm:$0xff]
      %v33 = vld [vmem:[%s0 + $0x18] sm:$0xff]
      %v34 = vld [vmem:[%s0 + $0x20] sm:$0xff]
      %v35 = vld [vmem:[%s0 + $0x28] sm:$0xff]
      %v36 = vld [vmem:[%s0 + $0x30] sm:$0xff]
      %v37 = vld [vmem:[%s0 + $0x38] sm:$0xff]
      %v38 = vld [vmem:[%s0 + $0x40] sm:$0xff]
      %v39 = vld [vmem:[%s0 + $0x48] sm:$0xff]
      %v40 = vld [vmem:[%s0 + $0x50] sm:$0xff]
      %v41 = vld [vmem:[%s0 + $0x58] sm:$0xff]
      %v42 = vld [vmem:[%s0 + $0x60] sm:$0xff]
      %v43 = vld [vmem:[%s0 + $0x68] sm:$0xff]
      %v44 = vld [vmem:[%s0 + $0x70] sm:$0xff]
      %v45 = vld [vmem:[%s0 + $0x78] sm:$0xff]
      %v46 = vtanh.pop %v30
      %v47 = vtanh.pop %v31
      %v48 = vtanh.pop %v32
      %v49 = vtanh.pop %v33
      %v50 = vtanh.pop %v34
      %v51 = vtanh.pop %v35
      %v52 = vtanh.pop %v36
      %v53 = vtanh.pop %v37
      %v54 = vtanh.pop %v38
      %v55 = vtanh.pop %v39
      %v56 = vtanh.pop %v40
      %v57 = vtanh.pop %v41
      %v58 = vtanh.pop %v42
      %v59 = vtanh.pop %v43
      %v60 = vtanh.pop %v44
      %v61 = vtanh.pop %v45
      %vm62 = vcmask 130048
      %63 = vst.msk [vmem:[#allocation2] sm:$0xff] %vm62, 1.0
      %64 = vst.msk [vmem:[#allocation2 + $0x28] sm:$0xff] %vm62, 1.0
      %65 = vst.msk [vmem:[#allocation2 + $0x50] sm:$0xff] %vm62, 1.0
      %66 = vst.msk [vmem:[#allocation2 + $0x78] sm:$0xff] %vm62, 1.0
      %67 = vst.msk [vmem:[#allocation2 + $0xa0] sm:$0xff] %vm62, 1.0
      %68 = vst.msk [vmem:[#allocation2 + $0xc8] sm:$0xff] %vm62, 1.0
      %69 = vst.msk [vmem:[#allocation2 + $0xf0] sm:$0xff] %vm62, 1.0
      %70 = vst.msk [vmem:[#allocation2 + $0x118] sm:$0xff] %vm62, 1.0
      %71 = vst.msk [vmem:[#allocation2 + $0x140] sm:$0xff] %vm62, 1.0
      %72 = vst.msk [vmem:[#allocation2 + $0x168] sm:$0xff] %vm62, 1.0
      %73 = vst.msk [vmem:[#allocation2 + $0x190] sm:$0xff] %vm62, 1.0
      %74 = vst.msk [vmem:[#allocation2 + $0x1b8] sm:$0xff] %vm62, 1.0
      %75 = vst.msk [vmem:[#allocation2 + $0x1e0] sm:$0xff] %vm62, 1.0
      %76 = vst.msk [vmem:[#allocation2 + $0x208] sm:$0xff] %vm62, 1.0
      %77 = vst.msk [vmem:[#allocation2 + $0x230] sm:$0xff] %vm62, 1.0
      %78 = vst.msk [vmem:[#allocation2 + $0x258] sm:$0xff] %vm62, 1.0
      %vm79 = vcmask 1047680
      %80 = vst.msk [vmem:[#allocation2] sm:$0xff] %vm79, 0.0
      %81 = vst.msk [vmem:[#allocation2 + $0x28] sm:$0xff] %vm79, 0.0
      %82 = vst.msk [vmem:[#allocation2 + $0x50] sm:$0xff] %vm79, 0.0
      %83 = vst.msk [vmem:[#allocation2 + $0x78] sm:$0xff] %vm79, 0.0
      %84 = vst.msk [vmem:[#allocation2 + $0xa0] sm:$0xff] %vm79, 0.0
      %85 = vst.msk [vmem:[#allocation2 + $0xc8] sm:$0xff] %vm79, 0.0
      %86 = vst.msk [vmem:[#allocation2 + $0xf0] sm:$0xff] %vm79, 0.0
      %87 = vst.msk [vmem:[#allocation2 + $0x118] sm:$0xff] %vm79, 0.0
      %88 = vst.msk [vmem:[#allocation2 + $0x140] sm:$0xff] %vm79, 0.0
      %89 = vst.msk [vmem:[#allocation2 + $0x168] sm:$0xff] %vm79, 0.0
      %90 = vst.msk [vmem:[#allocation2 + $0x190] sm:$0xff] %vm79, 0.0
      %91 = vst.msk [vmem:[#allocation2 + $0x1b8] sm:$0xff] %vm79, 0.0
      %92 = vst.msk [vmem:[#allocation2 + $0x1e0] sm:$0xff] %vm79, 0.0
      %93 = vst.msk [vmem:[#allocation2 + $0x208] sm:$0xff] %vm79, 0.0
      %94 = vst.msk [vmem:[#allocation2 + $0x230] sm:$0xff] %vm79, 0.0
      %95 = vst.msk [vmem:[#allocation2 + $0x258] sm:$0xff] %vm79, 0.0
      %v96 = vadd.f32 %v46, %v46
      %v97 = vadd.f32 %v47, %v47
      %v98 = vadd.f32 %v48, %v48
      %v99 = vadd.f32 %v49, %v49
      %v100 = vadd.f32 %v50, %v50
      %v101 = vadd.f32 %v51, %v51
      %v102 = vadd.f32 %v52, %v52
      %v103 = vadd.f32 %v53, %v53
      %v104 = vadd.f32 %v54, %v54
      %v105 = vadd.f32 %v55, %v55
      %v106 = vadd.f32 %v56, %v56
      %v107 = vadd.f32 %v57, %v57
      %v108 = vadd.f32 %v58, %v58
      %v109 = vadd.f32 %v59, %v59
      %v110 = vadd.f32 %v60, %v60
      %v111 = vadd.f32 %v61, %v61
      %112 = vst.msk [vmem:[#allocation2 + $0x8] sm:$0xff] %vm62, %v96
      %113 = vst.msk [vmem:[#allocation2 + $0x30] sm:$0xff] %vm62, %v97
      %114 = vst.msk [vmem:[#allocation2 + $0x58] sm:$0xff] %vm62, %v98
      %115 = vst.msk [vmem:[#allocation2 + $0x80] sm:$0xff] %vm62, %v99
      %116 = vst.msk [vmem:[#allocation2 + $0xa8] sm:$0xff] %vm62, %v100
      %117 = vst.msk [vmem:[#allocation2 + $0xd0] sm:$0xff] %vm62, %v101
      %118 = vst.msk [vmem:[#allocation2 + $0xf8] sm:$0xff] %vm62, %v102
      %119 = vst.msk [vmem:[#allocation2 + $0x120] sm:$0xff] %vm62, %v103
      %120 = vst.msk [vmem:[#allocation2 + $0x148] sm:$0xff] %vm62, %v104
      %121 = vst.msk [vmem:[#allocation2 + $0x170] sm:$0xff] %vm62, %v105
      %122 = vst.msk [vmem:[#allocation2 + $0x198] sm:$0xff] %vm62, %v106
      %123 = vst.msk [vmem:[#allocation2 + $0x1c0] sm:$0xff] %vm62, %v107
      %124 = vst.msk [vmem:[#allocation2 + $0x1e8] sm:$0xff] %vm62, %v108
      %125 = vst.msk [vmem:[#allocation2 + $0x210] sm:$0xff] %vm62, %v109
      %126 = vst.msk [vmem:[#allocation2 + $0x238] sm:$0xff] %vm62, %v110
      %127 = vst.msk [vmem:[#allocation2 + $0x260] sm:$0xff] %vm62, %v111
      %128 = vst.msk [vmem:[#allocation2 + $0x8] sm:$0xff] %vm79, 0.0
      %129 = vst.msk [vmem:[#allocation2 + $0x30] sm:$0xff] %vm79, 0.0
      %130 = vst.msk [vmem:[#allocation2 + $0x58] sm:$0xff] %vm79, 0.0
      %131 = vst.msk [vmem:[#allocation2 + $0x80] sm:$0xff] %vm79, 0.0
      %132 = vst.msk [vmem:[#allocation2 + $0xa8] sm:$0xff] %vm79, 0.0
      %133 = vst.msk [vmem:[#allocation2 + $0xd0] sm:$0xff] %vm79, 0.0
      %134 = vst.msk [vmem:[#allocation2 + $0xf8] sm:$0xff] %vm79, 0.0
      %135 = vst.msk [vmem:[#allocation2 + $0x120] sm:$0xff] %vm79, 0.0
      %136 = vst.msk [vmem:[#allocation2 + $0x148] sm:$0xff] %vm79, 0.0
      %137 = vst.msk [vmem:[#allocation2 + $0x170] sm:$0xff] %vm79, 0.0
      %138 = vst.msk [vmem:[#allocation2 + $0x198] sm:$0xff] %vm79, 0.0
      %139 = vst.msk [vmem:[#allocation2 + $0x1c0] sm:$0xff] %vm79, 0.0
      %140 = vst.msk [vmem:[#allocation2 + $0x1e8] sm:$0xff] %vm79, 0.0
      %141 = vst.msk [vmem:[#allocation2 + $0x210] sm:$0xff] %vm79, 0.0
      %142 = vst.msk [vmem:[#allocation2 + $0x238] sm:$0xff] %vm79, 0.0
      %143 = vst.msk [vmem:[#allocation2 + $0x260] sm:$0xff] %vm79, 0.0
      %v144 = vmul.f32 %v96, %v96
      %v145 = vmul.f32 %v97, %v97
      %v146 = vmul.f32 %v98, %v98
      %v147 = vmul.f32 %v99, %v99
      %v148 = vmul.f32 %v100, %v100
      %v149 = vmul.f32 %v101, %v101
      %v150 = vmul.f32 %v102, %v102
      %v151 = vmul.f32 %v103, %v103
      %v152 = vmul.f32 %v104, %v104
      %v153 = vmul.f32 %v105, %v105
      %v154 = vmul.f32 %v106, %v106
      %v155 = vmul.f32 %v107, %v107
      %v156 = vmul.f32 %v108, %v108
      %v157 = vmul.f32 %v109, %v109
      %v158 = vmul.f32 %v110, %v110
      %v159 = vmul.f32 %v111, %v111
      %v160 = vsub.f32 %v144, 2.0
      %v161 = vsub.f32 %v145, 2.0
      %v162 = vsub.f32 %v146, 2.0
      %v163 = vsub.f32 %v147, 2.0
      %v164 = vsub.f32 %v148, 2.0
      %v165 = vsub.f32 %v149, 2.0
      %v166 = vsub.f32 %v150, 2.0
      %v167 = vsub.f32 %v151, 2.0
      %v168 = vsub.f32 %v152, 2.0
      %v169 = vsub.f32 %v153, 2.0
      %v170 = vsub.f32 %v154, 2.0
      %v171 = vsub.f32 %v155, 2.0
      %v172 = vsub.f32 %v156, 2.0
      %v173 = vsub.f32 %v157, 2.0
      %v174 = vsub.f32 %v158, 2.0
      %v175 = vsub.f32 %v159, 2.0
      %176 = vst.msk [vmem:[#allocation2 + $0x10] sm:$0xff] %vm62, %v160
      %177 = vst.msk [vmem:[#allocation2 + $0x38] sm:$0xff] %vm62, %v161
      %178 = vst.msk [vmem:[#allocation2 + $0x60] sm:$0xff] %vm62, %v162
      %179 = vst.msk [vmem:[#allocation2 + $0x88] sm:$0xff] %vm62, %v163
      %180 = vst.msk [vmem:[#allocation2 + $0xb0] sm:$0xff] %vm62, %v164
      %181 = vst.msk [vmem:[#allocation2 + $0xd8] sm:$0xff] %vm62, %v165
      %182 = vst.msk [vmem:[#allocation2 + $0x100] sm:$0xff] %vm62, %v166
      %183 = vst.msk [vmem:[#allocation2 + $0x128] sm:$0xff] %vm62, %v167
      %184 = vst.msk [vmem:[#allocation2 + $0x150] sm:$0xff] %vm62, %v168
      %185 = vst.msk [vmem:[#allocation2 + $0x178] sm:$0xff] %vm62, %v169
      %186 = vst.msk [vmem:[#allocation2 + $0x1a0] sm:$0xff] %vm62, %v170
      %187 = vst.msk [vmem:[#allocation2 + $0x1c8] sm:$0xff] %vm62, %v171
      %188 = vst.msk [vmem:[#allocation2 + $0x1f0] sm:$0xff] %vm62, %v172
      %189 = vst.msk [vmem:[#allocation2 + $0x218] sm:$0xff] %vm62, %v173
      %190 = vst.msk [vmem:[#allocation2 + $0x240] sm:$0xff] %vm62, %v174
      %191 = vst.msk [vmem:[#allocation2 + $0x268] sm:$0xff] %vm62, %v175
      %192 = vst.msk [vmem:[#allocation2 + $0x10] sm:$0xff] %vm79, 0.0
      %193 = vst.msk [vmem:[#allocation2 + $0x38] sm:$0xff] %vm79, 0.0
      %194 = vst.msk [vmem:[#allocation2 + $0x60] sm:$0xff] %vm79, 0.0
      %195 = vst.msk [vmem:[#allocation2 + $0x88] sm:$0xff] %vm79, 0.0
      %196 = vst.msk [vmem:[#allocation2 + $0xb0] sm:$0xff] %vm79, 0.0
      %197 = vst.msk [vmem:[#allocation2 + $0xd8] sm:$0xff] %vm79, 0.0
      %198 = vst.msk [vmem:[#allocation2 + $0x100] sm:$0xff] %vm79, 0.0
      %199 = vst.msk [vmem:[#allocation2 + $0x128] sm:$0xff] %vm79, 0.0
      %200 = vst.msk [vmem:[#allocation2 + $0x150] sm:$0xff] %vm79, 0.0
      %201 = vst.msk [vmem:[#allocation2 + $0x178] sm:$0xff] %vm79, 0.0
      %202 = vst.msk [vmem:[#allocation2 + $0x1a0] sm:$0xff] %vm79, 0.0
      %203 = vst.msk [vmem:[#allocation2 + $0x1c8] sm:$0xff] %vm79, 0.0
      %204 = vst.msk [vmem:[#allocation2 + $0x1f0] sm:$0xff] %vm79, 0.0
      %205 = vst.msk [vmem:[#allocation2 + $0x218] sm:$0xff] %vm79, 0.0
      %206 = vst.msk [vmem:[#allocation2 + $0x240] sm:$0xff] %vm79, 0.0
      %207 = vst.msk [vmem:[#allocation2 + $0x268] sm:$0xff] %vm79, 0.0
      %v208 = vmul.f32 %v96, %v160
      %v209 = vmul.f32 %v97, %v161
      %v210 = vmul.f32 %v98, %v162
      %v211 = vmul.f32 %v99, %v163
      %v212 = vmul.f32 %v100, %v164
      %v213 = vmul.f32 %v101, %v165
      %v214 = vmul.f32 %v102, %v166
      %v215 = vmul.f32 %v103, %v167
      %v216 = vmul.f32 %v104, %v168
      %v217 = vmul.f32 %v105, %v169
      %v218 = vmul.f32 %v106, %v170
      %v219 = vmul.f32 %v107, %v171
      %v220 = vmul.f32 %v108, %v172
      %v221 = vmul.f32 %v109, %v173
      %v222 = vmul.f32 %v110, %v174
      %v223 = vmul.f32 %v111, %v175
      %v224 = vmul.f32 %v96, 4.0
      %v225 = vmul.f32 %v97, 4.0
      %v226 = vmul.f32 %v98, 4.0
      %v227 = vmul.f32 %v99, 4.0
      %v228 = vmul.f32 %v100, 4.0
      %v229 = vmul.f32 %v101, 4.0
      %v230 = vmul.f32 %v102, 4.0
      %v231 = vmul.f32 %v103, 4.0
      %v232 = vmul.f32 %v104, 4.0
      %v233 = vmul.f32 %v105, 4.0
      %v234 = vmul.f32 %v106, 4.0
      %v235 = vmul.f32 %v107, 4.0
      %v236 = vmul.f32 %v108, 4.0
      %v237 = vmul.f32 %v109, 4.0
      %v238 = vmul.f32 %v110, 4.0
      %v239 = vmul.f32 %v111, 4.0
      %v240 = vsub.f32 %v208, %v224
      %v241 = vsub.f32 %v209, %v225
      %v242 = vsub.f32 %v210, %v226
      %v243 = vsub.f32 %v211, %v227
      %v244 = vsub.f32 %v212, %v228
      %v245 = vsub.f32 %v213, %v229
      %v246 = vsub.f32 %v214, %v230
      %v247 = vsub.f32 %v215, %v231
      %v248 = vsub.f32 %v216, %v232
      %v249 = vsub.f32 %v217, %v233
      %v250 = vsub.f32 %v218, %v234
      %v251 = vsub.f32 %v219, %v235
      %v252 = vsub.f32 %v220, %v236
      %v253 = vsub.f32 %v221, %v237
      %v254 = vsub.f32 %v222, %v238
      %v255 = vsub.f32 %v223, %v239
      %256 = vst.msk [vmem:[#allocation2 + $0x18] sm:$0xff] %vm62, %v240
      %257 = vst.msk [vmem:[#allocation2 + $0x40] sm:$0xff] %vm62, %v241
      %258 = vst.msk [vmem:[#allocation2 + $0x68] sm:$0xff] %vm62, %v242
      %259 = vst.msk [vmem:[#allocation2 + $0x90] sm:$0xff] %vm62, %v243
      %260 = vst.msk [vmem:[#allocation2 + $0xb8] sm:$0xff] %vm62, %v244
      %261 = vst.msk [vmem:[#allocation2 + $0xe0] sm:$0xff] %vm62, %v245
      %262 = vst.msk [vmem:[#allocation2 + $0x108] sm:$0xff] %vm62, %v246
      %263 = vst.msk [vmem:[#allocation2 + $0x130] sm:$0xff] %vm62, %v247
      %264 = vst.msk [vmem:[#allocation2 + $0x158] sm:$0xff] %vm62, %v248
      %265 = vst.msk [vmem:[#allocation2 + $0x180] sm:$0xff] %vm62, %v249
      %266 = vst.msk [vmem:[#allocation2 + $0x1a8] sm:$0xff] %vm62, %v250
      %267 = vst.msk [vmem:[#allocation2 + $0x1d0] sm:$0xff] %vm62, %v251
      %268 = vst.msk [vmem:[#allocation2 + $0x1f8] sm:$0xff] %vm62, %v252
      %269 = vst.msk [vmem:[#allocation2 + $0x220] sm:$0xff] %vm62, %v253
      %270 = vst.msk [vmem:[#allocation2 + $0x248] sm:$0xff] %vm62, %v254
      %271 = vst.msk [vmem:[#allocation2 + $0x270] sm:$0xff] %vm62, %v255
      %272 = vst.msk [vmem:[#allocation2 + $0x18] sm:$0xff] %vm79, 0.0
      %273 = vst.msk [vmem:[#allocation2 + $0x40] sm:$0xff] %vm79, 0.0
      %274 = vst.msk [vmem:[#allocation2 + $0x68] sm:$0xff] %vm79, 0.0
      %275 = vst.msk [vmem:[#allocation2 + $0x90] sm:$0xff] %vm79, 0.0
      %276 = vst.msk [vmem:[#allocation2 + $0xb8] sm:$0xff] %vm79, 0.0
      %277 = vst.msk [vmem:[#allocation2 + $0xe0] sm:$0xff] %vm79, 0.0
      %278 = vst.msk [vmem:[#allocation2 + $0x108] sm:$0xff] %vm79, 0.0
      %279 = vst.msk [vmem:[#allocation2 + $0x130] sm:$0xff] %vm79, 0.0
      %280 = vst.msk [vmem:[#allocation2 + $0x158] sm:$0xff] %vm79, 0.0
      %281 = vst.msk [vmem:[#allocation2 + $0x180] sm:$0xff] %vm79, 0.0
      %282 = vst.msk [vmem:[#allocation2 + $0x1a8] sm:$0xff] %vm79, 0.0
      %283 = vst.msk [vmem:[#allocation2 + $0x1d0] sm:$0xff] %vm79, 0.0
      %284 = vst.msk [vmem:[#allocation2 + $0x1f8] sm:$0xff] %vm79, 0.0
      %285 = vst.msk [vmem:[#allocation2 + $0x220] sm:$0xff] %vm79, 0.0
      %286 = vst.msk [vmem:[#allocation2 + $0x248] sm:$0xff] %vm79, 0.0
      %287 = vst.msk [vmem:[#allocation2 + $0x270] sm:$0xff] %vm79, 0.0
      %v288 = vmul.f32 %v96, %v240
      %v289 = vmul.f32 %v97, %v241
      %v290 = vmul.f32 %v98, %v242
      %v291 = vmul.f32 %v99, %v243
      %v292 = vmul.f32 %v100, %v244
      %v293 = vmul.f32 %v101, %v245
      %v294 = vmul.f32 %v102, %v246
      %v295 = vmul.f32 %v103, %v247
      %v296 = vmul.f32 %v104, %v248
      %v297 = vmul.f32 %v105, %v249
      %v298 = vmul.f32 %v106, %v250
      %v299 = vmul.f32 %v107, %v251
      %v300 = vmul.f32 %v108, %v252
      %v301 = vmul.f32 %v109, %v253
      %v302 = vmul.f32 %v110, %v254
      %v303 = vmul.f32 %v111, %v255
      %v304 = vmul.f32 %v160, 6.0
      %v305 = vmul.f32 %v161, 6.0
      %v306 = vmul.f32 %v162, 6.0
      %v307 = vmul.f32 %v163, 6.0
      %v308 = vmul.f32 %v164, 6.0
      %v309 = vmul.f32 %v165, 6.0
      %v310 = vmul.f32 %v166, 6.0
      %v311 = vmul.f32 %v167, 6.0
      %v312 = vmul.f32 %v168, 6.0
      %v313 = vmul.f32 %v169, 6.0
      %v314 = vmul.f32 %v170, 6.0
      %v315 = vmul.f32 %v171, 6.0
      %v316 = vmul.f32 %v172, 6.0
      %v317 = vmul.f32 %v173, 6.0
      %v318 = vmul.f32 %v174, 6.0
      %v319 = vmul.f32 %v175, 6.0
      %v320 = vsub.f32 %v288, %v304
      %v321 = vsub.f32 %v289, %v305
      %v322 = vsub.f32 %v290, %v306
      %v323 = vsub.f32 %v291, %v307
      %v324 = vsub.f32 %v292, %v308
      %v325 = vsub.f32 %v293, %v309
      %v326 = vsub.f32 %v294, %v310
      %v327 = vsub.f32 %v295, %v311
      %v328 = vsub.f32 %v296, %v312
      %v329 = vsub.f32 %v297, %v313
      %v330 = vsub.f32 %v298, %v314
      %v331 = vsub.f32 %v299, %v315
      %v332 = vsub.f32 %v300, %v316
      %v333 = vsub.f32 %v301, %v317
      %v334 = vsub.f32 %v302, %v318
      %v335 = vsub.f32 %v303, %v319
      %336 = vst.msk [vmem:[#allocation2 + $0x20] sm:$0xff] %vm62, %v320
      %337 = vst.msk [vmem:[#allocation2 + $0x48] sm:$0xff] %vm62, %v321
      %338 = vst.msk [vmem:[#allocation2 + $0x70] sm:$0xff] %vm62, %v322
      %339 = vst.msk [vmem:[#allocation2 + $0x98] sm:$0xff] %vm62, %v323
      %340 = vst.msk [vmem:[#allocation2 + $0xc0] sm:$0xff] %vm62, %v324
      %341 = vst.msk [vmem:[#allocation2 + $0xe8] sm:$0xff] %vm62, %v325
      %342 = vst.msk [vmem:[#allocation2 + $0x110] sm:$0xff] %vm62, %v326
      %343 = vst.msk [vmem:[#allocation2 + $0x138] sm:$0xff] %vm62, %v327
      %344 = vst.msk [vmem:[#allocation2 + $0x160] sm:$0xff] %vm62, %v328
      %345 = vst.msk [vmem:[#allocation2 + $0x188] sm:$0xff] %vm62, %v329
      %346 = vst.msk [vmem:[#allocation2 + $0x1b0] sm:$0xff] %vm62, %v330
      %347 = vst.msk [vmem:[#allocation2 + $0x1d8] sm:$0xff] %vm62, %v331
      %348 = vst.msk [vmem:[#allocation2 + $0x200] sm:$0xff] %vm62, %v332
      %349 = vst.msk [vmem:[#allocation2 + $0x228] sm:$0xff] %vm62, %v333
      %350 = vst.msk [vmem:[#allocation2 + $0x250] sm:$0xff] %vm62, %v334
      %351 = vst.msk [vmem:[#allocation2 + $0x278] sm:$0xff] %vm62, %v335
      %352 = vst.msk [vmem:[#allocation2 + $0x20] sm:$0xff] %vm79, 0.0
      %353 = vst.msk [vmem:[#allocation2 + $0x48] sm:$0xff] %vm79, 0.0
      %354 = vst.msk [vmem:[#allocation2 + $0x70] sm:$0xff] %vm79, 0.0
      %355 = vst.msk [vmem:[#allocation2 + $0x98] sm:$0xff] %vm79, 0.0
      %356 = vst.msk [vmem:[#allocation2 + $0xc0] sm:$0xff] %vm79, 0.0
      %357 = vst.msk [vmem:[#allocation2 + $0xe8] sm:$0xff] %vm79, 0.0
      %358 = vst.msk [vmem:[#allocation2 + $0x110] sm:$0xff] %vm79, 0.0
      %359 = vst.msk [vmem:[#allocation2 + $0x138] sm:$0xff] %vm79, 0.0
      %360 = vst.msk [vmem:[#allocation2 + $0x160] sm:$0xff] %vm79, 0.0
      %361 = vst.msk [vmem:[#allocation2 + $0x188] sm:$0xff] %vm79, 0.0
      %362 = vst.msk [vmem:[#allocation2 + $0x1b0] sm:$0xff] %vm79, 0.0
      %363 = vst.msk [vmem:[#allocation2 + $0x1d8] sm:$0xff] %vm79, 0.0
      %364 = vst.msk [vmem:[#allocation2 + $0x200] sm:$0xff] %vm79, 0.0
      %365 = vst.msk [vmem:[#allocation2 + $0x228] sm:$0xff] %vm79, 0.0
      %366 = vst.msk [vmem:[#allocation2 + $0x250] sm:$0xff] %vm79, 0.0
      %367 = vst.msk [vmem:[#allocation2 + $0x278] sm:$0xff] %vm79, 0.0
    $region17: #{tpu_custom_call.1} parent=1 // pred_fallthru
      _
    %v368 = vld [vmem:[#allocation2] sm:$0xff]
    %v369 = vld [vmem:[#allocation2 + $0x8] sm:$0xff]
    %v370 = vld [vmem:[#allocation2 + $0x10] sm:$0xff]
    %v371 = vld [vmem:[#allocation2 + $0x18] sm:$0xff]
    %v372 = vld [vmem:[#allocation2 + $0x20] sm:$0xff]
    %v373 = vld [vmem:[#allocation2 + $0x28] sm:$0xff]
    %v374 = vld [vmem:[#allocation2 + $0x30] sm:$0xff]
    %v375 = vld [vmem:[#allocation2 + $0x38] sm:$0xff]
    %v376 = vld [vmem:[#allocation2 + $0x40] sm:$0xff]
    %v377 = vld [vmem:[#allocation2 + $0x48] sm:$0xff]
    %v378 = vld [vmem:[#allocation2 + $0x50] sm:$0xff]
    %v379 = vld [vmem:[#allocation2 + $0x58] sm:$0xff]
    %v380 = vld [vmem:[#allocation2 + $0x60] sm:$0xff]
    %v381 = vld [vmem:[#allocation2 + $0x68] sm:$0xff]
    %v382 = vld [vmem:[#allocation2 + $0x70] sm:$0xff]
    %v383 = vld [vmem:[#allocation2 + $0x78] sm:$0xff]
    %v384 = vld [vmem:[#allocation2 + $0x80] sm:$0xff]
    %v385 = vld [vmem:[#allocation2 + $0x88] sm:$0xff]
    %v386 = vld [vmem:[#allocation2 + $0x90] sm:$0xff]
    %v387 = vld [vmem:[#allocation2 + $0x98] sm:$0xff]
    %v388 = vld [vmem:[#allocation2 + $0xa0] sm:$0xff]
    %v389 = vld [vmem:[#allocation2 + $0xa8] sm:$0xff]
    %v390 = vld [vmem:[#allocation2 + $0xb0] sm:$0xff]
    %v391 = vld [vmem:[#allocation2 + $0xb8] sm:$0xff]
    %v392 = vld [vmem:[#allocation2 + $0xc0] sm:$0xff]
    %v393 = vld [vmem:[#allocation2 + $0xc8] sm:$0xff]
    %v394 = vld [vmem:[#allocation2 + $0xd0] sm:$0xff]
    %v395 = vld [vmem:[#allocation2 + $0xd8] sm:$0xff]
    %v396 = vld [vmem:[#allocation2 + $0xe0] sm:$0xff]
    %v397 = vld [vmem:[#allocation2 + $0xe8] sm:$0xff]
    %v398 = vld [vmem:[#allocation2 + $0xf0] sm:$0xff]
    %v399 = vld [vmem:[#allocation2 + $0xf8] sm:$0xff]
    %v400 = vld [vmem:[#allocation2 + $0x100] sm:$0xff]
    %v401 = vld [vmem:[#allocation2 + $0x108] sm:$0xff]
    %v402 = vld [vmem:[#allocation2 + $0x110] sm:$0xff]
    %v403 = vld [vmem:[#allocation2 + $0x118] sm:$0xff]
    %v404 = vld [vmem:[#allocation2 + $0x120] sm:$0xff]
    %v405 = vld [vmem:[#allocation2 + $0x128] sm:$0xff]
    %v406 = vld [vmem:[#allocation2 + $0x130] sm:$0xff]
    %v407 = vld [vmem:[#allocation2 + $0x138] sm:$0xff]
    %v408 = vld [vmem:[#allocation2 + $0x140] sm:$0xff]
    %v409 = vld [vmem:[#allocation2 + $0x148] sm:$0xff]
    %v410 = vld [vmem:[#allocation2 + $0x150] sm:$0xff]
    %v411 = vld [vmem:[#allocation2 + $0x158] sm:$0xff]
    %v412 = vld [vmem:[#allocation2 + $0x160] sm:$0xff]
    %v413 = vld [vmem:[#allocation2 + $0x168] sm:$0xff]
    %v414 = vld [vmem:[#allocation2 + $0x170] sm:$0xff]
    %v415 = vld [vmem:[#allocation2 + $0x178] sm:$0xff]
    %v416 = vld [vmem:[#allocation2 + $0x180] sm:$0xff]
    %v417 = vld [vmem:[#allocation2 + $0x188] sm:$0xff]
    %v418 = vld [vmem:[#allocation2 + $0x190] sm:$0xff]
    %v419 = vld [vmem:[#allocation2 + $0x198] sm:$0xff]
    %v420 = vld [vmem:[#allocation2 + $0x1a0] sm:$0xff]
    %v421 = vld [vmem:[#allocation2 + $0x1a8] sm:$0xff]
    %v422 = vld [vmem:[#allocation2 + $0x1b0] sm:$0xff]
    %v423 = vld [vmem:[#allocation2 + $0x1b8] sm:$0xff]
    %v424 = vld [vmem:[#allocation2 + $0x1c0] sm:$0xff]
    %v425 = vld [vmem:[#allocation2 + $0x1c8] sm:$0xff]
    %v426 = vld [vmem:[#allocation2 + $0x1d0] sm:$0xff]
    %v427 = vld [vmem:[#allocation2 + $0x1d8] sm:$0xff]
    %v428 = vld [vmem:[#allocation2 + $0x1e0] sm:$0xff]
    %v429 = vld [vmem:[#allocation2 + $0x1e8] sm:$0xff]
    %v430 = vld [vmem:[#allocation2 + $0x1f0] sm:$0xff]
    %v431 = vld [vmem:[#allocation2 + $0x1f8] sm:$0xff]
    %v432 = vld [vmem:[#allocation2 + $0x200] sm:$0xff]
    %v433 = vld [vmem:[#allocation2 + $0x208] sm:$0xff]
    %v434 = vld [vmem:[#allocation2 + $0x210] sm:$0xff]
    %v435 = vld [vmem:[#allocation2 + $0x218] sm:$0xff]
    %v436 = vld [vmem:[#allocation2 + $0x220] sm:$0xff]
    %v437 = vld [vmem:[#allocation2 + $0x228] sm:$0xff]
    %v438 = vld [vmem:[#allocation2 + $0x230] sm:$0xff]
    %v439 = vld [vmem:[#allocation2 + $0x238] sm:$0xff]
    %v440 = vld [vmem:[#allocation2 + $0x240] sm:$0xff]
    %v441 = vld [vmem:[#allocation2 + $0x248] sm:$0xff]
    %v442 = vld [vmem:[#allocation2 + $0x250] sm:$0xff]
    %v443 = vld [vmem:[#allocation2 + $0x258] sm:$0xff]
    %v444 = vld [vmem:[#allocation2 + $0x260] sm:$0xff]
    %v445 = vld [vmem:[#allocation2 + $0x268] sm:$0xff]
    %v446 = vld [vmem:[#allocation2 + $0x270] sm:$0xff]
    %v447 = vld [vmem:[#allocation2 + $0x278] sm:$0xff]
    %v448 = vld [vmem:[#allocation3] sm:$0xff]
    %v449 = vld [vmem:[#allocation3 + $0x8] sm:$0xff]
    %v450 = vld [vmem:[#allocation3 + $0x10] sm:$0xff]
    %v451 = vld [vmem:[#allocation3 + $0x18] sm:$0xff]
    %v452 = vld [vmem:[#allocation3 + $0x20] sm:$0xff]
    %v453 = vld [vmem:[#allocation3 + $0x28] sm:$0xff]
    %v454 = vld [vmem:[#allocation3 + $0x30] sm:$0xff]
    %v455 = vld [vmem:[#allocation3 + $0x38] sm:$0xff]
    %v456 = vld [vmem:[#allocation3 + $0x40] sm:$0xff]
    %v457 = vld [vmem:[#allocation3 + $0x48] sm:$0xff]
    %v458 = vld [vmem:[#allocation3 + $0x50] sm:$0xff]
    %v459 = vld [vmem:[#allocation3 + $0x58] sm:$0xff]
    %v460 = vld [vmem:[#allocation3 + $0x60] sm:$0xff]
    %v461 = vld [vmem:[#allocation3 + $0x68] sm:$0xff]
    %v462 = vld [vmem:[#allocation3 + $0x70] sm:$0xff]
    %v463 = vld [vmem:[#allocation3 + $0x78] sm:$0xff]
    %v464 = vld [vmem:[#allocation3 + $0x80] sm:$0xff]
    %v465 = vld [vmem:[#allocation3 + $0x88] sm:$0xff]
    %v466 = vld [vmem:[#allocation3 + $0x90] sm:$0xff]
    %v467 = vld [vmem:[#allocation3 + $0x98] sm:$0xff]
    %v468 = vld [vmem:[#allocation3 + $0xa0] sm:$0xff]
    %v469 = vld [vmem:[#allocation3 + $0xa8] sm:$0xff]
    %v470 = vld [vmem:[#allocation3 + $0xb0] sm:$0xff]
    %v471 = vld [vmem:[#allocation3 + $0xb8] sm:$0xff]
    %v472 = vld [vmem:[#allocation3 + $0xc0] sm:$0xff]
    %v473 = vld [vmem:[#allocation3 + $0xc8] sm:$0xff]
    %v474 = vld [vmem:[#allocation3 + $0xd0] sm:$0xff]
    %v475 = vld [vmem:[#allocation3 + $0xd8] sm:$0xff]
    %v476 = vld [vmem:[#allocation3 + $0xe0] sm:$0xff]
    %v477 = vld [vmem:[#allocation3 + $0xe8] sm:$0xff]
    %v478 = vld [vmem:[#allocation3 + $0xf0] sm:$0xff]
    %v479 = vld [vmem:[#allocation3 + $0xf8] sm:$0xff]
    %v480 = vld [vmem:[#allocation3 + $0x100] sm:$0xff]
    %v481 = vld [vmem:[#allocation3 + $0x108] sm:$0xff]
    %v482 = vld [vmem:[#allocation3 + $0x110] sm:$0xff]
    %v483 = vld [vmem:[#allocation3 + $0x118] sm:$0xff]
    %v484 = vld [vmem:[#allocation3 + $0x120] sm:$0xff]
    %v485 = vld [vmem:[#allocation3 + $0x128] sm:$0xff]
    %v486 = vld [vmem:[#allocation3 + $0x130] sm:$0xff]
    %v487 = vld [vmem:[#allocation3 + $0x138] sm:$0xff]
    %v488 = vld [vmem:[#allocation3 + $0x140] sm:$0xff]
    %v489 = vld [vmem:[#allocation3 + $0x148] sm:$0xff]
    %v490 = vld [vmem:[#allocation3 + $0x150] sm:$0xff]
    %v491 = vld [vmem:[#allocation3 + $0x158] sm:$0xff]
    %v492 = vld [vmem:[#allocation3 + $0x160] sm:$0xff]
    %v493 = vld [vmem:[#allocation3 + $0x168] sm:$0xff]
    %v494 = vld [vmem:[#allocation3 + $0x170] sm:$0xff]
    %v495 = vld [vmem:[#allocation3 + $0x178] sm:$0xff]
    %v496 = vld [vmem:[#allocation3 + $0x180] sm:$0xff]
    %v497 = vld [vmem:[#allocation3 + $0x188] sm:$0xff]
    %v498 = vld [vmem:[#allocation3 + $0x190] sm:$0xff]
    %v499 = vld [vmem:[#allocation3 + $0x198] sm:$0xff]
    %v500 = vld [vmem:[#allocation3 + $0x1a0] sm:$0xff]
    %v501 = vld [vmem:[#allocation3 + $0x1a8] sm:$0xff]
    %v502 = vld [vmem:[#allocation3 + $0x1b0] sm:$0xff]
    %v503 = vld [vmem:[#allocation3 + $0x1b8] sm:$0xff]
    %v504 = vld [vmem:[#allocation3 + $0x1c0] sm:$0xff]
    %v505 = vld [vmem:[#allocation3 + $0x1c8] sm:$0xff]
    %v506 = vld [vmem:[#allocation3 + $0x1d0] sm:$0xff]
    %v507 = vld [vmem:[#allocation3 + $0x1d8] sm:$0xff]
    %v508 = vld [vmem:[#allocation3 + $0x1e0] sm:$0xff]
    %v509 = vld [vmem:[#allocation3 + $0x1e8] sm:$0xff]
    %v510 = vld [vmem:[#allocation3 + $0x1f0] sm:$0xff]
    %v511 = vld [vmem:[#allocation3 + $0x1f8] sm:$0xff]
    %v512 = vld [vmem:[#allocation3 + $0x200] sm:$0xff]
    %v513 = vld [vmem:[#allocation3 + $0x208] sm:$0xff]
    %v514 = vld [vmem:[#allocation3 + $0x210] sm:$0xff]
    %v515 = vld [vmem:[#allocation3 + $0x218] sm:$0xff]
    %v516 = vld [vmem:[#allocation3 + $0x220] sm:$0xff]
    %v517 = vld [vmem:[#allocation3 + $0x228] sm:$0xff]
    %v518 = vld [vmem:[#allocation3 + $0x230] sm:$0xff]
    %v519 = vld [vmem:[#allocation3 + $0x238] sm:$0xff]
    %v520 = vld [vmem:[#allocation3 + $0x240] sm:$0xff]
    %v521 = vld [vmem:[#allocation3 + $0x248] sm:$0xff]
    %v522 = vld [vmem:[#allocation3 + $0x250] sm:$0xff]
    %v523 = vld [vmem:[#allocation3 + $0x258] sm:$0xff]
    %v524 = vld [vmem:[#allocation3 + $0x260] sm:$0xff]
    %v525 = vld [vmem:[#allocation3 + $0x268] sm:$0xff]
    %v526 = vld [vmem:[#allocation3 + $0x270] sm:$0xff]
    %v527 = vld [vmem:[#allocation3 + $0x278] sm:$0xff]
    %528 = vmatprep.subr.mxu0 0.0
    %v529 = vand.u32 %v463, 4294901760
    %530 = vmatpush1.msra.mxu0 %v529
    %531 = vmatprep.subr.mxu0 0.0
    %v532 = vand.u32 %v462, 4294901760
    %533 = vmatpush1.msra.mxu0 %v532
    %534 = vmatprep.subr.mxu0 0.0
    %v535 = vand.u32 %v461, 4294901760
    %536 = vmatpush1.msra.mxu0 %v535
    %537 = vmatprep.subr.mxu0 0.0
    %v538 = vand.u32 %v460, 4294901760
    %539 = vmatpush1.msra.mxu0 %v538
    %540 = vmatprep.subr.mxu0 0.0
    %v541 = vand.u32 %v459, 4294901760
    %542 = vmatpush1.msra.mxu0 %v541
    %543 = vmatprep.subr.mxu0 0.0
    %v544 = vand.u32 %v458, 4294901760
    %545 = vmatpush1.msra.mxu0 %v544
    %546 = vmatprep.subr.mxu0 0.0
    %v547 = vand.u32 %v457, 4294901760
    %548 = vmatpush1.msra.mxu0 %v547
    %549 = vmatprep.subr.mxu0 0.0
    %v550 = vand.u32 %v456, 4294901760
    %551 = vmatpush1.msra.mxu0 %v550
    %552 = vmatprep.subr.mxu0 0.0
    %v553 = vand.u32 %v455, 4294901760
    %554 = vmatpush1.msra.mxu0 %v553
    %555 = vmatprep.subr.mxu0 0.0
    %v556 = vand.u32 %v454, 4294901760
    %557 = vmatpush1.msra.mxu0 %v556
    %558 = vmatprep.subr.mxu0 0.0
    %v559 = vand.u32 %v453, 4294901760
    %560 = vmatpush1.msra.mxu0 %v559
    %561 = vmatprep.subr.mxu0 0.0
    %v562 = vand.u32 %v452, 4294901760
    %563 = vmatpush1.msra.mxu0 %v562
    %564 = vmatprep.subr.mxu0 0.0
    %v565 = vand.u32 %v451, 4294901760
    %566 = vmatpush1.msra.mxu0 %v565
    %567 = vmatprep.subr.mxu0 0.0
    %v568 = vand.u32 %v450, 4294901760
    %569 = vmatpush1.msra.mxu0 %v568
    %570 = vmatprep.subr.mxu0 0.0
    %v571 = vand.u32 %v449, 4294901760
    %572 = vmatpush1.msra.mxu0 %v571
    %573 = vmatprep.subr.mxu0 0.0
    %v574 = vand.u32 %v448, 4294901760
    %575 = vmatpush1.msra.mxu0 %v574
    %576 = vmatprep.subr.mxu0 0.0
    %v577 = vand.u32 %v479, 4294901760
    %578 = vmatpush2.msra.mxu0 %v577
    %579 = vmatprep.subr.mxu0 0.0
    %v580 = vand.u32 %v478, 4294901760
    %581 = vmatpush2.msra.mxu0 %v580
    %582 = vmatprep.subr.mxu0 0.0
    %v583 = vand.u32 %v477, 4294901760
    %584 = vmatpush2.msra.mxu0 %v583
    %585 = vmatprep.subr.mxu0 0.0
    %v586 = vand.u32 %v476, 4294901760
    %587 = vmatpush2.msra.mxu0 %v586
    %588 = vmatprep.subr.mxu0 0.0
    %v589 = vand.u32 %v475, 4294901760
    %590 = vmatpush2.msra.mxu0 %v589
    %591 = vmatprep.subr.mxu0 0.0
    %v592 = vand.u32 %v474, 4294901760
    %593 = vmatpush2.msra.mxu0 %v592
    %594 = vmatprep.subr.mxu0 0.0
    %v595 = vand.u32 %v473, 4294901760
    %596 = vmatpush2.msra.mxu0 %v595
    %597 = vmatprep.subr.mxu0 0.0
    %v598 = vand.u32 %v472, 4294901760
    %599 = vmatpush2.msra.mxu0 %v598
    %600 = vmatprep.subr.mxu0 0.0
    %v601 = vand.u32 %v471, 4294901760
    %602 = vmatpush2.msra.mxu0 %v601
    %603 = vmatprep.subr.mxu0 0.0
    %v604 = vand.u32 %v470, 4294901760
    %605 = vmatpush2.msra.mxu0 %v604
    %606 = vmatprep.subr.mxu0 0.0
    %v607 = vand.u32 %v469, 4294901760
    %608 = vmatpush2.msra.mxu0 %v607
    %609 = vmatprep.subr.mxu0 0.0
    %v610 = vand.u32 %v468, 4294901760
    %611 = vmatpush2.msra.mxu0 %v610
    %612 = vmatprep.subr.mxu0 0.0
    %v613 = vand.u32 %v467, 4294901760
    %614 = vmatpush2.msra.mxu0 %v613
    %615 = vmatprep.subr.mxu0 0.0
    %v616 = vand.u32 %v466, 4294901760
    %617 = vmatpush2.msra.mxu0 %v616
    %618 = vmatprep.subr.mxu0 0.0
    %v619 = vand.u32 %v465, 4294901760
    %620 = vmatpush2.msra.mxu0 %v619
    %621 = vmatprep.subr.mxu0 0.0
    %v622 = vand.u32 %v464, 4294901760
    %623 = vmatpush2.msra.mxu0 %v622
    %v624 = vand.u32 %v369, 4294901760
    %v625 = vsub.f32 %v369, %v624
    %v626 = vand.u32 %v625, 4294901760
    %v627 = vsub.f32 %v625, %v626
    %v628 = vand.u32 %v627, 4294901760
    %629 = vmatprep.mubr.f32.mxu0 %v628
    %v630 = vand.u32 %v368, 4294901760
    %v631 = vsub.f32 %v368, %v630
    %v632 = vand.u32 %v631, 4294901760
    %v633 = vsub.f32 %v631, %v632
    %v634 = vand.u32 %v633, 4294901760
    %635 = vmatmul.mubr.f32.gmra.mxu0 %v634
    %v636 = vpop.f32.mrf.mxu0
    %v637 = vadd.f32 0.0, %v636
    %v638 = vpop.f32.mrf.mxu0
    %v639 = vand.u32 %v374, 4294901760
    %v640 = vsub.f32 %v374, %v639
    %v641 = vand.u32 %v640, 4294901760
    %v642 = vsub.f32 %v640, %v641
    %v643 = vand.u32 %v642, 4294901760
    %644 = vmatprep.mubr.f32.mxu0 %v643
    %v645 = vand.u32 %v373, 4294901760
    %v646 = vsub.f32 %v373, %v645
    %v647 = vand.u32 %v646, 4294901760
    %v648 = vsub.f32 %v646, %v647
    %v649 = vand.u32 %v648, 4294901760
    %650 = vmatmul.mubr.f32.gmra.mxu0 %v649
    %v651 = vpop.f32.mrf.mxu0
    %v652 = vadd.f32 0.0, %v651
    %v653 = vpop.f32.mrf.mxu0
    %v654 = vand.u32 %v379, 4294901760
    %v655 = vsub.f32 %v379, %v654
    %v656 = vand.u32 %v655, 4294901760
    %v657 = vsub.f32 %v655, %v656
    %v658 = vand.u32 %v657, 4294901760
    %659 = vmatprep.mubr.f32.mxu0 %v658
    %v660 = vand.u32 %v378, 4294901760
    %v661 = vsub.f32 %v378, %v660
    %v662 = vand.u32 %v661, 4294901760
    %v663 = vsub.f32 %v661, %v662
    %v664 = vand.u32 %v663, 4294901760
    %665 = vmatmul.mubr.f32.gmra.mxu0 %v664
    %v666 = vpop.f32.mrf.mxu0
    %v667 = vadd.f32 0.0, %v666
    %v668 = vpop.f32.mrf.mxu0
    %v669 = vand.u32 %v384, 4294901760
    %v670 = vsub.f32 %v384, %v669
    %v671 = vand.u32 %v670, 4294901760
    %v672 = vsub.f32 %v670, %v671
    %v673 = vand.u32 %v672, 4294901760
    %674 = vmatprep.mubr.f32.mxu0 %v673
    %v675 = vand.u32 %v383, 4294901760
    %v676 = vsub.f32 %v383, %v675
    %v677 = vand.u32 %v676, 4294901760
    %v678 = vsub.f32 %v676, %v677
    %v679 = vand.u32 %v678, 4294901760
    %680 = vmatmul.mubr.f32.gmra.mxu0 %v679
    %v681 = vpop.f32.mrf.mxu0
    %v682 = vadd.f32 0.0, %v681
    %v683 = vpop.f32.mrf.mxu0
    %v684 = vand.u32 %v389, 4294901760
    %v685 = vsub.f32 %v389, %v684
    %v686 = vand.u32 %v685, 4294901760
    %v687 = vsub.f32 %v685, %v686
    %v688 = vand.u32 %v687, 4294901760
    %689 = vmatprep.mubr.f32.mxu0 %v688
    %v690 = vand.u32 %v388, 4294901760
    %v691 = vsub.f32 %v388, %v690
    %v692 = vand.u32 %v691, 4294901760
    %v693 = vsub.f32 %v691, %v692
    %v694 = vand.u32 %v693, 4294901760
    %695 = vmatmul.mubr.f32.gmra.mxu0 %v694
    %v696 = vpop.f32.mrf.mxu0
    %v697 = vadd.f32 0.0, %v696
    %v698 = vpop.f32.mrf.mxu0
    %v699 = vand.u32 %v394, 4294901760
    %v700 = vsub.f32 %v394, %v699
    %v701 = vand.u32 %v700, 4294901760
    %v702 = vsub.f32 %v700, %v701
    %v703 = vand.u32 %v702, 4294901760
    %704 = vmatprep.mubr.f32.mxu0 %v703
    %v705 = vand.u32 %v393, 4294901760
    %v706 = vsub.f32 %v393, %v705
    %v707 = vand.u32 %v706, 4294901760
    %v708 = vsub.f32 %v706, %v707
    %v709 = vand.u32 %v708, 4294901760
    %710 = vmatmul.mubr.f32.gmra.mxu0 %v709
    %v711 = vpop.f32.mrf.mxu0
    %v712 = vadd.f32 0.0, %v711
    %v713 = vpop.f32.mrf.mxu0
    %v714 = vand.u32 %v399, 4294901760
    %v715 = vsub.f32 %v399, %v714
    %v716 = vand.u32 %v715, 4294901760
    %v717 = vsub.f32 %v715, %v716
    %v718 = vand.u32 %v717, 4294901760
    %719 = vmatprep.mubr.f32.mxu0 %v718
    %v720 = vand.u32 %v398, 4294901760
    %v721 = vsub.f32 %v398, %v720
    %v722 = vand.u32 %v721, 4294901760
    %v723 = vsub.f32 %v721, %v722
    %v724 = vand.u32 %v723, 4294901760
    %725 = vmatmul.mubr.f32.gmra.mxu0 %v724
    %v726 = vpop.f32.mrf.mxu0
    %v727 = vadd.f32 0.0, %v726
    %v728 = vpop.f32.mrf.mxu0
    %v729 = vand.u32 %v404, 4294901760
    %v730 = vsub.f32 %v404, %v729
    %v731 = vand.u32 %v730, 4294901760
    %v732 = vsub.f32 %v730, %v731
    %v733 = vand.u32 %v732, 4294901760
    %734 = vmatprep.mubr.f32.mxu0 %v733
    %v735 = vand.u32 %v403, 4294901760
    %v736 = vsub.f32 %v403, %v735
    %v737 = vand.u32 %v736, 4294901760
    %v738 = vsub.f32 %v736, %v737
    %v739 = vand.u32 %v738, 4294901760
    %740 = vmatmul.mubr.f32.gmra.mxu0 %v739
    %v741 = vpop.f32.mrf.mxu0
    %v742 = vadd.f32 0.0, %v741
    %v743 = vpop.f32.mrf.mxu0
    %v744 = vand.u32 %v409, 4294901760
    %v745 = vsub.f32 %v409, %v744
    %v746 = vand.u32 %v745, 4294901760
    %v747 = vsub.f32 %v745, %v746
    %v748 = vand.u32 %v747, 4294901760
    %749 = vmatprep.mubr.f32.mxu0 %v748
    %v750 = vand.u32 %v408, 4294901760
    %v751 = vsub.f32 %v408, %v750
    %v752 = vand.u32 %v751, 4294901760
    %v753 = vsub.f32 %v751, %v752
    %v754 = vand.u32 %v753, 4294901760
    %755 = vmatmul.mubr.f32.gmra.mxu0 %v754
    %v756 = vpop.f32.mrf.mxu0
    %v757 = vadd.f32 0.0, %v756
    %v758 = vpop.f32.mrf.mxu0
    %v759 = vand.u32 %v414, 4294901760
    %v760 = vsub.f32 %v414, %v759
    %v761 = vand.u32 %v760, 4294901760
    %v762 = vsub.f32 %v760, %v761
    %v763 = vand.u32 %v762, 4294901760
    %764 = vmatprep.mubr.f32.mxu0 %v763
    %v765 = vand.u32 %v413, 4294901760
    %v766 = vsub.f32 %v413, %v765
    %v767 = vand.u32 %v766, 4294901760
    %v768 = vsub.f32 %v766, %v767
    %v769 = vand.u32 %v768, 4294901760
    %770 = vmatmul.mubr.f32.gmra.mxu0 %v769
    %v771 = vpop.f32.mrf.mxu0
    %v772 = vadd.f32 0.0, %v771
    %v773 = vpop.f32.mrf.mxu0
    %v774 = vand.u32 %v419, 4294901760
    %v775 = vsub.f32 %v419, %v774
    %v776 = vand.u32 %v775, 4294901760
    %v777 = vsub.f32 %v775, %v776
    %v778 = vand.u32 %v777, 4294901760
    %779 = vmatprep.mubr.f32.mxu0 %v778
    %v780 = vand.u32 %v418, 4294901760
    %v781 = vsub.f32 %v418, %v780
    %v782 = vand.u32 %v781, 4294901760
    %v783 = vsub.f32 %v781, %v782
    %v784 = vand.u32 %v783, 4294901760
    %785 = vmatmul.mubr.f32.gmra.mxu0 %v784
    %v786 = vpop.f32.mrf.mxu0
    %v787 = vadd.f32 0.0, %v786
    %v788 = vpop.f32.mrf.mxu0
    %v789 = vand.u32 %v424, 4294901760
    %v790 = vsub.f32 %v424, %v789
    %v791 = vand.u32 %v790, 4294901760
    %v792 = vsub.f32 %v790, %v791
    %v793 = vand.u32 %v792, 4294901760
    %794 = vmatprep.mubr.f32.mxu0 %v793
    %v795 = vand.u32 %v423, 4294901760
    %v796 = vsub.f32 %v423, %v795
    %v797 = vand.u32 %v796, 4294901760
    %v798 = vsub.f32 %v796, %v797
    %v799 = vand.u32 %v798, 4294901760
    %800 = vmatmul.mubr.f32.gmra.mxu0 %v799
    %v801 = vpop.f32.mrf.mxu0
    %v802 = vadd.f32 0.0, %v801
    %v803 = vpop.f32.mrf.mxu0
    %v804 = vand.u32 %v429, 4294901760
    %v805 = vsub.f32 %v429, %v804
    %v806 = vand.u32 %v805, 4294901760
    %v807 = vsub.f32 %v805, %v806
    %v808 = vand.u32 %v807, 4294901760
    %809 = vmatprep.mubr.f32.mxu0 %v808
    %v810 = vand.u32 %v428, 4294901760
    %v811 = vsub.f32 %v428, %v810
    %v812 = vand.u32 %v811, 4294901760
    %v813 = vsub.f32 %v811, %v812
    %v814 = vand.u32 %v813, 4294901760
    %815 = vmatmul.mubr.f32.gmra.mxu0 %v814
    %v816 = vpop.f32.mrf.mxu0
    %v817 = vadd.f32 0.0, %v816
    %v818 = vpop.f32.mrf.mxu0
    %v819 = vand.u32 %v434, 4294901760
    %v820 = vsub.f32 %v434, %v819
    %v821 = vand.u32 %v820, 4294901760
    %v822 = vsub.f32 %v820, %v821
    %v823 = vand.u32 %v822, 4294901760
    %824 = vmatprep.mubr.f32.mxu0 %v823
    %v825 = vand.u32 %v433, 4294901760
    %v826 = vsub.f32 %v433, %v825
    %v827 = vand.u32 %v826, 4294901760
    %v828 = vsub.f32 %v826, %v827
    %v829 = vand.u32 %v828, 4294901760
    %830 = vmatmul.mubr.f32.gmra.mxu0 %v829
    %v831 = vpop.f32.mrf.mxu0
    %v832 = vadd.f32 0.0, %v831
    %v833 = vpop.f32.mrf.mxu0
    %v834 = vand.u32 %v439, 4294901760
    %v835 = vsub.f32 %v439, %v834
    %v836 = vand.u32 %v835, 4294901760
    %v837 = vsub.f32 %v835, %v836
    %v838 = vand.u32 %v837, 4294901760
    %839 = vmatprep.mubr.f32.mxu0 %v838
    %v840 = vand.u32 %v438, 4294901760
    %v841 = vsub.f32 %v438, %v840
    %v842 = vand.u32 %v841, 4294901760
    %v843 = vsub.f32 %v841, %v842
    %v844 = vand.u32 %v843, 4294901760
    %845 = vmatmul.mubr.f32.gmra.mxu0 %v844
    %v846 = vpop.f32.mrf.mxu0
    %v847 = vadd.f32 0.0, %v846
    %v848 = vpop.f32.mrf.mxu0
    %v849 = vand.u32 %v444, 4294901760
    %v850 = vsub.f32 %v444, %v849
    %v851 = vand.u32 %v850, 4294901760
    %v852 = vsub.f32 %v850, %v851
    %v853 = vand.u32 %v852, 4294901760
    %854 = vmatprep.mubr.f32.mxu0 %v853
    %v855 = vand.u32 %v443, 4294901760
    %v856 = vsub.f32 %v443, %v855
    %v857 = vand.u32 %v856, 4294901760
    %v858 = vsub.f32 %v856, %v857
    %v859 = vand.u32 %v858, 4294901760
    %860 = vmatmul.mubr.f32.gmra.mxu0 %v859
    %v861 = vpop.f32.mrf.mxu0
    %v862 = vadd.f32 0.0, %v861
    %v863 = vpop.f32.mrf.mxu0
    %864 = vdwg.mxu0
    %865 = vmatprep.subr.mxu0 0.0
    %v866 = vand.u32 %v463, 4294901760
    %v867 = vsub.f32 %v463, %v866
    %v868 = vand.u32 %v867, 4294901760
    %v869 = vsub.f32 %v867, %v868
    %v870 = vand.u32 %v869, 4294901760
    %871 = vmatpush1.msra.mxu0 %v870
    %872 = vmatprep.subr.mxu0 0.0
    %v873 = vand.u32 %v462, 4294901760
    %v874 = vsub.f32 %v462, %v873
    %v875 = vand.u32 %v874, 4294901760
    %v876 = vsub.f32 %v874, %v875
    %v877 = vand.u32 %v876, 4294901760
    %878 = vmatpush1.msra.mxu0 %v877
    %879 = vmatprep.subr.mxu0 0.0
    %v880 = vand.u32 %v461, 4294901760
    %v881 = vsub.f32 %v461, %v880
    %v882 = vand.u32 %v881, 4294901760
    %v883 = vsub.f32 %v881, %v882
    %v884 = vand.u32 %v883, 4294901760
    %885 = vmatpush1.msra.mxu0 %v884
    %886 = vmatprep.subr.mxu0 0.0
    %v887 = vand.u32 %v460, 4294901760
    %v888 = vsub.f32 %v460, %v887
    %v889 = vand.u32 %v888, 4294901760
    %v890 = vsub.f32 %v888, %v889
    %v891 = vand.u32 %v890, 4294901760
    %892 = vmatpush1.msra.mxu0 %v891
    %893 = vmatprep.subr.mxu0 0.0
    %v894 = vand.u32 %v459, 4294901760
    %v895 = vsub.f32 %v459, %v894
    %v896 = vand.u32 %v895, 4294901760
    %v897 = vsub.f32 %v895, %v896
    %v898 = vand.u32 %v897, 4294901760
    %899 = vmatpush1.msra.mxu0 %v898
    %900 = vmatprep.subr.mxu0 0.0
    %v901 = vand.u32 %v458, 4294901760
    %v902 = vsub.f32 %v458, %v901
    %v903 = vand.u32 %v902, 4294901760
    %v904 = vsub.f32 %v902, %v903
    %v905 = vand.u32 %v904, 4294901760
    %906 = vmatpush1.msra.mxu0 %v905
    %907 = vmatprep.subr.mxu0 0.0
    %v908 = vand.u32 %v457, 4294901760
    %v909 = vsub.f32 %v457, %v908
    %v910 = vand.u32 %v909, 4294901760
    %v911 = vsub.f32 %v909, %v910
    %v912 = vand.u32 %v911, 4294901760
    %913 = vmatpush1.msra.mxu0 %v912
    %914 = vmatprep.subr.mxu0 0.0
    %v915 = vand.u32 %v456, 4294901760
    %v916 = vsub.f32 %v456, %v915
    %v917 = vand.u32 %v916, 4294901760
    %v918 = vsub.f32 %v916, %v917
    %v919 = vand.u32 %v918, 4294901760
    %920 = vmatpush1.msra.mxu0 %v919
    %921 = vmatprep.subr.mxu0 0.0
    %v922 = vand.u32 %v455, 4294901760
    %v923 = vsub.f32 %v455, %v922
    %v924 = vand.u32 %v923, 4294901760
    %v925 = vsub.f32 %v923, %v924
    %v926 = vand.u32 %v925, 4294901760
    %927 = vmatpush1.msra.mxu0 %v926
    %928 = vmatprep.subr.mxu0 0.0
    %v929 = vand.u32 %v454, 4294901760
    %v930 = vsub.f32 %v454, %v929
    %v931 = vand.u32 %v930, 4294901760
    %v932 = vsub.f32 %v930, %v931
    %v933 = vand.u32 %v932, 4294901760
    %934 = vmatpush1.msra.mxu0 %v933
    %935 = vmatprep.subr.mxu0 0.0
    %v936 = vand.u32 %v453, 4294901760
    %v937 = vsub.f32 %v453, %v936
    %v938 = vand.u32 %v937, 4294901760
    %v939 = vsub.f32 %v937, %v938
    %v940 = vand.u32 %v939, 4294901760
    %941 = vmatpush1.msra.mxu0 %v940
    %942 = vmatprep.subr.mxu0 0.0
    %v943 = vand.u32 %v452, 4294901760
    %v944 = vsub.f32 %v452, %v943
    %v945 = vand.u32 %v944, 4294901760
    %v946 = vsub.f32 %v944, %v945
    %v947 = vand.u32 %v946, 4294901760
    %948 = vmatpush1.msra.mxu0 %v947
    %949 = vmatprep.subr.mxu0 0.0
    %v950 = vand.u32 %v451, 4294901760
    %v951 = vsub.f32 %v451, %v950
    %v952 = vand.u32 %v951, 4294901760
    %v953 = vsub.f32 %v951, %v952
    %v954 = vand.u32 %v953, 4294901760
    %955 = vmatpush1.msra.mxu0 %v954
    %956 = vmatprep.subr.mxu0 0.0
    %v957 = vand.u32 %v450, 4294901760
    %v958 = vsub.f32 %v450, %v957
    %v959 = vand.u32 %v958, 4294901760
    %v960 = vsub.f32 %v958, %v959
    %v961 = vand.u32 %v960, 4294901760
    %962 = vmatpush1.msra.mxu0 %v961
    %963 = vmatprep.subr.mxu0 0.0
    %v964 = vand.u32 %v449, 4294901760
    %v965 = vsub.f32 %v449, %v964
    %v966 = vand.u32 %v965, 4294901760
    %v967 = vsub.f32 %v965, %v966
    %v968 = vand.u32 %v967, 4294901760
    %969 = vmatpush1.msra.mxu0 %v968
    %970 = vmatprep.subr.mxu0 0.0
    %v971 = vand.u32 %v448, 4294901760
    %v972 = vsub.f32 %v448, %v971
    %v973 = vand.u32 %v972, 4294901760
    %v974 = vsub.f32 %v972, %v973
    %v975 = vand.u32 %v974, 4294901760
    %976 = vmatpush1.msra.mxu0 %v975
    %977 = vmatprep.subr.mxu0 0.0
    %v978 = vand.u32 %v479, 4294901760
    %v979 = vsub.f32 %v479, %v978
    %v980 = vand.u32 %v979, 4294901760
    %v981 = vsub.f32 %v979, %v980
    %v982 = vand.u32 %v981, 4294901760
    %983 = vmatpush2.msra.mxu0 %v982
    %984 = vmatprep.subr.mxu0 0.0
    %v985 = vand.u32 %v478, 4294901760
    %v986 = vsub.f32 %v478, %v985
    %v987 = vand.u32 %v986, 4294901760
    %v988 = vsub.f32 %v986, %v987
    %v989 = vand.u32 %v988, 4294901760
    %990 = vmatpush2.msra.mxu0 %v989
    %991 = vmatprep.subr.mxu0 0.0
    %v992 = vand.u32 %v477, 4294901760
    %v993 = vsub.f32 %v477, %v992
    %v994 = vand.u32 %v993, 4294901760
    %v995 = vsub.f32 %v993, %v994
    %v996 = vand.u32 %v995, 4294901760
    %997 = vmatpush2.msra.mxu0 %v996
    %998 = vmatprep.subr.mxu0 0.0
    %v999 = vand.u32 %v476, 4294901760
    %v1000 = vsub.f32 %v476, %v999
    %v1001 = vand.u32 %v1000, 4294901760
    %v1002 = vsub.f32 %v1000, %v1001
    %v1003 = vand.u32 %v1002, 4294901760
    %1004 = vmatpush2.msra.mxu0 %v1003
    %1005 = vmatprep.subr.mxu0 0.0
    %v1006 = vand.u32 %v475, 4294901760
    %v1007 = vsub.f32 %v475, %v1006
    %v1008 = vand.u32 %v1007, 4294901760
    %v1009 = vsub.f32 %v1007, %v1008
    %v1010 = vand.u32 %v1009, 4294901760
    %1011 = vmatpush2.msra.mxu0 %v1010
    %1012 = vmatprep.subr.mxu0 0.0
    %v1013 = vand.u32 %v474, 4294901760
    %v1014 = vsub.f32 %v474, %v1013
    %v1015 = vand.u32 %v1014, 4294901760
    %v1016 = vsub.f32 %v1014, %v1015
    %v1017 = vand.u32 %v1016, 4294901760
    %1018 = vmatpush2.msra.mxu0 %v1017
    %1019 = vmatprep.subr.mxu0 0.0
    %v1020 = vand.u32 %v473, 4294901760
    %v1021 = vsub.f32 %v473, %v1020
    %v1022 = vand.u32 %v1021, 4294901760
    %v1023 = vsub.f32 %v1021, %v1022
    %v1024 = vand.u32 %v1023, 4294901760
    %1025 = vmatpush2.msra.mxu0 %v1024
    %1026 = vmatprep.subr.mxu0 0.0
    %v1027 = vand.u32 %v472, 4294901760
    %v1028 = vsub.f32 %v472, %v1027
    %v1029 = vand.u32 %v1028, 4294901760
    %v1030 = vsub.f32 %v1028, %v1029
    %v1031 = vand.u32 %v1030, 4294901760
    %1032 = vmatpush2.msra.mxu0 %v1031
    %1033 = vmatprep.subr.mxu0 0.0
    %v1034 = vand.u32 %v471, 4294901760
    %v1035 = vsub.f32 %v471, %v1034
    %v1036 = vand.u32 %v1035, 4294901760
    %v1037 = vsub.f32 %v1035, %v1036
    %v1038 = vand.u32 %v1037, 4294901760
    %1039 = vmatpush2.msra.mxu0 %v1038
    %1040 = vmatprep.subr.mxu0 0.0
    %v1041 = vand.u32 %v470, 4294901760
    %v1042 = vsub.f32 %v470, %v1041
    %v1043 = vand.u32 %v1042, 4294901760
    %v1044 = vsub.f32 %v1042, %v1043
    %v1045 = vand.u32 %v1044, 4294901760
    %1046 = vmatpush2.msra.mxu0 %v1045
    %1047 = vmatprep.subr.mxu0 0.0
    %v1048 = vand.u32 %v469, 4294901760
    %v1049 = vsub.f32 %v469, %v1048
    %v1050 = vand.u32 %v1049, 4294901760
    %v1051 = vsub.f32 %v1049, %v1050
    %v1052 = vand.u32 %v1051, 4294901760
    %1053 = vmatpush2.msra.mxu0 %v1052
    %1054 = vmatprep.subr.mxu0 0.0
    %v1055 = vand.u32 %v468, 4294901760
    %v1056 = vsub.f32 %v468, %v1055
    %v1057 = vand.u32 %v1056, 4294901760
    %v1058 = vsub.f32 %v1056, %v1057
    %v1059 = vand.u32 %v1058, 4294901760
    %1060 = vmatpush2.msra.mxu0 %v1059
    %1061 = vmatprep.subr.mxu0 0.0
    %v1062 = vand.u32 %v467, 4294901760
    %v1063 = vsub.f32 %v467, %v1062
    %v1064 = vand.u32 %v1063, 4294901760
    %v1065 = vsub.f32 %v1063, %v1064
    %v1066 = vand.u32 %v1065, 4294901760
    %1067 = vmatpush2.msra.mxu0 %v1066
    %1068 = vmatprep.subr.mxu0 0.0
    %v1069 = vand.u32 %v466, 4294901760
    %v1070 = vsub.f32 %v466, %v1069
    %v1071 = vand.u32 %v1070, 4294901760
    %v1072 = vsub.f32 %v1070, %v1071
    %v1073 = vand.u32 %v1072, 4294901760
    %1074 = vmatpush2.msra.mxu0 %v1073
    %1075 = vmatprep.subr.mxu0 0.0
    %v1076 = vand.u32 %v465, 4294901760
    %v1077 = vsub.f32 %v465, %v1076
    %v1078 = vand.u32 %v1077, 4294901760
    %v1079 = vsub.f32 %v1077, %v1078
    %v1080 = vand.u32 %v1079, 4294901760
    %1081 = vmatpush2.msra.mxu0 %v1080
    %1082 = vmatprep.subr.mxu0 0.0
    %v1083 = vand.u32 %v464, 4294901760
    %v1084 = vsub.f32 %v464, %v1083
    %v1085 = vand.u32 %v1084, 4294901760
    %v1086 = vsub.f32 %v1084, %v1085
    %v1087 = vand.u32 %v1086, 4294901760
    %1088 = vmatpush2.msra.mxu0 %v1087
    %v1089 = vand.u32 %v369, 4294901760
    %1090 = vmatprep.mubr.f32.mxu0 %v1089
    %v1091 = vand.u32 %v368, 4294901760
    %1092 = vmatmul.mubr.f32.gmra.mxu0 %v1091
    %v1093 = vpop.f32.mrf.mxu0
    %v1094 = vadd.f32 %v637, %v1093
    %v1095 = vpop.f32.mrf.mxu0
    %v1096 = vand.u32 %v374, 4294901760
    %1097 = vmatprep.mubr.f32.mxu0 %v1096
    %v1098 = vand.u32 %v373, 4294901760
    %1099 = vmatmul.mubr.f32.gmra.mxu0 %v1098
    %v1100 = vpop.f32.mrf.mxu0
    %v1101 = vadd.f32 %v652, %v1100
    %v1102 = vpop.f32.mrf.mxu0
    %v1103 = vand.u32 %v379, 4294901760
    %1104 = vmatprep.mubr.f32.mxu0 %v1103
    %v1105 = vand.u32 %v378, 4294901760
    %1106 = vmatmul.mubr.f32.gmra.mxu0 %v1105
    %v1107 = vpop.f32.mrf.mxu0
    %v1108 = vadd.f32 %v667, %v1107
    %v1109 = vpop.f32.mrf.mxu0
    %v1110 = vand.u32 %v384, 4294901760
    %1111 = vmatprep.mubr.f32.mxu0 %v1110
    %v1112 = vand.u32 %v383, 4294901760
    %1113 = vmatmul.mubr.f32.gmra.mxu0 %v1112
    %v1114 = vpop.f32.mrf.mxu0
    %v1115 = vadd.f32 %v682, %v1114
    %v1116 = vpop.f32.mrf.mxu0
    %v1117 = vand.u32 %v389, 4294901760
    %1118 = vmatprep.mubr.f32.mxu0 %v1117
    %v1119 = vand.u32 %v388, 4294901760
    %1120 = vmatmul.mubr.f32.gmra.mxu0 %v1119
    %v1121 = vpop.f32.mrf.mxu0
    %v1122 = vadd.f32 %v697, %v1121
    %v1123 = vpop.f32.mrf.mxu0
    %v1124 = vand.u32 %v394, 4294901760
    %1125 = vmatprep.mubr.f32.mxu0 %v1124
    %v1126 = vand.u32 %v393, 4294901760
    %1127 = vmatmul.mubr.f32.gmra.mxu0 %v1126
    %v1128 = vpop.f32.mrf.mxu0
    %v1129 = vadd.f32 %v712, %v1128
    %v1130 = vpop.f32.mrf.mxu0
    %v1131 = vand.u32 %v399, 4294901760
    %1132 = vmatprep.mubr.f32.mxu0 %v1131
    %v1133 = vand.u32 %v398, 4294901760
    %1134 = vmatmul.mubr.f32.gmra.mxu0 %v1133
    %v1135 = vpop.f32.mrf.mxu0
    %v1136 = vadd.f32 %v727, %v1135
    %v1137 = vpop.f32.mrf.mxu0
    %v1138 = vand.u32 %v404, 4294901760
    %1139 = vmatprep.mubr.f32.mxu0 %v1138
    %v1140 = vand.u32 %v403, 4294901760
    %1141 = vmatmul.mubr.f32.gmra.mxu0 %v1140
    %v1142 = vpop.f32.mrf.mxu0
    %v1143 = vadd.f32 %v742, %v1142
    %v1144 = vpop.f32.mrf.mxu0
    %v1145 = vand.u32 %v409, 4294901760
    %1146 = vmatprep.mubr.f32.mxu0 %v1145
    %v1147 = vand.u32 %v408, 4294901760
    %1148 = vmatmul.mubr.f32.gmra.mxu0 %v1147
    %v1149 = vpop.f32.mrf.mxu0
    %v1150 = vadd.f32 %v757, %v1149
    %v1151 = vpop.f32.mrf.mxu0
    %v1152 = vand.u32 %v414, 4294901760
    %1153 = vmatprep.mubr.f32.mxu0 %v1152
    %v1154 = vand.u32 %v413, 4294901760
    %1155 = vmatmul.mubr.f32.gmra.mxu0 %v1154
    %v1156 = vpop.f32.mrf.mxu0
    %v1157 = vadd.f32 %v772, %v1156
    %v1158 = vpop.f32.mrf.mxu0
    %v1159 = vand.u32 %v419, 4294901760
    %1160 = vmatprep.mubr.f32.mxu0 %v1159
    %v1161 = vand.u32 %v418, 4294901760
    %1162 = vmatmul.mubr.f32.gmra.mxu0 %v1161
    %v1163 = vpop.f32.mrf.mxu0
    %v1164 = vadd.f32 %v787, %v1163
    %v1165 = vpop.f32.mrf.mxu0
    %v1166 = vand.u32 %v424, 4294901760
    %1167 = vmatprep.mubr.f32.mxu0 %v1166
    %v1168 = vand.u32 %v423, 4294901760
    %1169 = vmatmul.mubr.f32.gmra.mxu0 %v1168
    %v1170 = vpop.f32.mrf.mxu0
    %v1171 = vadd.f32 %v802, %v1170
    %v1172 = vpop.f32.mrf.mxu0
    %v1173 = vand.u32 %v429, 4294901760
    %1174 = vmatprep.mubr.f32.mxu0 %v1173
    %v1175 = vand.u32 %v428, 4294901760
    %1176 = vmatmul.mubr.f32.gmra.mxu0 %v1175
    %v1177 = vpop.f32.mrf.mxu0
    %v1178 = vadd.f32 %v817, %v1177
    %v1179 = vpop.f32.mrf.mxu0
    %v1180 = vand.u32 %v434, 4294901760
    %1181 = vmatprep.mubr.f32.mxu0 %v1180
    %v1182 = vand.u32 %v433, 4294901760
    %1183 = vmatmul.mubr.f32.gmra.mxu0 %v1182
    %v1184 = vpop.f32.mrf.mxu0
    %v1185 = vadd.f32 %v832, %v1184
    %v1186 = vpop.f32.mrf.mxu0
    %v1187 = vand.u32 %v439, 4294901760
    %1188 = vmatprep.mubr.f32.mxu0 %v1187
    %v1189 = vand.u32 %v438, 4294901760
    %1190 = vmatmul.mubr.f32.gmra.mxu0 %v1189
    %v1191 = vpop.f32.mrf.mxu0
    %v1192 = vadd.f32 %v847, %v1191
    %v1193 = vpop.f32.mrf.mxu0
    %v1194 = vand.u32 %v444, 4294901760
    %1195 = vmatprep.mubr.f32.mxu0 %v1194
    %v1196 = vand.u32 %v443, 4294901760
    %1197 = vmatmul.mubr.f32.gmra.mxu0 %v1196
    %v1198 = vpop.f32.mrf.mxu0
    %v1199 = vadd.f32 %v862, %v1198
    %v1200 = vpop.f32.mrf.mxu0
    %1201 = vdwg.mxu0
    %1202 = vmatprep.subr.mxu0 0.0
    %v1203 = vand.u32 %v463, 4294901760
    %v1204 = vsub.f32 %v463, %v1203
    %1205 = vmatpush1.msra.mxu0 %v1204
    %1206 = vmatprep.subr.mxu0 0.0
    %v1207 = vand.u32 %v462, 4294901760
    %v1208 = vsub.f32 %v462, %v1207
    %1209 = vmatpush1.msra.mxu0 %v1208
    %1210 = vmatprep.subr.mxu0 0.0
    %v1211 = vand.u32 %v461, 4294901760
    %v1212 = vsub.f32 %v461, %v1211
    %1213 = vmatpush1.msra.mxu0 %v1212
    %1214 = vmatprep.subr.mxu0 0.0
    %v1215 = vand.u32 %v460, 4294901760
    %v1216 = vsub.f32 %v460, %v1215
    %1217 = vmatpush1.msra.mxu0 %v1216
    %1218 = vmatprep.subr.mxu0 0.0
    %v1219 = vand.u32 %v459, 4294901760
    %v1220 = vsub.f32 %v459, %v1219
    %1221 = vmatpush1.msra.mxu0 %v1220
    %1222 = vmatprep.subr.mxu0 0.0
    %v1223 = vand.u32 %v458, 4294901760
    %v1224 = vsub.f32 %v458, %v1223
    %1225 = vmatpush1.msra.mxu0 %v1224
    %1226 = vmatprep.subr.mxu0 0.0
    %v1227 = vand.u32 %v457, 4294901760
    %v1228 = vsub.f32 %v457, %v1227
    %1229 = vmatpush1.msra.mxu0 %v1228
    %1230 = vmatprep.subr.mxu0 0.0
    %v1231 = vand.u32 %v456, 4294901760
    %v1232 = vsub.f32 %v456, %v1231
    %1233 = vmatpush1.msra.mxu0 %v1232
    %1234 = vmatprep.subr.mxu0 0.0
    %v1235 = vand.u32 %v455, 4294901760
    %v1236 = vsub.f32 %v455, %v1235
    %1237 = vmatpush1.msra.mxu0 %v1236
    %1238 = vmatprep.subr.mxu0 0.0
    %v1239 = vand.u32 %v454, 4294901760
    %v1240 = vsub.f32 %v454, %v1239
    %1241 = vmatpush1.msra.mxu0 %v1240
    %1242 = vmatprep.subr.mxu0 0.0
    %v1243 = vand.u32 %v453, 4294901760
    %v1244 = vsub.f32 %v453, %v1243
    %1245 = vmatpush1.msra.mxu0 %v1244
    %1246 = vmatprep.subr.mxu0 0.0
    %v1247 = vand.u32 %v452, 4294901760
    %v1248 = vsub.f32 %v452, %v1247
    %1249 = vmatpush1.msra.mxu0 %v1248
    %1250 = vmatprep.subr.mxu0 0.0
    %v1251 = vand.u32 %v451, 4294901760
    %v1252 = vsub.f32 %v451, %v1251
    %1253 = vmatpush1.msra.mxu0 %v1252
    %1254 = vmatprep.subr.mxu0 0.0
    %v1255 = vand.u32 %v450, 4294901760
    %v1256 = vsub.f32 %v450, %v1255
    %1257 = vmatpush1.msra.mxu0 %v1256
    %1258 = vmatprep.subr.mxu0 0.0
    %v1259 = vand.u32 %v449, 4294901760
    %v1260 = vsub.f32 %v449, %v1259
    %1261 = vmatpush1.msra.mxu0 %v1260
    %1262 = vmatprep.subr.mxu0 0.0
    %v1263 = vand.u32 %v448, 4294901760
    %v1264 = vsub.f32 %v448, %v1263
    %1265 = vmatpush1.msra.mxu0 %v1264
    %1266 = vmatprep.subr.mxu0 0.0
    %v1267 = vand.u32 %v479, 4294901760
    %v1268 = vsub.f32 %v479, %v1267
    %1269 = vmatpush2.msra.mxu0 %v1268
    %1270 = vmatprep.subr.mxu0 0.0
    %v1271 = vand.u32 %v478, 4294901760
    %v1272 = vsub.f32 %v478, %v1271
    %1273 = vmatpush2.msra.mxu0 %v1272
    %1274 = vmatprep.subr.mxu0 0.0
    %v1275 = vand.u32 %v477, 4294901760
    %v1276 = vsub.f32 %v477, %v1275
    %1277 = vmatpush2.msra.mxu0 %v1276
    %1278 = vmatprep.subr.mxu0 0.0
    %v1279 = vand.u32 %v476, 4294901760
    %v1280 = vsub.f32 %v476, %v1279
    %1281 = vmatpush2.msra.mxu0 %v1280
    %1282 = vmatprep.subr.mxu0 0.0
    %v1283 = vand.u32 %v475, 4294901760
    %v1284 = vsub.f32 %v475, %v1283
    %1285 = vmatpush2.msra.mxu0 %v1284
    %1286 = vmatprep.subr.mxu0 0.0
    %v1287 = vand.u32 %v474, 4294901760
    %v1288 = vsub.f32 %v474, %v1287
    %1289 = vmatpush2.msra.mxu0 %v1288
    %1290 = vmatprep.subr.mxu0 0.0
    %v1291 = vand.u32 %v473, 4294901760
    %v1292 = vsub.f32 %v473, %v1291
    %1293 = vmatpush2.msra.mxu0 %v1292
    %1294 = vmatprep.subr.mxu0 0.0
    %v1295 = vand.u32 %v472, 4294901760
    %v1296 = vsub.f32 %v472, %v1295
    %1297 = vmatpush2.msra.mxu0 %v1296
    %1298 = vmatprep.subr.mxu0 0.0
    %v1299 = vand.u32 %v471, 4294901760
    %v1300 = vsub.f32 %v471, %v1299
    %1301 = vmatpush2.msra.mxu0 %v1300
    %1302 = vmatprep.subr.mxu0 0.0
    %v1303 = vand.u32 %v470, 4294901760
    %v1304 = vsub.f32 %v470, %v1303
    %1305 = vmatpush2.msra.mxu0 %v1304
    %1306 = vmatprep.subr.mxu0 0.0
    %v1307 = vand.u32 %v469, 4294901760
    %v1308 = vsub.f32 %v469, %v1307
    %1309 = vmatpush2.msra.mxu0 %v1308
    %1310 = vmatprep.subr.mxu0 0.0
    %v1311 = vand.u32 %v468, 4294901760
    %v1312 = vsub.f32 %v468, %v1311
    %1313 = vmatpush2.msra.mxu0 %v1312
    %1314 = vmatprep.subr.mxu0 0.0
    %v1315 = vand.u32 %v467, 4294901760
    %v1316 = vsub.f32 %v467, %v1315
    %1317 = vmatpush2.msra.mxu0 %v1316
    %1318 = vmatprep.subr.mxu0 0.0
    %v1319 = vand.u32 %v466, 4294901760
    %v1320 = vsub.f32 %v466, %v1319
    %1321 = vmatpush2.msra.mxu0 %v1320
    %1322 = vmatprep.subr.mxu0 0.0
    %v1323 = vand.u32 %v465, 4294901760
    %v1324 = vsub.f32 %v465, %v1323
    %1325 = vmatpush2.msra.mxu0 %v1324
    %1326 = vmatprep.subr.mxu0 0.0
    %v1327 = vand.u32 %v464, 4294901760
    %v1328 = vsub.f32 %v464, %v1327
    %1329 = vmatpush2.msra.mxu0 %v1328
    %v1330 = vand.u32 %v369, 4294901760
    %v1331 = vsub.f32 %v369, %v1330
    %1332 = vmatprep.mubr.f32.mxu0 %v1331
    %v1333 = vand.u32 %v368, 4294901760
    %v1334 = vsub.f32 %v368, %v1333
    %1335 = vmatmul.mubr.f32.gmra.mxu0 %v1334
    %v1336 = vpop.f32.mrf.mxu0
    %v1337 = vadd.f32 %v1094, %v1336
    %v1338 = vpop.f32.mrf.mxu0
    %v1339 = vand.u32 %v374, 4294901760
    %v1340 = vsub.f32 %v374, %v1339
    %1341 = vmatprep.mubr.f32.mxu0 %v1340
    %v1342 = vand.u32 %v373, 4294901760
    %v1343 = vsub.f32 %v373, %v1342
    %1344 = vmatmul.mubr.f32.gmra.mxu0 %v1343
    %v1345 = vpop.f32.mrf.mxu0
    %v1346 = vadd.f32 %v1101, %v1345
    %v1347 = vpop.f32.mrf.mxu0
    %v1348 = vand.u32 %v379, 4294901760
    %v1349 = vsub.f32 %v379, %v1348
    %1350 = vmatprep.mubr.f32.mxu0 %v1349
    %v1351 = vand.u32 %v378, 4294901760
    %v1352 = vsub.f32 %v378, %v1351
    %1353 = vmatmul.mubr.f32.gmra.mxu0 %v1352
    %v1354 = vpop.f32.mrf.mxu0
    %v1355 = vadd.f32 %v1108, %v1354
    %v1356 = vpop.f32.mrf.mxu0
    %v1357 = vand.u32 %v384, 4294901760
    %v1358 = vsub.f32 %v384, %v1357
    %1359 = vmatprep.mubr.f32.mxu0 %v1358
    %v1360 = vand.u32 %v383, 4294901760
    %v1361 = vsub.f32 %v383, %v1360
    %1362 = vmatmul.mubr.f32.gmra.mxu0 %v1361
    %v1363 = vpop.f32.mrf.mxu0
    %v1364 = vadd.f32 %v1115, %v1363
    %v1365 = vpop.f32.mrf.mxu0
    %v1366 = vand.u32 %v389, 4294901760
    %v1367 = vsub.f32 %v389, %v1366
    %1368 = vmatprep.mubr.f32.mxu0 %v1367
    %v1369 = vand.u32 %v388, 4294901760
    %v1370 = vsub.f32 %v388, %v1369
    %1371 = vmatmul.mubr.f32.gmra.mxu0 %v1370
    %v1372 = vpop.f32.mrf.mxu0
    %v1373 = vadd.f32 %v1122, %v1372
    %v1374 = vpop.f32.mrf.mxu0
    %v1375 = vand.u32 %v394, 4294901760
    %v1376 = vsub.f32 %v394, %v1375
    %1377 = vmatprep.mubr.f32.mxu0 %v1376
    %v1378 = vand.u32 %v393, 4294901760
    %v1379 = vsub.f32 %v393, %v1378
    %1380 = vmatmul.mubr.f32.gmra.mxu0 %v1379
    %v1381 = vpop.f32.mrf.mxu0
    %v1382 = vadd.f32 %v1129, %v1381
    %v1383 = vpop.f32.mrf.mxu0
    %v1384 = vand.u32 %v399, 4294901760
    %v1385 = vsub.f32 %v399, %v1384
    %1386 = vmatprep.mubr.f32.mxu0 %v1385
    %v1387 = vand.u32 %v398, 4294901760
    %v1388 = vsub.f32 %v398, %v1387
    %1389 = vmatmul.mubr.f32.gmra.mxu0 %v1388
    %v1390 = vpop.f32.mrf.mxu0
    %v1391 = vadd.f32 %v1136, %v1390
    %v1392 = vpop.f32.mrf.mxu0
    %v1393 = vand.u32 %v404, 4294901760
    %v1394 = vsub.f32 %v404, %v1393
    %1395 = vmatprep.mubr.f32.mxu0 %v1394
    %v1396 = vand.u32 %v403, 4294901760
    %v1397 = vsub.f32 %v403, %v1396
    %1398 = vmatmul.mubr.f32.gmra.mxu0 %v1397
    %v1399 = vpop.f32.mrf.mxu0
    %v1400 = vadd.f32 %v1143, %v1399
    %v1401 = vpop.f32.mrf.mxu0
    %v1402 = vand.u32 %v409, 4294901760
    %v1403 = vsub.f32 %v409, %v1402
    %1404 = vmatprep.mubr.f32.mxu0 %v1403
    %v1405 = vand.u32 %v408, 4294901760
    %v1406 = vsub.f32 %v408, %v1405
    %1407 = vmatmul.mubr.f32.gmra.mxu0 %v1406
    %v1408 = vpop.f32.mrf.mxu0
    %v1409 = vadd.f32 %v1150, %v1408
    %v1410 = vpop.f32.mrf.mxu0
    %v1411 = vand.u32 %v414, 4294901760
    %v1412 = vsub.f32 %v414, %v1411
    %1413 = vmatprep.mubr.f32.mxu0 %v1412
    %v1414 = vand.u32 %v413, 4294901760
    %v1415 = vsub.f32 %v413, %v1414
    %1416 = vmatmul.mubr.f32.gmra.mxu0 %v1415
    %v1417 = vpop.f32.mrf.mxu0
    %v1418 = vadd.f32 %v1157, %v1417
    %v1419 = vpop.f32.mrf.mxu0
    %v1420 = vand.u32 %v419, 4294901760
    %v1421 = vsub.f32 %v419, %v1420
    %1422 = vmatprep.mubr.f32.mxu0 %v1421
    %v1423 = vand.u32 %v418, 4294901760
    %v1424 = vsub.f32 %v418, %v1423
    %1425 = vmatmul.mubr.f32.gmra.mxu0 %v1424
    %v1426 = vpop.f32.mrf.mxu0
    %v1427 = vadd.f32 %v1164, %v1426
    %v1428 = vpop.f32.mrf.mxu0
    %v1429 = vand.u32 %v424, 4294901760
    %v1430 = vsub.f32 %v424, %v1429
    %1431 = vmatprep.mubr.f32.mxu0 %v1430
    %v1432 = vand.u32 %v423, 4294901760
    %v1433 = vsub.f32 %v423, %v1432
    %1434 = vmatmul.mubr.f32.gmra.mxu0 %v1433
    %v1435 = vpop.f32.mrf.mxu0
    %v1436 = vadd.f32 %v1171, %v1435
    %v1437 = vpop.f32.mrf.mxu0
    %v1438 = vand.u32 %v429, 4294901760
    %v1439 = vsub.f32 %v429, %v1438
    %1440 = vmatprep.mubr.f32.mxu0 %v1439
    %v1441 = vand.u32 %v428, 4294901760
    %v1442 = vsub.f32 %v428, %v1441
    %1443 = vmatmul.mubr.f32.gmra.mxu0 %v1442
    %v1444 = vpop.f32.mrf.mxu0
    %v1445 = vadd.f32 %v1178, %v1444
    %v1446 = vpop.f32.mrf.mxu0
    %v1447 = vand.u32 %v434, 4294901760
    %v1448 = vsub.f32 %v434, %v1447
    %1449 = vmatprep.mubr.f32.mxu0 %v1448
    %v1450 = vand.u32 %v433, 4294901760
    %v1451 = vsub.f32 %v433, %v1450
    %1452 = vmatmul.mubr.f32.gmra.mxu0 %v1451
    %v1453 = vpop.f32.mrf.mxu0
    %v1454 = vadd.f32 %v1185, %v1453
    %v1455 = vpop.f32.mrf.mxu0
    %v1456 = vand.u32 %v439, 4294901760
    %v1457 = vsub.f32 %v439, %v1456
    %1458 = vmatprep.mubr.f32.mxu0 %v1457
    %v1459 = vand.u32 %v438, 4294901760
    %v1460 = vsub.f32 %v438, %v1459
    %1461 = vmatmul.mubr.f32.gmra.mxu0 %v1460
    %v1462 = vpop.f32.mrf.mxu0
    %v1463 = vadd.f32 %v1192, %v1462
    %v1464 = vpop.f32.mrf.mxu0
    %v1465 = vand.u32 %v444, 4294901760
    %v1466 = vsub.f32 %v444, %v1465
    %1467 = vmatprep.mubr.f32.mxu0 %v1466
    %v1468 = vand.u32 %v443, 4294901760
    %v1469 = vsub.f32 %v443, %v1468
    %1470 = vmatmul.mubr.f32.gmra.mxu0 %v1469
    %v1471 = vpop.f32.mrf.mxu0
    %v1472 = vadd.f32 %v1199, %v1471
    %v1473 = vpop.f32.mrf.mxu0
    %1474 = vdwg.mxu0
    %1475 = vmatprep.subr.mxu0 0.0
    %v1476 = vand.u32 %v463, 4294901760
    %1477 = vmatpush1.msra.mxu0 %v1476
    %1478 = vmatprep.subr.mxu0 0.0
    %v1479 = vand.u32 %v462, 4294901760
    %1480 = vmatpush1.msra.mxu0 %v1479
    %1481 = vmatprep.subr.mxu0 0.0
    %v1482 = vand.u32 %v461, 4294901760
    %1483 = vmatpush1.msra.mxu0 %v1482
    %1484 = vmatprep.subr.mxu0 0.0
    %v1485 = vand.u32 %v460, 4294901760
    %1486 = vmatpush1.msra.mxu0 %v1485
    %1487 = vmatprep.subr.mxu0 0.0
    %v1488 = vand.u32 %v459, 4294901760
    %1489 = vmatpush1.msra.mxu0 %v1488
    %1490 = vmatprep.subr.mxu0 0.0
    %v1491 = vand.u32 %v458, 4294901760
    %1492 = vmatpush1.msra.mxu0 %v1491
    %1493 = vmatprep.subr.mxu0 0.0
    %v1494 = vand.u32 %v457, 4294901760
    %1495 = vmatpush1.msra.mxu0 %v1494
    %1496 = vmatprep.subr.mxu0 0.0
    %v1497 = vand.u32 %v456, 4294901760
    %1498 = vmatpush1.msra.mxu0 %v1497
    %1499 = vmatprep.subr.mxu0 0.0
    %v1500 = vand.u32 %v455, 4294901760
    %1501 = vmatpush1.msra.mxu0 %v1500
    %1502 = vmatprep.subr.mxu0 0.0
    %v1503 = vand.u32 %v454, 4294901760
    %1504 = vmatpush1.msra.mxu0 %v1503
    %1505 = vmatprep.subr.mxu0 0.0
    %v1506 = vand.u32 %v453, 4294901760
    %1507 = vmatpush1.msra.mxu0 %v1506
    %1508 = vmatprep.subr.mxu0 0.0
    %v1509 = vand.u32 %v452, 4294901760
    %1510 = vmatpush1.msra.mxu0 %v1509
    %1511 = vmatprep.subr.mxu0 0.0
    %v1512 = vand.u32 %v451, 4294901760
    %1513 = vmatpush1.msra.mxu0 %v1512
    %1514 = vmatprep.subr.mxu0 0.0
    %v1515 = vand.u32 %v450, 4294901760
    %1516 = vmatpush1.msra.mxu0 %v1515
    %1517 = vmatprep.subr.mxu0 0.0
    %v1518 = vand.u32 %v449, 4294901760
    %1519 = vmatpush1.msra.mxu0 %v1518
    %1520 = vmatprep.subr.mxu0 0.0
    %v1521 = vand.u32 %v448, 4294901760
    %1522 = vmatpush1.msra.mxu0 %v1521
    %1523 = vmatprep.subr.mxu0 0.0
    %v1524 = vand.u32 %v479, 4294901760
    %1525 = vmatpush2.msra.mxu0 %v1524
    %1526 = vmatprep.subr.mxu0 0.0
    %v1527 = vand.u32 %v478, 4294901760
    %1528 = vmatpush2.msra.mxu0 %v1527
    %1529 = vmatprep.subr.mxu0 0.0
    %v1530 = vand.u32 %v477, 4294901760
    %1531 = vmatpush2.msra.mxu0 %v1530
    %1532 = vmatprep.subr.mxu0 0.0
    %v1533 = vand.u32 %v476, 4294901760
    %1534 = vmatpush2.msra.mxu0 %v1533
    %1535 = vmatprep.subr.mxu0 0.0
    %v1536 = vand.u32 %v475, 4294901760
    %1537 = vmatpush2.msra.mxu0 %v1536
    %1538 = vmatprep.subr.mxu0 0.0
    %v1539 = vand.u32 %v474, 4294901760
    %1540 = vmatpush2.msra.mxu0 %v1539
    %1541 = vmatprep.subr.mxu0 0.0
    %v1542 = vand.u32 %v473, 4294901760
    %1543 = vmatpush2.msra.mxu0 %v1542
    %1544 = vmatprep.subr.mxu0 0.0
    %v1545 = vand.u32 %v472, 4294901760
    %1546 = vmatpush2.msra.mxu0 %v1545
    %1547 = vmatprep.subr.mxu0 0.0
    %v1548 = vand.u32 %v471, 4294901760
    %1549 = vmatpush2.msra.mxu0 %v1548
    %1550 = vmatprep.subr.mxu0 0.0
    %v1551 = vand.u32 %v470, 4294901760
    %1552 = vmatpush2.msra.mxu0 %v1551
    %1553 = vmatprep.subr.mxu0 0.0
    %v1554 = vand.u32 %v469, 4294901760
    %1555 = vmatpush2.msra.mxu0 %v1554
    %1556 = vmatprep.subr.mxu0 0.0
    %v1557 = vand.u32 %v468, 4294901760
    %1558 = vmatpush2.msra.mxu0 %v1557
    %1559 = vmatprep.subr.mxu0 0.0
    %v1560 = vand.u32 %v467, 4294901760
    %1561 = vmatpush2.msra.mxu0 %v1560
    %1562 = vmatprep.subr.mxu0 0.0
    %v1563 = vand.u32 %v466, 4294901760
    %1564 = vmatpush2.msra.mxu0 %v1563
    %1565 = vmatprep.subr.mxu0 0.0
    %v1566 = vand.u32 %v465, 4294901760
    %1567 = vmatpush2.msra.mxu0 %v1566
    %1568 = vmatprep.subr.mxu0 0.0
    %v1569 = vand.u32 %v464, 4294901760
    %1570 = vmatpush2.msra.mxu0 %v1569
    %v1571 = vand.u32 %v369, 4294901760
    %v1572 = vsub.f32 %v369, %v1571
    %v1573 = vand.u32 %v1572, 4294901760
    %1574 = vmatprep.mubr.f32.mxu0 %v1573
    %v1575 = vand.u32 %v368, 4294901760
    %v1576 = vsub.f32 %v368, %v1575
    %v1577 = vand.u32 %v1576, 4294901760
    %1578 = vmatmul.mubr.f32.gmra.mxu0 %v1577
    %v1579 = vpop.f32.mrf.mxu0
    %v1580 = vadd.f32 %v1337, %v1579
    %v1581 = vpop.f32.mrf.mxu0
    %v1582 = vand.u32 %v374, 4294901760
    %v1583 = vsub.f32 %v374, %v1582
    %v1584 = vand.u32 %v1583, 4294901760
    %1585 = vmatprep.mubr.f32.mxu0 %v1584
    %v1586 = vand.u32 %v373, 4294901760
    %v1587 = vsub.f32 %v373, %v1586
    %v1588 = vand.u32 %v1587, 4294901760
    %1589 = vmatmul.mubr.f32.gmra.mxu0 %v1588
    %v1590 = vpop.f32.mrf.mxu0
    %v1591 = vadd.f32 %v1346, %v1590
    %v1592 = vpop.f32.mrf.mxu0
    %v1593 = vand.u32 %v379, 4294901760
    %v1594 = vsub.f32 %v379, %v1593
    %v1595 = vand.u32 %v1594, 4294901760
    %1596 = vmatprep.mubr.f32.mxu0 %v1595
    %v1597 = vand.u32 %v378, 4294901760
    %v1598 = vsub.f32 %v378, %v1597
    %v1599 = vand.u32 %v1598, 4294901760
    %1600 = vmatmul.mubr.f32.gmra.mxu0 %v1599
    %v1601 = vpop.f32.mrf.mxu0
    %v1602 = vadd.f32 %v1355, %v1601
    %v1603 = vpop.f32.mrf.mxu0
    %v1604 = vand.u32 %v384, 4294901760
    %v1605 = vsub.f32 %v384, %v1604
    %v1606 = vand.u32 %v1605, 4294901760
    %1607 = vmatprep.mubr.f32.mxu0 %v1606
    %v1608 = vand.u32 %v383, 4294901760
    %v1609 = vsub.f32 %v383, %v1608
    %v1610 = vand.u32 %v1609, 4294901760
    %1611 = vmatmul.mubr.f32.gmra.mxu0 %v1610
    %v1612 = vpop.f32.mrf.mxu0
    %v1613 = vadd.f32 %v1364, %v1612
    %v1614 = vpop.f32.mrf.mxu0
    %v1615 = vand.u32 %v389, 4294901760
    %v1616 = vsub.f32 %v389, %v1615
    %v1617 = vand.u32 %v1616, 4294901760
    %1618 = vmatprep.mubr.f32.mxu0 %v1617
    %v1619 = vand.u32 %v388, 4294901760
    %v1620 = vsub.f32 %v388, %v1619
    %v1621 = vand.u32 %v1620, 4294901760
    %1622 = vmatmul.mubr.f32.gmra.mxu0 %v1621
    %v1623 = vpop.f32.mrf.mxu0
    %v1624 = vadd.f32 %v1373, %v1623
    %v1625 = vpop.f32.mrf.mxu0
    %v1626 = vand.u32 %v394, 4294901760
    %v1627 = vsub.f32 %v394, %v1626
    %v1628 = vand.u32 %v1627, 4294901760
    %1629 = vmatprep.mubr.f32.mxu0 %v1628
    %v1630 = vand.u32 %v393, 4294901760
    %v1631 = vsub.f32 %v393, %v1630
    %v1632 = vand.u32 %v1631, 4294901760
    %1633 = vmatmul.mubr.f32.gmra.mxu0 %v1632
    %v1634 = vpop.f32.mrf.mxu0
    %v1635 = vadd.f32 %v1382, %v1634
    %v1636 = vpop.f32.mrf.mxu0
    %v1637 = vand.u32 %v399, 4294901760
    %v1638 = vsub.f32 %v399, %v1637
    %v1639 = vand.u32 %v1638, 4294901760
    %1640 = vmatprep.mubr.f32.mxu0 %v1639
    %v1641 = vand.u32 %v398, 4294901760
    %v1642 = vsub.f32 %v398, %v1641
    %v1643 = vand.u32 %v1642, 4294901760
    %1644 = vmatmul.mubr.f32.gmra.mxu0 %v1643
    %v1645 = vpop.f32.mrf.mxu0
    %v1646 = vadd.f32 %v1391, %v1645
    %v1647 = vpop.f32.mrf.mxu0
    %v1648 = vand.u32 %v404, 4294901760
    %v1649 = vsub.f32 %v404, %v1648
    %v1650 = vand.u32 %v1649, 4294901760
    %1651 = vmatprep.mubr.f32.mxu0 %v1650
    %v1652 = vand.u32 %v403, 4294901760
    %v1653 = vsub.f32 %v403, %v1652
    %v1654 = vand.u32 %v1653, 4294901760
    %1655 = vmatmul.mubr.f32.gmra.mxu0 %v1654
    %v1656 = vpop.f32.mrf.mxu0
    %v1657 = vadd.f32 %v1400, %v1656
    %v1658 = vpop.f32.mrf.mxu0
    %v1659 = vand.u32 %v409, 4294901760
    %v1660 = vsub.f32 %v409, %v1659
    %v1661 = vand.u32 %v1660, 4294901760
    %1662 = vmatprep.mubr.f32.mxu0 %v1661
    %v1663 = vand.u32 %v408, 4294901760
    %v1664 = vsub.f32 %v408, %v1663
    %v1665 = vand.u32 %v1664, 4294901760
    %1666 = vmatmul.mubr.f32.gmra.mxu0 %v1665
    %v1667 = vpop.f32.mrf.mxu0
    %v1668 = vadd.f32 %v1409, %v1667
    %v1669 = vpop.f32.mrf.mxu0
    %v1670 = vand.u32 %v414, 4294901760
    %v1671 = vsub.f32 %v414, %v1670
    %v1672 = vand.u32 %v1671, 4294901760
    %1673 = vmatprep.mubr.f32.mxu0 %v1672
    %v1674 = vand.u32 %v413, 4294901760
    %v1675 = vsub.f32 %v413, %v1674
    %v1676 = vand.u32 %v1675, 4294901760
    %1677 = vmatmul.mubr.f32.gmra.mxu0 %v1676
    %v1678 = vpop.f32.mrf.mxu0
    %v1679 = vadd.f32 %v1418, %v1678
    %v1680 = vpop.f32.mrf.mxu0
    %v1681 = vand.u32 %v419, 4294901760
    %v1682 = vsub.f32 %v419, %v1681
    %v1683 = vand.u32 %v1682, 4294901760
    %1684 = vmatprep.mubr.f32.mxu0 %v1683
    %v1685 = vand.u32 %v418, 4294901760
    %v1686 = vsub.f32 %v418, %v1685
    %v1687 = vand.u32 %v1686, 4294901760
    %1688 = vmatmul.mubr.f32.gmra.mxu0 %v1687
    %v1689 = vpop.f32.mrf.mxu0
    %v1690 = vadd.f32 %v1427, %v1689
    %v1691 = vpop.f32.mrf.mxu0
    %v1692 = vand.u32 %v424, 4294901760
    %v1693 = vsub.f32 %v424, %v1692
    %v1694 = vand.u32 %v1693, 4294901760
    %1695 = vmatprep.mubr.f32.mxu0 %v1694
    %v1696 = vand.u32 %v423, 4294901760
    %v1697 = vsub.f32 %v423, %v1696
    %v1698 = vand.u32 %v1697, 4294901760
    %1699 = vmatmul.mubr.f32.gmra.mxu0 %v1698
    %v1700 = vpop.f32.mrf.mxu0
    %v1701 = vadd.f32 %v1436, %v1700
    %v1702 = vpop.f32.mrf.mxu0
    %v1703 = vand.u32 %v429, 4294901760
    %v1704 = vsub.f32 %v429, %v1703
    %v1705 = vand.u32 %v1704, 4294901760
    %1706 = vmatprep.mubr.f32.mxu0 %v1705
    %v1707 = vand.u32 %v428, 4294901760
    %v1708 = vsub.f32 %v428, %v1707
    %v1709 = vand.u32 %v1708, 4294901760
    %1710 = vmatmul.mubr.f32.gmra.mxu0 %v1709
    %v1711 = vpop.f32.mrf.mxu0
    %v1712 = vadd.f32 %v1445, %v1711
    %v1713 = vpop.f32.mrf.mxu0
    %v1714 = vand.u32 %v434, 4294901760
    %v1715 = vsub.f32 %v434, %v1714
    %v1716 = vand.u32 %v1715, 4294901760
    %1717 = vmatprep.mubr.f32.mxu0 %v1716
    %v1718 = vand.u32 %v433, 4294901760
    %v1719 = vsub.f32 %v433, %v1718
    %v1720 = vand.u32 %v1719, 4294901760
    %1721 = vmatmul.mubr.f32.gmra.mxu0 %v1720
    %v1722 = vpop.f32.mrf.mxu0
    %v1723 = vadd.f32 %v1454, %v1722
    %v1724 = vpop.f32.mrf.mxu0
    %v1725 = vand.u32 %v439, 4294901760
    %v1726 = vsub.f32 %v439, %v1725
    %v1727 = vand.u32 %v1726, 4294901760
    %1728 = vmatprep.mubr.f32.mxu0 %v1727
    %v1729 = vand.u32 %v438, 4294901760
    %v1730 = vsub.f32 %v438, %v1729
    %v1731 = vand.u32 %v1730, 4294901760
    %1732 = vmatmul.mubr.f32.gmra.mxu0 %v1731
    %v1733 = vpop.f32.mrf.mxu0
    %v1734 = vadd.f32 %v1463, %v1733
    %v1735 = vpop.f32.mrf.mxu0
    %v1736 = vand.u32 %v444, 4294901760
    %v1737 = vsub.f32 %v444, %v1736
    %v1738 = vand.u32 %v1737, 4294901760
    %1739 = vmatprep.mubr.f32.mxu0 %v1738
    %v1740 = vand.u32 %v443, 4294901760
    %v1741 = vsub.f32 %v443, %v1740
    %v1742 = vand.u32 %v1741, 4294901760
    %1743 = vmatmul.mubr.f32.gmra.mxu0 %v1742
    %v1744 = vpop.f32.mrf.mxu0
    %v1745 = vadd.f32 %v1472, %v1744
    %v1746 = vpop.f32.mrf.mxu0
    %1747 = vdwg.mxu0
    %1748 = vmatprep.subr.mxu0 0.0
    %v1749 = vand.u32 %v463, 4294901760
    %v1750 = vsub.f32 %v463, %v1749
    %v1751 = vand.u32 %v1750, 4294901760
    %1752 = vmatpush1.msra.mxu0 %v1751
    %1753 = vmatprep.subr.mxu0 0.0
    %v1754 = vand.u32 %v462, 4294901760
    %v1755 = vsub.f32 %v462, %v1754
    %v1756 = vand.u32 %v1755, 4294901760
    %1757 = vmatpush1.msra.mxu0 %v1756
    %1758 = vmatprep.subr.mxu0 0.0
    %v1759 = vand.u32 %v461, 4294901760
    %v1760 = vsub.f32 %v461, %v1759
    %v1761 = vand.u32 %v1760, 4294901760
    %1762 = vmatpush1.msra.mxu0 %v1761
    %1763 = vmatprep.subr.mxu0 0.0
    %v1764 = vand.u32 %v460, 4294901760
    %v1765 = vsub.f32 %v460, %v1764
    %v1766 = vand.u32 %v1765, 4294901760
    %1767 = vmatpush1.msra.mxu0 %v1766
    %1768 = vmatprep.subr.mxu0 0.0
    %v1769 = vand.u32 %v459, 4294901760
    %v1770 = vsub.f32 %v459, %v1769
    %v1771 = vand.u32 %v1770, 4294901760
    %1772 = vmatpush1.msra.mxu0 %v1771
    %1773 = vmatprep.subr.mxu0 0.0
    %v1774 = vand.u32 %v458, 4294901760
    %v1775 = vsub.f32 %v458, %v1774
    %v1776 = vand.u32 %v1775, 4294901760
    %1777 = vmatpush1.msra.mxu0 %v1776
    %1778 = vmatprep.subr.mxu0 0.0
    %v1779 = vand.u32 %v457, 4294901760
    %v1780 = vsub.f32 %v457, %v1779
    %v1781 = vand.u32 %v1780, 4294901760
    %1782 = vmatpush1.msra.mxu0 %v1781
    %1783 = vmatprep.subr.mxu0 0.0
    %v1784 = vand.u32 %v456, 4294901760
    %v1785 = vsub.f32 %v456, %v1784
    %v1786 = vand.u32 %v1785, 4294901760
    %1787 = vmatpush1.msra.mxu0 %v1786
    %1788 = vmatprep.subr.mxu0 0.0
    %v1789 = vand.u32 %v455, 4294901760
    %v1790 = vsub.f32 %v455, %v1789
    %v1791 = vand.u32 %v1790, 4294901760
    %1792 = vmatpush1.msra.mxu0 %v1791
    %1793 = vmatprep.subr.mxu0 0.0
    %v1794 = vand.u32 %v454, 4294901760
    %v1795 = vsub.f32 %v454, %v1794
    %v1796 = vand.u32 %v1795, 4294901760
    %1797 = vmatpush1.msra.mxu0 %v1796
    %1798 = vmatprep.subr.mxu0 0.0
    %v1799 = vand.u32 %v453, 4294901760
    %v1800 = vsub.f32 %v453, %v1799
    %v1801 = vand.u32 %v1800, 4294901760
    %1802 = vmatpush1.msra.mxu0 %v1801
    %1803 = vmatprep.subr.mxu0 0.0
    %v1804 = vand.u32 %v452, 4294901760
    %v1805 = vsub.f32 %v452, %v1804
    %v1806 = vand.u32 %v1805, 4294901760
    %1807 = vmatpush1.msra.mxu0 %v1806
    %1808 = vmatprep.subr.mxu0 0.0
    %v1809 = vand.u32 %v451, 4294901760
    %v1810 = vsub.f32 %v451, %v1809
    %v1811 = vand.u32 %v1810, 4294901760
    %1812 = vmatpush1.msra.mxu0 %v1811
    %1813 = vmatprep.subr.mxu0 0.0
    %v1814 = vand.u32 %v450, 4294901760
    %v1815 = vsub.f32 %v450, %v1814
    %v1816 = vand.u32 %v1815, 4294901760
    %1817 = vmatpush1.msra.mxu0 %v1816
    %1818 = vmatprep.subr.mxu0 0.0
    %v1819 = vand.u32 %v449, 4294901760
    %v1820 = vsub.f32 %v449, %v1819
    %v1821 = vand.u32 %v1820, 4294901760
    %1822 = vmatpush1.msra.mxu0 %v1821
    %1823 = vmatprep.subr.mxu0 0.0
    %v1824 = vand.u32 %v448, 4294901760
    %v1825 = vsub.f32 %v448, %v1824
    %v1826 = vand.u32 %v1825, 4294901760
    %1827 = vmatpush1.msra.mxu0 %v1826
    %1828 = vmatprep.subr.mxu0 0.0
    %v1829 = vand.u32 %v479, 4294901760
    %v1830 = vsub.f32 %v479, %v1829
    %v1831 = vand.u32 %v1830, 4294901760
    %1832 = vmatpush2.msra.mxu0 %v1831
    %1833 = vmatprep.subr.mxu0 0.0
    %v1834 = vand.u32 %v478, 4294901760
    %v1835 = vsub.f32 %v478, %v1834
    %v1836 = vand.u32 %v1835, 4294901760
    %1837 = vmatpush2.msra.mxu0 %v1836
    %1838 = vmatprep.subr.mxu0 0.0
    %v1839 = vand.u32 %v477, 4294901760
    %v1840 = vsub.f32 %v477, %v1839
    %v1841 = vand.u32 %v1840, 4294901760
    %1842 = vmatpush2.msra.mxu0 %v1841
    %1843 = vmatprep.subr.mxu0 0.0
    %v1844 = vand.u32 %v476, 4294901760
    %v1845 = vsub.f32 %v476, %v1844
    %v1846 = vand.u32 %v1845, 4294901760
    %1847 = vmatpush2.msra.mxu0 %v1846
    %1848 = vmatprep.subr.mxu0 0.0
    %v1849 = vand.u32 %v475, 4294901760
    %v1850 = vsub.f32 %v475, %v1849
    %v1851 = vand.u32 %v1850, 4294901760
    %1852 = vmatpush2.msra.mxu0 %v1851
    %1853 = vmatprep.subr.mxu0 0.0
    %v1854 = vand.u32 %v474, 4294901760
    %v1855 = vsub.f32 %v474, %v1854
    %v1856 = vand.u32 %v1855, 4294901760
    %1857 = vmatpush2.msra.mxu0 %v1856
    %1858 = vmatprep.subr.mxu0 0.0
    %v1859 = vand.u32 %v473, 4294901760
    %v1860 = vsub.f32 %v473, %v1859
    %v1861 = vand.u32 %v1860, 4294901760
    %1862 = vmatpush2.msra.mxu0 %v1861
    %1863 = vmatprep.subr.mxu0 0.0
    %v1864 = vand.u32 %v472, 4294901760
    %v1865 = vsub.f32 %v472, %v1864
    %v1866 = vand.u32 %v1865, 4294901760
    %1867 = vmatpush2.msra.mxu0 %v1866
    %1868 = vmatprep.subr.mxu0 0.0
    %v1869 = vand.u32 %v471, 4294901760
    %v1870 = vsub.f32 %v471, %v1869
    %v1871 = vand.u32 %v1870, 4294901760
    %1872 = vmatpush2.msra.mxu0 %v1871
    %1873 = vmatprep.subr.mxu0 0.0
    %v1874 = vand.u32 %v470, 4294901760
    %v1875 = vsub.f32 %v470, %v1874
    %v1876 = vand.u32 %v1875, 4294901760
    %1877 = vmatpush2.msra.mxu0 %v1876
    %1878 = vmatprep.subr.mxu0 0.0
    %v1879 = vand.u32 %v469, 4294901760
    %v1880 = vsub.f32 %v469, %v1879
    %v1881 = vand.u32 %v1880, 4294901760
    %1882 = vmatpush2.msra.mxu0 %v1881
    %1883 = vmatprep.subr.mxu0 0.0
    %v1884 = vand.u32 %v468, 4294901760
    %v1885 = vsub.f32 %v468, %v1884
    %v1886 = vand.u32 %v1885, 4294901760
    %1887 = vmatpush2.msra.mxu0 %v1886
    %1888 = vmatprep.subr.mxu0 0.0
    %v1889 = vand.u32 %v467, 4294901760
    %v1890 = vsub.f32 %v467, %v1889
    %v1891 = vand.u32 %v1890, 4294901760
    %1892 = vmatpush2.msra.mxu0 %v1891
    %1893 = vmatprep.subr.mxu0 0.0
    %v1894 = vand.u32 %v466, 4294901760
    %v1895 = vsub.f32 %v466, %v1894
    %v1896 = vand.u32 %v1895, 4294901760
    %1897 = vmatpush2.msra.mxu0 %v1896
    %1898 = vmatprep.subr.mxu0 0.0
    %v1899 = vand.u32 %v465, 4294901760
    %v1900 = vsub.f32 %v465, %v1899
    %v1901 = vand.u32 %v1900, 4294901760
    %1902 = vmatpush2.msra.mxu0 %v1901
    %1903 = vmatprep.subr.mxu0 0.0
    %v1904 = vand.u32 %v464, 4294901760
    %v1905 = vsub.f32 %v464, %v1904
    %v1906 = vand.u32 %v1905, 4294901760
    %1907 = vmatpush2.msra.mxu0 %v1906
    %v1908 = vand.u32 %v369, 4294901760
    %1909 = vmatprep.mubr.f32.mxu0 %v1908
    %v1910 = vand.u32 %v368, 4294901760
    %1911 = vmatmul.mubr.f32.gmra.mxu0 %v1910
    %v1912 = vpop.f32.mrf.mxu0
    %v1913 = vadd.f32 %v1580, %v1912
    %v1914 = vpop.f32.mrf.mxu0
    %v1915 = vand.u32 %v374, 4294901760
    %1916 = vmatprep.mubr.f32.mxu0 %v1915
    %v1917 = vand.u32 %v373, 4294901760
    %1918 = vmatmul.mubr.f32.gmra.mxu0 %v1917
    %v1919 = vpop.f32.mrf.mxu0
    %v1920 = vadd.f32 %v1591, %v1919
    %v1921 = vpop.f32.mrf.mxu0
    %v1922 = vand.u32 %v379, 4294901760
    %1923 = vmatprep.mubr.f32.mxu0 %v1922
    %v1924 = vand.u32 %v378, 4294901760
    %1925 = vmatmul.mubr.f32.gmra.mxu0 %v1924
    %v1926 = vpop.f32.mrf.mxu0
    %v1927 = vadd.f32 %v1602, %v1926
    %v1928 = vpop.f32.mrf.mxu0
    %v1929 = vand.u32 %v384, 4294901760
    %1930 = vmatprep.mubr.f32.mxu0 %v1929
    %v1931 = vand.u32 %v383, 4294901760
    %1932 = vmatmul.mubr.f32.gmra.mxu0 %v1931
    %v1933 = vpop.f32.mrf.mxu0
    %v1934 = vadd.f32 %v1613, %v1933
    %v1935 = vpop.f32.mrf.mxu0
    %v1936 = vand.u32 %v389, 4294901760
    %1937 = vmatprep.mubr.f32.mxu0 %v1936
    %v1938 = vand.u32 %v388, 4294901760
    %1939 = vmatmul.mubr.f32.gmra.mxu0 %v1938
    %v1940 = vpop.f32.mrf.mxu0
    %v1941 = vadd.f32 %v1624, %v1940
    %v1942 = vpop.f32.mrf.mxu0
    %v1943 = vand.u32 %v394, 4294901760
    %1944 = vmatprep.mubr.f32.mxu0 %v1943
    %v1945 = vand.u32 %v393, 4294901760
    %1946 = vmatmul.mubr.f32.gmra.mxu0 %v1945
    %v1947 = vpop.f32.mrf.mxu0
    %v1948 = vadd.f32 %v1635, %v1947
    %v1949 = vpop.f32.mrf.mxu0
    %v1950 = vand.u32 %v399, 4294901760
    %1951 = vmatprep.mubr.f32.mxu0 %v1950
    %v1952 = vand.u32 %v398, 4294901760
    %1953 = vmatmul.mubr.f32.gmra.mxu0 %v1952
    %v1954 = vpop.f32.mrf.mxu0
    %v1955 = vadd.f32 %v1646, %v1954
    %v1956 = vpop.f32.mrf.mxu0
    %v1957 = vand.u32 %v404, 4294901760
    %1958 = vmatprep.mubr.f32.mxu0 %v1957
    %v1959 = vand.u32 %v403, 4294901760
    %1960 = vmatmul.mubr.f32.gmra.mxu0 %v1959
    %v1961 = vpop.f32.mrf.mxu0
    %v1962 = vadd.f32 %v1657, %v1961
    %v1963 = vpop.f32.mrf.mxu0
    %v1964 = vand.u32 %v409, 4294901760
    %1965 = vmatprep.mubr.f32.mxu0 %v1964
    %v1966 = vand.u32 %v408, 4294901760
    %1967 = vmatmul.mubr.f32.gmra.mxu0 %v1966
    %v1968 = vpop.f32.mrf.mxu0
    %v1969 = vadd.f32 %v1668, %v1968
    %v1970 = vpop.f32.mrf.mxu0
    %v1971 = vand.u32 %v414, 4294901760
    %1972 = vmatprep.mubr.f32.mxu0 %v1971
    %v1973 = vand.u32 %v413, 4294901760
    %1974 = vmatmul.mubr.f32.gmra.mxu0 %v1973
    %v1975 = vpop.f32.mrf.mxu0
    %v1976 = vadd.f32 %v1679, %v1975
    %v1977 = vpop.f32.mrf.mxu0
    %v1978 = vand.u32 %v419, 4294901760
    %1979 = vmatprep.mubr.f32.mxu0 %v1978
    %v1980 = vand.u32 %v418, 4294901760
    %1981 = vmatmul.mubr.f32.gmra.mxu0 %v1980
    %v1982 = vpop.f32.mrf.mxu0
    %v1983 = vadd.f32 %v1690, %v1982
    %v1984 = vpop.f32.mrf.mxu0
    %v1985 = vand.u32 %v424, 4294901760
    %1986 = vmatprep.mubr.f32.mxu0 %v1985
    %v1987 = vand.u32 %v423, 4294901760
    %1988 = vmatmul.mubr.f32.gmra.mxu0 %v1987
    %v1989 = vpop.f32.mrf.mxu0
    %v1990 = vadd.f32 %v1701, %v1989
    %v1991 = vpop.f32.mrf.mxu0
    %v1992 = vand.u32 %v429, 4294901760
    %1993 = vmatprep.mubr.f32.mxu0 %v1992
    %v1994 = vand.u32 %v428, 4294901760
    %1995 = vmatmul.mubr.f32.gmra.mxu0 %v1994
    %v1996 = vpop.f32.mrf.mxu0
    %v1997 = vadd.f32 %v1712, %v1996
    %v1998 = vpop.f32.mrf.mxu0
    %v1999 = vand.u32 %v434, 4294901760
    %2000 = vmatprep.mubr.f32.mxu0 %v1999
    %v2001 = vand.u32 %v433, 4294901760
    %2002 = vmatmul.mubr.f32.gmra.mxu0 %v2001
    %v2003 = vpop.f32.mrf.mxu0
    %v2004 = vadd.f32 %v1723, %v2003
    %v2005 = vpop.f32.mrf.mxu0
    %v2006 = vand.u32 %v439, 4294901760
    %2007 = vmatprep.mubr.f32.mxu0 %v2006
    %v2008 = vand.u32 %v438, 4294901760
    %2009 = vmatmul.mubr.f32.gmra.mxu0 %v2008
    %v2010 = vpop.f32.mrf.mxu0
    %v2011 = vadd.f32 %v1734, %v2010
    %v2012 = vpop.f32.mrf.mxu0
    %v2013 = vand.u32 %v444, 4294901760
    %2014 = vmatprep.mubr.f32.mxu0 %v2013
    %v2015 = vand.u32 %v443, 4294901760
    %2016 = vmatmul.mubr.f32.gmra.mxu0 %v2015
    %v2017 = vpop.f32.mrf.mxu0
    %v2018 = vadd.f32 %v1745, %v2017
    %v2019 = vpop.f32.mrf.mxu0
    %2020 = vdwg.mxu0
    %2021 = vmatprep.subr.mxu0 0.0
    %v2022 = vand.u32 %v463, 4294901760
    %2023 = vmatpush1.msra.mxu0 %v2022
    %2024 = vmatprep.subr.mxu0 0.0
    %v2025 = vand.u32 %v462, 4294901760
    %2026 = vmatpush1.msra.mxu0 %v2025
    %2027 = vmatprep.subr.mxu0 0.0
    %v2028 = vand.u32 %v461, 4294901760
    %2029 = vmatpush1.msra.mxu0 %v2028
    %2030 = vmatprep.subr.mxu0 0.0
    %v2031 = vand.u32 %v460, 4294901760
    %2032 = vmatpush1.msra.mxu0 %v2031
    %2033 = vmatprep.subr.mxu0 0.0
    %v2034 = vand.u32 %v459, 4294901760
    %2035 = vmatpush1.msra.mxu0 %v2034
    %2036 = vmatprep.subr.mxu0 0.0
    %v2037 = vand.u32 %v458, 4294901760
    %2038 = vmatpush1.msra.mxu0 %v2037
    %2039 = vmatprep.subr.mxu0 0.0
    %v2040 = vand.u32 %v457, 4294901760
    %2041 = vmatpush1.msra.mxu0 %v2040
    %2042 = vmatprep.subr.mxu0 0.0
    %v2043 = vand.u32 %v456, 4294901760
    %2044 = vmatpush1.msra.mxu0 %v2043
    %2045 = vmatprep.subr.mxu0 0.0
    %v2046 = vand.u32 %v455, 4294901760
    %2047 = vmatpush1.msra.mxu0 %v2046
    %2048 = vmatprep.subr.mxu0 0.0
    %v2049 = vand.u32 %v454, 4294901760
    %2050 = vmatpush1.msra.mxu0 %v2049
    %2051 = vmatprep.subr.mxu0 0.0
    %v2052 = vand.u32 %v453, 4294901760
    %2053 = vmatpush1.msra.mxu0 %v2052
    %2054 = vmatprep.subr.mxu0 0.0
    %v2055 = vand.u32 %v452, 4294901760
    %2056 = vmatpush1.msra.mxu0 %v2055
    %2057 = vmatprep.subr.mxu0 0.0
    %v2058 = vand.u32 %v451, 4294901760
    %2059 = vmatpush1.msra.mxu0 %v2058
    %2060 = vmatprep.subr.mxu0 0.0
    %v2061 = vand.u32 %v450, 4294901760
    %2062 = vmatpush1.msra.mxu0 %v2061
    %2063 = vmatprep.subr.mxu0 0.0
    %v2064 = vand.u32 %v449, 4294901760
    %2065 = vmatpush1.msra.mxu0 %v2064
    %2066 = vmatprep.subr.mxu0 0.0
    %v2067 = vand.u32 %v448, 4294901760
    %2068 = vmatpush1.msra.mxu0 %v2067
    %2069 = vmatprep.subr.mxu0 0.0
    %v2070 = vand.u32 %v479, 4294901760
    %2071 = vmatpush2.msra.mxu0 %v2070
    %2072 = vmatprep.subr.mxu0 0.0
    %v2073 = vand.u32 %v478, 4294901760
    %2074 = vmatpush2.msra.mxu0 %v2073
    %2075 = vmatprep.subr.mxu0 0.0
    %v2076 = vand.u32 %v477, 4294901760
    %2077 = vmatpush2.msra.mxu0 %v2076
    %2078 = vmatprep.subr.mxu0 0.0
    %v2079 = vand.u32 %v476, 4294901760
    %2080 = vmatpush2.msra.mxu0 %v2079
    %2081 = vmatprep.subr.mxu0 0.0
    %v2082 = vand.u32 %v475, 4294901760
    %2083 = vmatpush2.msra.mxu0 %v2082
    %2084 = vmatprep.subr.mxu0 0.0
    %v2085 = vand.u32 %v474, 4294901760
    %2086 = vmatpush2.msra.mxu0 %v2085
    %2087 = vmatprep.subr.mxu0 0.0
    %v2088 = vand.u32 %v473, 4294901760
    %2089 = vmatpush2.msra.mxu0 %v2088
    %2090 = vmatprep.subr.mxu0 0.0
    %v2091 = vand.u32 %v472, 4294901760
    %2092 = vmatpush2.msra.mxu0 %v2091
    %2093 = vmatprep.subr.mxu0 0.0
    %v2094 = vand.u32 %v471, 4294901760
    %2095 = vmatpush2.msra.mxu0 %v2094
    %2096 = vmatprep.subr.mxu0 0.0
    %v2097 = vand.u32 %v470, 4294901760
    %2098 = vmatpush2.msra.mxu0 %v2097
    %2099 = vmatprep.subr.mxu0 0.0
    %v2100 = vand.u32 %v469, 4294901760
    %2101 = vmatpush2.msra.mxu0 %v2100
    %2102 = vmatprep.subr.mxu0 0.0
    %v2103 = vand.u32 %v468, 4294901760
    %2104 = vmatpush2.msra.mxu0 %v2103
    %2105 = vmatprep.subr.mxu0 0.0
    %v2106 = vand.u32 %v467, 4294901760
    %2107 = vmatpush2.msra.mxu0 %v2106
    %2108 = vmatprep.subr.mxu0 0.0
    %v2109 = vand.u32 %v466, 4294901760
    %2110 = vmatpush2.msra.mxu0 %v2109
    %2111 = vmatprep.subr.mxu0 0.0
    %v2112 = vand.u32 %v465, 4294901760
    %2113 = vmatpush2.msra.mxu0 %v2112
    %2114 = vmatprep.subr.mxu0 0.0
    %v2115 = vand.u32 %v464, 4294901760
    %2116 = vmatpush2.msra.mxu0 %v2115
    %v2117 = vand.u32 %v369, 4294901760
    %2118 = vmatprep.mubr.f32.mxu0 %v2117
    %v2119 = vand.u32 %v368, 4294901760
    %2120 = vmatmul.mubr.f32.gmra.mxu0 %v2119
    %v2121 = vpop.f32.mrf.mxu0
    %v2122 = vadd.f32 %v1913, %v2121
    %v2123 = vpop.f32.mrf.mxu0
    %v2124 = vand.u32 %v374, 4294901760
    %2125 = vmatprep.mubr.f32.mxu0 %v2124
    %v2126 = vand.u32 %v373, 4294901760
    %2127 = vmatmul.mubr.f32.gmra.mxu0 %v2126
    %v2128 = vpop.f32.mrf.mxu0
    %v2129 = vadd.f32 %v1920, %v2128
    %v2130 = vpop.f32.mrf.mxu0
    %v2131 = vand.u32 %v379, 4294901760
    %2132 = vmatprep.mubr.f32.mxu0 %v2131
    %v2133 = vand.u32 %v378, 4294901760
    %2134 = vmatmul.mubr.f32.gmra.mxu0 %v2133
    %v2135 = vpop.f32.mrf.mxu0
    %v2136 = vadd.f32 %v1927, %v2135
    %v2137 = vpop.f32.mrf.mxu0
    %v2138 = vand.u32 %v384, 4294901760
    %2139 = vmatprep.mubr.f32.mxu0 %v2138
    %v2140 = vand.u32 %v383, 4294901760
    %2141 = vmatmul.mubr.f32.gmra.mxu0 %v2140
    %v2142 = vpop.f32.mrf.mxu0
    %v2143 = vadd.f32 %v1934, %v2142
    %v2144 = vpop.f32.mrf.mxu0
    %v2145 = vand.u32 %v389, 4294901760
    %2146 = vmatprep.mubr.f32.mxu0 %v2145
    %v2147 = vand.u32 %v388, 4294901760
    %2148 = vmatmul.mubr.f32.gmra.mxu0 %v2147
    %v2149 = vpop.f32.mrf.mxu0
    %v2150 = vadd.f32 %v1941, %v2149
    %v2151 = vpop.f32.mrf.mxu0
    %v2152 = vand.u32 %v394, 4294901760
    %2153 = vmatprep.mubr.f32.mxu0 %v2152
    %v2154 = vand.u32 %v393, 4294901760
    %2155 = vmatmul.mubr.f32.gmra.mxu0 %v2154
    %v2156 = vpop.f32.mrf.mxu0
    %v2157 = vadd.f32 %v1948, %v2156
    %v2158 = vpop.f32.mrf.mxu0
    %v2159 = vand.u32 %v399, 4294901760
    %2160 = vmatprep.mubr.f32.mxu0 %v2159
    %v2161 = vand.u32 %v398, 4294901760
    %2162 = vmatmul.mubr.f32.gmra.mxu0 %v2161
    %v2163 = vpop.f32.mrf.mxu0
    %v2164 = vadd.f32 %v1955, %v2163
    %v2165 = vpop.f32.mrf.mxu0
    %v2166 = vand.u32 %v404, 4294901760
    %2167 = vmatprep.mubr.f32.mxu0 %v2166
    %v2168 = vand.u32 %v403, 4294901760
    %2169 = vmatmul.mubr.f32.gmra.mxu0 %v2168
    %v2170 = vpop.f32.mrf.mxu0
    %v2171 = vadd.f32 %v1962, %v2170
    %v2172 = vpop.f32.mrf.mxu0
    %v2173 = vand.u32 %v409, 4294901760
    %2174 = vmatprep.mubr.f32.mxu0 %v2173
    %v2175 = vand.u32 %v408, 4294901760
    %2176 = vmatmul.mubr.f32.gmra.mxu0 %v2175
    %v2177 = vpop.f32.mrf.mxu0
    %v2178 = vadd.f32 %v1969, %v2177
    %v2179 = vpop.f32.mrf.mxu0
    %v2180 = vand.u32 %v414, 4294901760
    %2181 = vmatprep.mubr.f32.mxu0 %v2180
    %v2182 = vand.u32 %v413, 4294901760
    %2183 = vmatmul.mubr.f32.gmra.mxu0 %v2182
    %v2184 = vpop.f32.mrf.mxu0
    %v2185 = vadd.f32 %v1976, %v2184
    %v2186 = vpop.f32.mrf.mxu0
    %v2187 = vand.u32 %v419, 4294901760
    %2188 = vmatprep.mubr.f32.mxu0 %v2187
    %v2189 = vand.u32 %v418, 4294901760
    %2190 = vmatmul.mubr.f32.gmra.mxu0 %v2189
    %v2191 = vpop.f32.mrf.mxu0
    %v2192 = vadd.f32 %v1983, %v2191
    %v2193 = vpop.f32.mrf.mxu0
    %v2194 = vand.u32 %v424, 4294901760
    %2195 = vmatprep.mubr.f32.mxu0 %v2194
    %v2196 = vand.u32 %v423, 4294901760
    %2197 = vmatmul.mubr.f32.gmra.mxu0 %v2196
    %v2198 = vpop.f32.mrf.mxu0
    %v2199 = vadd.f32 %v1990, %v2198
    %v2200 = vpop.f32.mrf.mxu0
    %v2201 = vand.u32 %v429, 4294901760
    %2202 = vmatprep.mubr.f32.mxu0 %v2201
    %v2203 = vand.u32 %v428, 4294901760
    %2204 = vmatmul.mubr.f32.gmra.mxu0 %v2203
    %v2205 = vpop.f32.mrf.mxu0
    %v2206 = vadd.f32 %v1997, %v2205
    %v2207 = vpop.f32.mrf.mxu0
    %v2208 = vand.u32 %v434, 4294901760
    %2209 = vmatprep.mubr.f32.mxu0 %v2208
    %v2210 = vand.u32 %v433, 4294901760
    %2211 = vmatmul.mubr.f32.gmra.mxu0 %v2210
    %v2212 = vpop.f32.mrf.mxu0
    %v2213 = vadd.f32 %v2004, %v2212
    %v2214 = vpop.f32.mrf.mxu0
    %v2215 = vand.u32 %v439, 4294901760
    %2216 = vmatprep.mubr.f32.mxu0 %v2215
    %v2217 = vand.u32 %v438, 4294901760
    %2218 = vmatmul.mubr.f32.gmra.mxu0 %v2217
    %v2219 = vpop.f32.mrf.mxu0
    %v2220 = vadd.f32 %v2011, %v2219
    %v2221 = vpop.f32.mrf.mxu0
    %v2222 = vand.u32 %v444, 4294901760
    %2223 = vmatprep.mubr.f32.mxu0 %v2222
    %v2224 = vand.u32 %v443, 4294901760
    %2225 = vmatmul.mubr.f32.gmra.mxu0 %v2224
    %v2226 = vpop.f32.mrf.mxu0
    %v2227 = vadd.f32 %v2018, %v2226
    %v2228 = vpop.f32.mrf.mxu0
    %2229 = vdwg.mxu0
    %2230 = vmatprep.subr.mxu0 0.0
    %v2231 = vand.u32 %v495, 4294901760
    %2232 = vmatpush1.msra.mxu0 %v2231
    %2233 = vmatprep.subr.mxu0 0.0
    %v2234 = vand.u32 %v494, 4294901760
    %2235 = vmatpush1.msra.mxu0 %v2234
    %2236 = vmatprep.subr.mxu0 0.0
    %v2237 = vand.u32 %v493, 4294901760
    %2238 = vmatpush1.msra.mxu0 %v2237
    %2239 = vmatprep.subr.mxu0 0.0
    %v2240 = vand.u32 %v492, 4294901760
    %2241 = vmatpush1.msra.mxu0 %v2240
    %2242 = vmatprep.subr.mxu0 0.0
    %v2243 = vand.u32 %v491, 4294901760
    %2244 = vmatpush1.msra.mxu0 %v2243
    %2245 = vmatprep.subr.mxu0 0.0
    %v2246 = vand.u32 %v490, 4294901760
    %2247 = vmatpush1.msra.mxu0 %v2246
    %2248 = vmatprep.subr.mxu0 0.0
    %v2249 = vand.u32 %v489, 4294901760
    %2250 = vmatpush1.msra.mxu0 %v2249
    %2251 = vmatprep.subr.mxu0 0.0
    %v2252 = vand.u32 %v488, 4294901760
    %2253 = vmatpush1.msra.mxu0 %v2252
    %2254 = vmatprep.subr.mxu0 0.0
    %v2255 = vand.u32 %v487, 4294901760
    %2256 = vmatpush1.msra.mxu0 %v2255
    %2257 = vmatprep.subr.mxu0 0.0
    %v2258 = vand.u32 %v486, 4294901760
    %2259 = vmatpush1.msra.mxu0 %v2258
    %2260 = vmatprep.subr.mxu0 0.0
    %v2261 = vand.u32 %v485, 4294901760
    %2262 = vmatpush1.msra.mxu0 %v2261
    %2263 = vmatprep.subr.mxu0 0.0
    %v2264 = vand.u32 %v484, 4294901760
    %2265 = vmatpush1.msra.mxu0 %v2264
    %2266 = vmatprep.subr.mxu0 0.0
    %v2267 = vand.u32 %v483, 4294901760
    %2268 = vmatpush1.msra.mxu0 %v2267
    %2269 = vmatprep.subr.mxu0 0.0
    %v2270 = vand.u32 %v482, 4294901760
    %2271 = vmatpush1.msra.mxu0 %v2270
    %2272 = vmatprep.subr.mxu0 0.0
    %v2273 = vand.u32 %v481, 4294901760
    %2274 = vmatpush1.msra.mxu0 %v2273
    %2275 = vmatprep.subr.mxu0 0.0
    %v2276 = vand.u32 %v480, 4294901760
    %2277 = vmatpush1.msra.mxu0 %v2276
    %2278 = vmatprep.subr.mxu0 0.0
    %v2279 = vand.u32 %v511, 4294901760
    %2280 = vmatpush2.msra.mxu0 %v2279
    %2281 = vmatprep.subr.mxu0 0.0
    %v2282 = vand.u32 %v510, 4294901760
    %2283 = vmatpush2.msra.mxu0 %v2282
    %2284 = vmatprep.subr.mxu0 0.0
    %v2285 = vand.u32 %v509, 4294901760
    %2286 = vmatpush2.msra.mxu0 %v2285
    %2287 = vmatprep.subr.mxu0 0.0
    %v2288 = vand.u32 %v508, 4294901760
    %2289 = vmatpush2.msra.mxu0 %v2288
    %2290 = vmatprep.subr.mxu0 0.0
    %v2291 = vand.u32 %v507, 4294901760
    %2292 = vmatpush2.msra.mxu0 %v2291
    %2293 = vmatprep.subr.mxu0 0.0
    %v2294 = vand.u32 %v506, 4294901760
    %2295 = vmatpush2.msra.mxu0 %v2294
    %2296 = vmatprep.subr.mxu0 0.0
    %v2297 = vand.u32 %v505, 4294901760
    %2298 = vmatpush2.msra.mxu0 %v2297
    %2299 = vmatprep.subr.mxu0 0.0
    %v2300 = vand.u32 %v504, 4294901760
    %2301 = vmatpush2.msra.mxu0 %v2300
    %2302 = vmatprep.subr.mxu0 0.0
    %v2303 = vand.u32 %v503, 4294901760
    %2304 = vmatpush2.msra.mxu0 %v2303
    %2305 = vmatprep.subr.mxu0 0.0
    %v2306 = vand.u32 %v502, 4294901760
    %2307 = vmatpush2.msra.mxu0 %v2306
    %2308 = vmatprep.subr.mxu0 0.0
    %v2309 = vand.u32 %v501, 4294901760
    %2310 = vmatpush2.msra.mxu0 %v2309
    %2311 = vmatprep.subr.mxu0 0.0
    %v2312 = vand.u32 %v500, 4294901760
    %2313 = vmatpush2.msra.mxu0 %v2312
    %2314 = vmatprep.subr.mxu0 0.0
    %v2315 = vand.u32 %v499, 4294901760
    %2316 = vmatpush2.msra.mxu0 %v2315
    %2317 = vmatprep.subr.mxu0 0.0
    %v2318 = vand.u32 %v498, 4294901760
    %2319 = vmatpush2.msra.mxu0 %v2318
    %2320 = vmatprep.subr.mxu0 0.0
    %v2321 = vand.u32 %v497, 4294901760
    %2322 = vmatpush2.msra.mxu0 %v2321
    %2323 = vmatprep.subr.mxu0 0.0
    %v2324 = vand.u32 %v496, 4294901760
    %2325 = vmatpush2.msra.mxu0 %v2324
    %v2326 = vand.u32 %v371, 4294901760
    %v2327 = vsub.f32 %v371, %v2326
    %v2328 = vand.u32 %v2327, 4294901760
    %v2329 = vsub.f32 %v2327, %v2328
    %v2330 = vand.u32 %v2329, 4294901760
    %2331 = vmatprep.mubr.f32.mxu0 %v2330
    %v2332 = vand.u32 %v370, 4294901760
    %v2333 = vsub.f32 %v370, %v2332
    %v2334 = vand.u32 %v2333, 4294901760
    %v2335 = vsub.f32 %v2333, %v2334
    %v2336 = vand.u32 %v2335, 4294901760
    %2337 = vmatmul.mubr.f32.gmra.mxu0 %v2336
    %v2338 = vpop.f32.mrf.mxu0
    %v2339 = vadd.f32 %v2122, %v2338
    %v2340 = vpop.f32.mrf.mxu0
    %v2341 = vand.u32 %v376, 4294901760
    %v2342 = vsub.f32 %v376, %v2341
    %v2343 = vand.u32 %v2342, 4294901760
    %v2344 = vsub.f32 %v2342, %v2343
    %v2345 = vand.u32 %v2344, 4294901760
    %2346 = vmatprep.mubr.f32.mxu0 %v2345
    %v2347 = vand.u32 %v375, 4294901760
    %v2348 = vsub.f32 %v375, %v2347
    %v2349 = vand.u32 %v2348, 4294901760
    %v2350 = vsub.f32 %v2348, %v2349
    %v2351 = vand.u32 %v2350, 4294901760
    %2352 = vmatmul.mubr.f32.gmra.mxu0 %v2351
    %v2353 = vpop.f32.mrf.mxu0
    %v2354 = vadd.f32 %v2129, %v2353
    %v2355 = vpop.f32.mrf.mxu0
    %v2356 = vand.u32 %v381, 4294901760
    %v2357 = vsub.f32 %v381, %v2356
    %v2358 = vand.u32 %v2357, 4294901760
    %v2359 = vsub.f32 %v2357, %v2358
    %v2360 = vand.u32 %v2359, 4294901760
    %2361 = vmatprep.mubr.f32.mxu0 %v2360
    %v2362 = vand.u32 %v380, 4294901760
    %v2363 = vsub.f32 %v380, %v2362
    %v2364 = vand.u32 %v2363, 4294901760
    %v2365 = vsub.f32 %v2363, %v2364
    %v2366 = vand.u32 %v2365, 4294901760
    %2367 = vmatmul.mubr.f32.gmra.mxu0 %v2366
    %v2368 = vpop.f32.mrf.mxu0
    %v2369 = vadd.f32 %v2136, %v2368
    %v2370 = vpop.f32.mrf.mxu0
    %v2371 = vand.u32 %v386, 4294901760
    %v2372 = vsub.f32 %v386, %v2371
    %v2373 = vand.u32 %v2372, 4294901760
    %v2374 = vsub.f32 %v2372, %v2373
    %v2375 = vand.u32 %v2374, 4294901760
    %2376 = vmatprep.mubr.f32.mxu0 %v2375
    %v2377 = vand.u32 %v385, 4294901760
    %v2378 = vsub.f32 %v385, %v2377
    %v2379 = vand.u32 %v2378, 4294901760
    %v2380 = vsub.f32 %v2378, %v2379
    %v2381 = vand.u32 %v2380, 4294901760
    %2382 = vmatmul.mubr.f32.gmra.mxu0 %v2381
    %v2383 = vpop.f32.mrf.mxu0
    %v2384 = vadd.f32 %v2143, %v2383
    %v2385 = vpop.f32.mrf.mxu0
    %v2386 = vand.u32 %v391, 4294901760
    %v2387 = vsub.f32 %v391, %v2386
    %v2388 = vand.u32 %v2387, 4294901760
    %v2389 = vsub.f32 %v2387, %v2388
    %v2390 = vand.u32 %v2389, 4294901760
    %2391 = vmatprep.mubr.f32.mxu0 %v2390
    %v2392 = vand.u32 %v390, 4294901760
    %v2393 = vsub.f32 %v390, %v2392
    %v2394 = vand.u32 %v2393, 4294901760
    %v2395 = vsub.f32 %v2393, %v2394
    %v2396 = vand.u32 %v2395, 4294901760
    %2397 = vmatmul.mubr.f32.gmra.mxu0 %v2396
    %v2398 = vpop.f32.mrf.mxu0
    %v2399 = vadd.f32 %v2150, %v2398
    %v2400 = vpop.f32.mrf.mxu0
    %v2401 = vand.u32 %v396, 4294901760
    %v2402 = vsub.f32 %v396, %v2401
    %v2403 = vand.u32 %v2402, 4294901760
    %v2404 = vsub.f32 %v2402, %v2403
    %v2405 = vand.u32 %v2404, 4294901760
    %2406 = vmatprep.mubr.f32.mxu0 %v2405
    %v2407 = vand.u32 %v395, 4294901760
    %v2408 = vsub.f32 %v395, %v2407
    %v2409 = vand.u32 %v2408, 4294901760
    %v2410 = vsub.f32 %v2408, %v2409
    %v2411 = vand.u32 %v2410, 4294901760
    %2412 = vmatmul.mubr.f32.gmra.mxu0 %v2411
    %v2413 = vpop.f32.mrf.mxu0
    %v2414 = vadd.f32 %v2157, %v2413
    %v2415 = vpop.f32.mrf.mxu0
    %v2416 = vand.u32 %v401, 4294901760
    %v2417 = vsub.f32 %v401, %v2416
    %v2418 = vand.u32 %v2417, 4294901760
    %v2419 = vsub.f32 %v2417, %v2418
    %v2420 = vand.u32 %v2419, 4294901760
    %2421 = vmatprep.mubr.f32.mxu0 %v2420
    %v2422 = vand.u32 %v400, 4294901760
    %v2423 = vsub.f32 %v400, %v2422
    %v2424 = vand.u32 %v2423, 4294901760
    %v2425 = vsub.f32 %v2423, %v2424
    %v2426 = vand.u32 %v2425, 4294901760
    %2427 = vmatmul.mubr.f32.gmra.mxu0 %v2426
    %v2428 = vpop.f32.mrf.mxu0
    %v2429 = vadd.f32 %v2164, %v2428
    %v2430 = vpop.f32.mrf.mxu0
    %v2431 = vand.u32 %v406, 4294901760
    %v2432 = vsub.f32 %v406, %v2431
    %v2433 = vand.u32 %v2432, 4294901760
    %v2434 = vsub.f32 %v2432, %v2433
    %v2435 = vand.u32 %v2434, 4294901760
    %2436 = vmatprep.mubr.f32.mxu0 %v2435
    %v2437 = vand.u32 %v405, 4294901760
    %v2438 = vsub.f32 %v405, %v2437
    %v2439 = vand.u32 %v2438, 4294901760
    %v2440 = vsub.f32 %v2438, %v2439
    %v2441 = vand.u32 %v2440, 4294901760
    %2442 = vmatmul.mubr.f32.gmra.mxu0 %v2441
    %v2443 = vpop.f32.mrf.mxu0
    %v2444 = vadd.f32 %v2171, %v2443
    %v2445 = vpop.f32.mrf.mxu0
    %v2446 = vand.u32 %v411, 4294901760
    %v2447 = vsub.f32 %v411, %v2446
    %v2448 = vand.u32 %v2447, 4294901760
    %v2449 = vsub.f32 %v2447, %v2448
    %v2450 = vand.u32 %v2449, 4294901760
    %2451 = vmatprep.mubr.f32.mxu0 %v2450
    %v2452 = vand.u32 %v410, 4294901760
    %v2453 = vsub.f32 %v410, %v2452
    %v2454 = vand.u32 %v2453, 4294901760
    %v2455 = vsub.f32 %v2453, %v2454
    %v2456 = vand.u32 %v2455, 4294901760
    %2457 = vmatmul.mubr.f32.gmra.mxu0 %v2456
    %v2458 = vpop.f32.mrf.mxu0
    %v2459 = vadd.f32 %v2178, %v2458
    %v2460 = vpop.f32.mrf.mxu0
    %v2461 = vand.u32 %v416, 4294901760
    %v2462 = vsub.f32 %v416, %v2461
    %v2463 = vand.u32 %v2462, 4294901760
    %v2464 = vsub.f32 %v2462, %v2463
    %v2465 = vand.u32 %v2464, 4294901760
    %2466 = vmatprep.mubr.f32.mxu0 %v2465
    %v2467 = vand.u32 %v415, 4294901760
    %v2468 = vsub.f32 %v415, %v2467
    %v2469 = vand.u32 %v2468, 4294901760
    %v2470 = vsub.f32 %v2468, %v2469
    %v2471 = vand.u32 %v2470, 4294901760
    %2472 = vmatmul.mubr.f32.gmra.mxu0 %v2471
    %v2473 = vpop.f32.mrf.mxu0
    %v2474 = vadd.f32 %v2185, %v2473
    %v2475 = vpop.f32.mrf.mxu0
    %v2476 = vand.u32 %v421, 4294901760
    %v2477 = vsub.f32 %v421, %v2476
    %v2478 = vand.u32 %v2477, 4294901760
    %v2479 = vsub.f32 %v2477, %v2478
    %v2480 = vand.u32 %v2479, 4294901760
    %2481 = vmatprep.mubr.f32.mxu0 %v2480
    %v2482 = vand.u32 %v420, 4294901760
    %v2483 = vsub.f32 %v420, %v2482
    %v2484 = vand.u32 %v2483, 4294901760
    %v2485 = vsub.f32 %v2483, %v2484
    %v2486 = vand.u32 %v2485, 4294901760
    %2487 = vmatmul.mubr.f32.gmra.mxu0 %v2486
    %v2488 = vpop.f32.mrf.mxu0
    %v2489 = vadd.f32 %v2192, %v2488
    %v2490 = vpop.f32.mrf.mxu0
    %v2491 = vand.u32 %v426, 4294901760
    %v2492 = vsub.f32 %v426, %v2491
    %v2493 = vand.u32 %v2492, 4294901760
    %v2494 = vsub.f32 %v2492, %v2493
    %v2495 = vand.u32 %v2494, 4294901760
    %2496 = vmatprep.mubr.f32.mxu0 %v2495
    %v2497 = vand.u32 %v425, 4294901760
    %v2498 = vsub.f32 %v425, %v2497
    %v2499 = vand.u32 %v2498, 4294901760
    %v2500 = vsub.f32 %v2498, %v2499
    %v2501 = vand.u32 %v2500, 4294901760
    %2502 = vmatmul.mubr.f32.gmra.mxu0 %v2501
    %v2503 = vpop.f32.mrf.mxu0
    %v2504 = vadd.f32 %v2199, %v2503
    %v2505 = vpop.f32.mrf.mxu0
    %v2506 = vand.u32 %v431, 4294901760
    %v2507 = vsub.f32 %v431, %v2506
    %v2508 = vand.u32 %v2507, 4294901760
    %v2509 = vsub.f32 %v2507, %v2508
    %v2510 = vand.u32 %v2509, 4294901760
    %2511 = vmatprep.mubr.f32.mxu0 %v2510
    %v2512 = vand.u32 %v430, 4294901760
    %v2513 = vsub.f32 %v430, %v2512
    %v2514 = vand.u32 %v2513, 4294901760
    %v2515 = vsub.f32 %v2513, %v2514
    %v2516 = vand.u32 %v2515, 4294901760
    %2517 = vmatmul.mubr.f32.gmra.mxu0 %v2516
    %v2518 = vpop.f32.mrf.mxu0
    %v2519 = vadd.f32 %v2206, %v2518
    %v2520 = vpop.f32.mrf.mxu0
    %v2521 = vand.u32 %v436, 4294901760
    %v2522 = vsub.f32 %v436, %v2521
    %v2523 = vand.u32 %v2522, 4294901760
    %v2524 = vsub.f32 %v2522, %v2523
    %v2525 = vand.u32 %v2524, 4294901760
    %2526 = vmatprep.mubr.f32.mxu0 %v2525
    %v2527 = vand.u32 %v435, 4294901760
    %v2528 = vsub.f32 %v435, %v2527
    %v2529 = vand.u32 %v2528, 4294901760
    %v2530 = vsub.f32 %v2528, %v2529
    %v2531 = vand.u32 %v2530, 4294901760
    %2532 = vmatmul.mubr.f32.gmra.mxu0 %v2531
    %v2533 = vpop.f32.mrf.mxu0
    %v2534 = vadd.f32 %v2213, %v2533
    %v2535 = vpop.f32.mrf.mxu0
    %v2536 = vand.u32 %v441, 4294901760
    %v2537 = vsub.f32 %v441, %v2536
    %v2538 = vand.u32 %v2537, 4294901760
    %v2539 = vsub.f32 %v2537, %v2538
    %v2540 = vand.u32 %v2539, 4294901760
    %2541 = vmatprep.mubr.f32.mxu0 %v2540
    %v2542 = vand.u32 %v440, 4294901760
    %v2543 = vsub.f32 %v440, %v2542
    %v2544 = vand.u32 %v2543, 4294901760
    %v2545 = vsub.f32 %v2543, %v2544
    %v2546 = vand.u32 %v2545, 4294901760
    %2547 = vmatmul.mubr.f32.gmra.mxu0 %v2546
    %v2548 = vpop.f32.mrf.mxu0
    %v2549 = vadd.f32 %v2220, %v2548
    %v2550 = vpop.f32.mrf.mxu0
    %v2551 = vand.u32 %v446, 4294901760
    %v2552 = vsub.f32 %v446, %v2551
    %v2553 = vand.u32 %v2552, 4294901760
    %v2554 = vsub.f32 %v2552, %v2553
    %v2555 = vand.u32 %v2554, 4294901760
    %2556 = vmatprep.mubr.f32.mxu0 %v2555
    %v2557 = vand.u32 %v445, 4294901760
    %v2558 = vsub.f32 %v445, %v2557
    %v2559 = vand.u32 %v2558, 4294901760
    %v2560 = vsub.f32 %v2558, %v2559
    %v2561 = vand.u32 %v2560, 4294901760
    %2562 = vmatmul.mubr.f32.gmra.mxu0 %v2561
    %v2563 = vpop.f32.mrf.mxu0
    %v2564 = vadd.f32 %v2227, %v2563
    %v2565 = vpop.f32.mrf.mxu0
    %2566 = vdwg.mxu0
    %2567 = vmatprep.subr.mxu0 0.0
    %v2568 = vand.u32 %v495, 4294901760
    %v2569 = vsub.f32 %v495, %v2568
    %v2570 = vand.u32 %v2569, 4294901760
    %v2571 = vsub.f32 %v2569, %v2570
    %v2572 = vand.u32 %v2571, 4294901760
    %2573 = vmatpush1.msra.mxu0 %v2572
    %2574 = vmatprep.subr.mxu0 0.0
    %v2575 = vand.u32 %v494, 4294901760
    %v2576 = vsub.f32 %v494, %v2575
    %v2577 = vand.u32 %v2576, 4294901760
    %v2578 = vsub.f32 %v2576, %v2577
    %v2579 = vand.u32 %v2578, 4294901760
    %2580 = vmatpush1.msra.mxu0 %v2579
    %2581 = vmatprep.subr.mxu0 0.0
    %v2582 = vand.u32 %v493, 4294901760
    %v2583 = vsub.f32 %v493, %v2582
    %v2584 = vand.u32 %v2583, 4294901760
    %v2585 = vsub.f32 %v2583, %v2584
    %v2586 = vand.u32 %v2585, 4294901760
    %2587 = vmatpush1.msra.mxu0 %v2586
    %2588 = vmatprep.subr.mxu0 0.0
    %v2589 = vand.u32 %v492, 4294901760
    %v2590 = vsub.f32 %v492, %v2589
    %v2591 = vand.u32 %v2590, 4294901760
    %v2592 = vsub.f32 %v2590, %v2591
    %v2593 = vand.u32 %v2592, 4294901760
    %2594 = vmatpush1.msra.mxu0 %v2593
    %2595 = vmatprep.subr.mxu0 0.0
    %v2596 = vand.u32 %v491, 4294901760
    %v2597 = vsub.f32 %v491, %v2596
    %v2598 = vand.u32 %v2597, 4294901760
    %v2599 = vsub.f32 %v2597, %v2598
    %v2600 = vand.u32 %v2599, 4294901760
    %2601 = vmatpush1.msra.mxu0 %v2600
    %2602 = vmatprep.subr.mxu0 0.0
    %v2603 = vand.u32 %v490, 4294901760
    %v2604 = vsub.f32 %v490, %v2603
    %v2605 = vand.u32 %v2604, 4294901760
    %v2606 = vsub.f32 %v2604, %v2605
    %v2607 = vand.u32 %v2606, 4294901760
    %2608 = vmatpush1.msra.mxu0 %v2607
    %2609 = vmatprep.subr.mxu0 0.0
    %v2610 = vand.u32 %v489, 4294901760
    %v2611 = vsub.f32 %v489, %v2610
    %v2612 = vand.u32 %v2611, 4294901760
    %v2613 = vsub.f32 %v2611, %v2612
    %v2614 = vand.u32 %v2613, 4294901760
    %2615 = vmatpush1.msra.mxu0 %v2614
    %2616 = vmatprep.subr.mxu0 0.0
    %v2617 = vand.u32 %v488, 4294901760
    %v2618 = vsub.f32 %v488, %v2617
    %v2619 = vand.u32 %v2618, 4294901760
    %v2620 = vsub.f32 %v2618, %v2619
    %v2621 = vand.u32 %v2620, 4294901760
    %2622 = vmatpush1.msra.mxu0 %v2621
    %2623 = vmatprep.subr.mxu0 0.0
    %v2624 = vand.u32 %v487, 4294901760
    %v2625 = vsub.f32 %v487, %v2624
    %v2626 = vand.u32 %v2625, 4294901760
    %v2627 = vsub.f32 %v2625, %v2626
    %v2628 = vand.u32 %v2627, 4294901760
    %2629 = vmatpush1.msra.mxu0 %v2628
    %2630 = vmatprep.subr.mxu0 0.0
    %v2631 = vand.u32 %v486, 4294901760
    %v2632 = vsub.f32 %v486, %v2631
    %v2633 = vand.u32 %v2632, 4294901760
    %v2634 = vsub.f32 %v2632, %v2633
    %v2635 = vand.u32 %v2634, 4294901760
    %2636 = vmatpush1.msra.mxu0 %v2635
    %2637 = vmatprep.subr.mxu0 0.0
    %v2638 = vand.u32 %v485, 4294901760
    %v2639 = vsub.f32 %v485, %v2638
    %v2640 = vand.u32 %v2639, 4294901760
    %v2641 = vsub.f32 %v2639, %v2640
    %v2642 = vand.u32 %v2641, 4294901760
    %2643 = vmatpush1.msra.mxu0 %v2642
    %2644 = vmatprep.subr.mxu0 0.0
    %v2645 = vand.u32 %v484, 4294901760
    %v2646 = vsub.f32 %v484, %v2645
    %v2647 = vand.u32 %v2646, 4294901760
    %v2648 = vsub.f32 %v2646, %v2647
    %v2649 = vand.u32 %v2648, 4294901760
    %2650 = vmatpush1.msra.mxu0 %v2649
    %2651 = vmatprep.subr.mxu0 0.0
    %v2652 = vand.u32 %v483, 4294901760
    %v2653 = vsub.f32 %v483, %v2652
    %v2654 = vand.u32 %v2653, 4294901760
    %v2655 = vsub.f32 %v2653, %v2654
    %v2656 = vand.u32 %v2655, 4294901760
    %2657 = vmatpush1.msra.mxu0 %v2656
    %2658 = vmatprep.subr.mxu0 0.0
    %v2659 = vand.u32 %v482, 4294901760
    %v2660 = vsub.f32 %v482, %v2659
    %v2661 = vand.u32 %v2660, 4294901760
    %v2662 = vsub.f32 %v2660, %v2661
    %v2663 = vand.u32 %v2662, 4294901760
    %2664 = vmatpush1.msra.mxu0 %v2663
    %2665 = vmatprep.subr.mxu0 0.0
    %v2666 = vand.u32 %v481, 4294901760
    %v2667 = vsub.f32 %v481, %v2666
    %v2668 = vand.u32 %v2667, 4294901760
    %v2669 = vsub.f32 %v2667, %v2668
    %v2670 = vand.u32 %v2669, 4294901760
    %2671 = vmatpush1.msra.mxu0 %v2670
    %2672 = vmatprep.subr.mxu0 0.0
    %v2673 = vand.u32 %v480, 4294901760
    %v2674 = vsub.f32 %v480, %v2673
    %v2675 = vand.u32 %v2674, 4294901760
    %v2676 = vsub.f32 %v2674, %v2675
    %v2677 = vand.u32 %v2676, 4294901760
    %2678 = vmatpush1.msra.mxu0 %v2677
    %2679 = vmatprep.subr.mxu0 0.0
    %v2680 = vand.u32 %v511, 4294901760
    %v2681 = vsub.f32 %v511, %v2680
    %v2682 = vand.u32 %v2681, 4294901760
    %v2683 = vsub.f32 %v2681, %v2682
    %v2684 = vand.u32 %v2683, 4294901760
    %2685 = vmatpush2.msra.mxu0 %v2684
    %2686 = vmatprep.subr.mxu0 0.0
    %v2687 = vand.u32 %v510, 4294901760
    %v2688 = vsub.f32 %v510, %v2687
    %v2689 = vand.u32 %v2688, 4294901760
    %v2690 = vsub.f32 %v2688, %v2689
    %v2691 = vand.u32 %v2690, 4294901760
    %2692 = vmatpush2.msra.mxu0 %v2691
    %2693 = vmatprep.subr.mxu0 0.0
    %v2694 = vand.u32 %v509, 4294901760
    %v2695 = vsub.f32 %v509, %v2694
    %v2696 = vand.u32 %v2695, 4294901760
    %v2697 = vsub.f32 %v2695, %v2696
    %v2698 = vand.u32 %v2697, 4294901760
    %2699 = vmatpush2.msra.mxu0 %v2698
    %2700 = vmatprep.subr.mxu0 0.0
    %v2701 = vand.u32 %v508, 4294901760
    %v2702 = vsub.f32 %v508, %v2701
    %v2703 = vand.u32 %v2702, 4294901760
    %v2704 = vsub.f32 %v2702, %v2703
    %v2705 = vand.u32 %v2704, 4294901760
    %2706 = vmatpush2.msra.mxu0 %v2705
    %2707 = vmatprep.subr.mxu0 0.0
    %v2708 = vand.u32 %v507, 4294901760
    %v2709 = vsub.f32 %v507, %v2708
    %v2710 = vand.u32 %v2709, 4294901760
    %v2711 = vsub.f32 %v2709, %v2710
    %v2712 = vand.u32 %v2711, 4294901760
    %2713 = vmatpush2.msra.mxu0 %v2712
    %2714 = vmatprep.subr.mxu0 0.0
    %v2715 = vand.u32 %v506, 4294901760
    %v2716 = vsub.f32 %v506, %v2715
    %v2717 = vand.u32 %v2716, 4294901760
    %v2718 = vsub.f32 %v2716, %v2717
    %v2719 = vand.u32 %v2718, 4294901760
    %2720 = vmatpush2.msra.mxu0 %v2719
    %2721 = vmatprep.subr.mxu0 0.0
    %v2722 = vand.u32 %v505, 4294901760
    %v2723 = vsub.f32 %v505, %v2722
    %v2724 = vand.u32 %v2723, 4294901760
    %v2725 = vsub.f32 %v2723, %v2724
    %v2726 = vand.u32 %v2725, 4294901760
    %2727 = vmatpush2.msra.mxu0 %v2726
    %2728 = vmatprep.subr.mxu0 0.0
    %v2729 = vand.u32 %v504, 4294901760
    %v2730 = vsub.f32 %v504, %v2729
    %v2731 = vand.u32 %v2730, 4294901760
    %v2732 = vsub.f32 %v2730, %v2731
    %v2733 = vand.u32 %v2732, 4294901760
    %2734 = vmatpush2.msra.mxu0 %v2733
    %2735 = vmatprep.subr.mxu0 0.0
    %v2736 = vand.u32 %v503, 4294901760
    %v2737 = vsub.f32 %v503, %v2736
    %v2738 = vand.u32 %v2737, 4294901760
    %v2739 = vsub.f32 %v2737, %v2738
    %v2740 = vand.u32 %v2739, 4294901760
    %2741 = vmatpush2.msra.mxu0 %v2740
    %2742 = vmatprep.subr.mxu0 0.0
    %v2743 = vand.u32 %v502, 4294901760
    %v2744 = vsub.f32 %v502, %v2743
    %v2745 = vand.u32 %v2744, 4294901760
    %v2746 = vsub.f32 %v2744, %v2745
    %v2747 = vand.u32 %v2746, 4294901760
    %2748 = vmatpush2.msra.mxu0 %v2747
    %2749 = vmatprep.subr.mxu0 0.0
    %v2750 = vand.u32 %v501, 4294901760
    %v2751 = vsub.f32 %v501, %v2750
    %v2752 = vand.u32 %v2751, 4294901760
    %v2753 = vsub.f32 %v2751, %v2752
    %v2754 = vand.u32 %v2753, 4294901760
    %2755 = vmatpush2.msra.mxu0 %v2754
    %2756 = vmatprep.subr.mxu0 0.0
    %v2757 = vand.u32 %v500, 4294901760
    %v2758 = vsub.f32 %v500, %v2757
    %v2759 = vand.u32 %v2758, 4294901760
    %v2760 = vsub.f32 %v2758, %v2759
    %v2761 = vand.u32 %v2760, 4294901760
    %2762 = vmatpush2.msra.mxu0 %v2761
    %2763 = vmatprep.subr.mxu0 0.0
    %v2764 = vand.u32 %v499, 4294901760
    %v2765 = vsub.f32 %v499, %v2764
    %v2766 = vand.u32 %v2765, 4294901760
    %v2767 = vsub.f32 %v2765, %v2766
    %v2768 = vand.u32 %v2767, 4294901760
    %2769 = vmatpush2.msra.mxu0 %v2768
    %2770 = vmatprep.subr.mxu0 0.0
    %v2771 = vand.u32 %v498, 4294901760
    %v2772 = vsub.f32 %v498, %v2771
    %v2773 = vand.u32 %v2772, 4294901760
    %v2774 = vsub.f32 %v2772, %v2773
    %v2775 = vand.u32 %v2774, 4294901760
    %2776 = vmatpush2.msra.mxu0 %v2775
    %2777 = vmatprep.subr.mxu0 0.0
    %v2778 = vand.u32 %v497, 4294901760
    %v2779 = vsub.f32 %v497, %v2778
    %v2780 = vand.u32 %v2779, 4294901760
    %v2781 = vsub.f32 %v2779, %v2780
    %v2782 = vand.u32 %v2781, 4294901760
    %2783 = vmatpush2.msra.mxu0 %v2782
    %2784 = vmatprep.subr.mxu0 0.0
    %v2785 = vand.u32 %v496, 4294901760
    %v2786 = vsub.f32 %v496, %v2785
    %v2787 = vand.u32 %v2786, 4294901760
    %v2788 = vsub.f32 %v2786, %v2787
    %v2789 = vand.u32 %v2788, 4294901760
    %2790 = vmatpush2.msra.mxu0 %v2789
    %v2791 = vand.u32 %v371, 4294901760
    %2792 = vmatprep.mubr.f32.mxu0 %v2791
    %v2793 = vand.u32 %v370, 4294901760
    %2794 = vmatmul.mubr.f32.gmra.mxu0 %v2793
    %v2795 = vpop.f32.mrf.mxu0
    %v2796 = vadd.f32 %v2339, %v2795
    %v2797 = vpop.f32.mrf.mxu0
    %v2798 = vand.u32 %v376, 4294901760
    %2799 = vmatprep.mubr.f32.mxu0 %v2798
    %v2800 = vand.u32 %v375, 4294901760
    %2801 = vmatmul.mubr.f32.gmra.mxu0 %v2800
    %v2802 = vpop.f32.mrf.mxu0
    %v2803 = vadd.f32 %v2354, %v2802
    %v2804 = vpop.f32.mrf.mxu0
    %v2805 = vand.u32 %v381, 4294901760
    %2806 = vmatprep.mubr.f32.mxu0 %v2805
    %v2807 = vand.u32 %v380, 4294901760
    %2808 = vmatmul.mubr.f32.gmra.mxu0 %v2807
    %v2809 = vpop.f32.mrf.mxu0
    %v2810 = vadd.f32 %v2369, %v2809
    %v2811 = vpop.f32.mrf.mxu0
    %v2812 = vand.u32 %v386, 4294901760
    %2813 = vmatprep.mubr.f32.mxu0 %v2812
    %v2814 = vand.u32 %v385, 4294901760
    %2815 = vmatmul.mubr.f32.gmra.mxu0 %v2814
    %v2816 = vpop.f32.mrf.mxu0
    %v2817 = vadd.f32 %v2384, %v2816
    %v2818 = vpop.f32.mrf.mxu0
    %v2819 = vand.u32 %v391, 4294901760
    %2820 = vmatprep.mubr.f32.mxu0 %v2819
    %v2821 = vand.u32 %v390, 4294901760
    %2822 = vmatmul.mubr.f32.gmra.mxu0 %v2821
    %v2823 = vpop.f32.mrf.mxu0
    %v2824 = vadd.f32 %v2399, %v2823
    %v2825 = vpop.f32.mrf.mxu0
    %v2826 = vand.u32 %v396, 4294901760
    %2827 = vmatprep.mubr.f32.mxu0 %v2826
    %v2828 = vand.u32 %v395, 4294901760
    %2829 = vmatmul.mubr.f32.gmra.mxu0 %v2828
    %v2830 = vpop.f32.mrf.mxu0
    %v2831 = vadd.f32 %v2414, %v2830
    %v2832 = vpop.f32.mrf.mxu0
    %v2833 = vand.u32 %v401, 4294901760
    %2834 = vmatprep.mubr.f32.mxu0 %v2833
    %v2835 = vand.u32 %v400, 4294901760
    %2836 = vmatmul.mubr.f32.gmra.mxu0 %v2835
    %v2837 = vpop.f32.mrf.mxu0
    %v2838 = vadd.f32 %v2429, %v2837
    %v2839 = vpop.f32.mrf.mxu0
    %v2840 = vand.u32 %v406, 4294901760
    %2841 = vmatprep.mubr.f32.mxu0 %v2840
    %v2842 = vand.u32 %v405, 4294901760
    %2843 = vmatmul.mubr.f32.gmra.mxu0 %v2842
    %v2844 = vpop.f32.mrf.mxu0
    %v2845 = vadd.f32 %v2444, %v2844
    %v2846 = vpop.f32.mrf.mxu0
    %v2847 = vand.u32 %v411, 4294901760
    %2848 = vmatprep.mubr.f32.mxu0 %v2847
    %v2849 = vand.u32 %v410, 4294901760
    %2850 = vmatmul.mubr.f32.gmra.mxu0 %v2849
    %v2851 = vpop.f32.mrf.mxu0
    %v2852 = vadd.f32 %v2459, %v2851
    %v2853 = vpop.f32.mrf.mxu0
    %v2854 = vand.u32 %v416, 4294901760
    %2855 = vmatprep.mubr.f32.mxu0 %v2854
    %v2856 = vand.u32 %v415, 4294901760
    %2857 = vmatmul.mubr.f32.gmra.mxu0 %v2856
    %v2858 = vpop.f32.mrf.mxu0
    %v2859 = vadd.f32 %v2474, %v2858
    %v2860 = vpop.f32.mrf.mxu0
    %v2861 = vand.u32 %v421, 4294901760
    %2862 = vmatprep.mubr.f32.mxu0 %v2861
    %v2863 = vand.u32 %v420, 4294901760
    %2864 = vmatmul.mubr.f32.gmra.mxu0 %v2863
    %v2865 = vpop.f32.mrf.mxu0
    %v2866 = vadd.f32 %v2489, %v2865
    %v2867 = vpop.f32.mrf.mxu0
    %v2868 = vand.u32 %v426, 4294901760
    %2869 = vmatprep.mubr.f32.mxu0 %v2868
    %v2870 = vand.u32 %v425, 4294901760
    %2871 = vmatmul.mubr.f32.gmra.mxu0 %v2870
    %v2872 = vpop.f32.mrf.mxu0
    %v2873 = vadd.f32 %v2504, %v2872
    %v2874 = vpop.f32.mrf.mxu0
    %v2875 = vand.u32 %v431, 4294901760
    %2876 = vmatprep.mubr.f32.mxu0 %v2875
    %v2877 = vand.u32 %v430, 4294901760
    %2878 = vmatmul.mubr.f32.gmra.mxu0 %v2877
    %v2879 = vpop.f32.mrf.mxu0
    %v2880 = vadd.f32 %v2519, %v2879
    %v2881 = vpop.f32.mrf.mxu0
    %v2882 = vand.u32 %v436, 4294901760
    %2883 = vmatprep.mubr.f32.mxu0 %v2882
    %v2884 = vand.u32 %v435, 4294901760
    %2885 = vmatmul.mubr.f32.gmra.mxu0 %v2884
    %v2886 = vpop.f32.mrf.mxu0
    %v2887 = vadd.f32 %v2534, %v2886
    %v2888 = vpop.f32.mrf.mxu0
    %v2889 = vand.u32 %v441, 4294901760
    %2890 = vmatprep.mubr.f32.mxu0 %v2889
    %v2891 = vand.u32 %v440, 4294901760
    %2892 = vmatmul.mubr.f32.gmra.mxu0 %v2891
    %v2893 = vpop.f32.mrf.mxu0
    %v2894 = vadd.f32 %v2549, %v2893
    %v2895 = vpop.f32.mrf.mxu0
    %v2896 = vand.u32 %v446, 4294901760
    %2897 = vmatprep.mubr.f32.mxu0 %v2896
    %v2898 = vand.u32 %v445, 4294901760
    %2899 = vmatmul.mubr.f32.gmra.mxu0 %v2898
    %v2900 = vpop.f32.mrf.mxu0
    %v2901 = vadd.f32 %v2564, %v2900
    %v2902 = vpop.f32.mrf.mxu0
    %2903 = vdwg.mxu0
    %2904 = vmatprep.subr.mxu0 0.0
    %v2905 = vand.u32 %v495, 4294901760
    %v2906 = vsub.f32 %v495, %v2905
    %2907 = vmatpush1.msra.mxu0 %v2906
    %2908 = vmatprep.subr.mxu0 0.0
    %v2909 = vand.u32 %v494, 4294901760
    %v2910 = vsub.f32 %v494, %v2909
    %2911 = vmatpush1.msra.mxu0 %v2910
    %2912 = vmatprep.subr.mxu0 0.0
    %v2913 = vand.u32 %v493, 4294901760
    %v2914 = vsub.f32 %v493, %v2913
    %2915 = vmatpush1.msra.mxu0 %v2914
    %2916 = vmatprep.subr.mxu0 0.0
    %v2917 = vand.u32 %v492, 4294901760
    %v2918 = vsub.f32 %v492, %v2917
    %2919 = vmatpush1.msra.mxu0 %v2918
    %2920 = vmatprep.subr.mxu0 0.0
    %v2921 = vand.u32 %v491, 4294901760
    %v2922 = vsub.f32 %v491, %v2921
    %2923 = vmatpush1.msra.mxu0 %v2922
    %2924 = vmatprep.subr.mxu0 0.0
    %v2925 = vand.u32 %v490, 4294901760
    %v2926 = vsub.f32 %v490, %v2925
    %2927 = vmatpush1.msra.mxu0 %v2926
    %2928 = vmatprep.subr.mxu0 0.0
    %v2929 = vand.u32 %v489, 4294901760
    %v2930 = vsub.f32 %v489, %v2929
    %2931 = vmatpush1.msra.mxu0 %v2930
    %2932 = vmatprep.subr.mxu0 0.0
    %v2933 = vand.u32 %v488, 4294901760
    %v2934 = vsub.f32 %v488, %v2933
    %2935 = vmatpush1.msra.mxu0 %v2934
    %2936 = vmatprep.subr.mxu0 0.0
    %v2937 = vand.u32 %v487, 4294901760
    %v2938 = vsub.f32 %v487, %v2937
    %2939 = vmatpush1.msra.mxu0 %v2938
    %2940 = vmatprep.subr.mxu0 0.0
    %v2941 = vand.u32 %v486, 4294901760
    %v2942 = vsub.f32 %v486, %v2941
    %2943 = vmatpush1.msra.mxu0 %v2942
    %2944 = vmatprep.subr.mxu0 0.0
    %v2945 = vand.u32 %v485, 4294901760
    %v2946 = vsub.f32 %v485, %v2945
    %2947 = vmatpush1.msra.mxu0 %v2946
    %2948 = vmatprep.subr.mxu0 0.0
    %v2949 = vand.u32 %v484, 4294901760
    %v2950 = vsub.f32 %v484, %v2949
    %2951 = vmatpush1.msra.mxu0 %v2950
    %2952 = vmatprep.subr.mxu0 0.0
    %v2953 = vand.u32 %v483, 4294901760
    %v2954 = vsub.f32 %v483, %v2953
    %2955 = vmatpush1.msra.mxu0 %v2954
    %2956 = vmatprep.subr.mxu0 0.0
    %v2957 = vand.u32 %v482, 4294901760
    %v2958 = vsub.f32 %v482, %v2957
    %2959 = vmatpush1.msra.mxu0 %v2958
    %2960 = vmatprep.subr.mxu0 0.0
    %v2961 = vand.u32 %v481, 4294901760
    %v2962 = vsub.f32 %v481, %v2961
    %2963 = vmatpush1.msra.mxu0 %v2962
    %2964 = vmatprep.subr.mxu0 0.0
    %v2965 = vand.u32 %v480, 4294901760
    %v2966 = vsub.f32 %v480, %v2965
    %2967 = vmatpush1.msra.mxu0 %v2966
    %2968 = vmatprep.subr.mxu0 0.0
    %v2969 = vand.u32 %v511, 4294901760
    %v2970 = vsub.f32 %v511, %v2969
    %2971 = vmatpush2.msra.mxu0 %v2970
    %2972 = vmatprep.subr.mxu0 0.0
    %v2973 = vand.u32 %v510, 4294901760
    %v2974 = vsub.f32 %v510, %v2973
    %2975 = vmatpush2.msra.mxu0 %v2974
    %2976 = vmatprep.subr.mxu0 0.0
    %v2977 = vand.u32 %v509, 4294901760
    %v2978 = vsub.f32 %v509, %v2977
    %2979 = vmatpush2.msra.mxu0 %v2978
    %2980 = vmatprep.subr.mxu0 0.0
    %v2981 = vand.u32 %v508, 4294901760
    %v2982 = vsub.f32 %v508, %v2981
    %2983 = vmatpush2.msra.mxu0 %v2982
    %2984 = vmatprep.subr.mxu0 0.0
    %v2985 = vand.u32 %v507, 4294901760
    %v2986 = vsub.f32 %v507, %v2985
    %2987 = vmatpush2.msra.mxu0 %v2986
    %2988 = vmatprep.subr.mxu0 0.0
    %v2989 = vand.u32 %v506, 4294901760
    %v2990 = vsub.f32 %v506, %v2989
    %2991 = vmatpush2.msra.mxu0 %v2990
    %2992 = vmatprep.subr.mxu0 0.0
    %v2993 = vand.u32 %v505, 4294901760
    %v2994 = vsub.f32 %v505, %v2993
    %2995 = vmatpush2.msra.mxu0 %v2994
    %2996 = vmatprep.subr.mxu0 0.0
    %v2997 = vand.u32 %v504, 4294901760
    %v2998 = vsub.f32 %v504, %v2997
    %2999 = vmatpush2.msra.mxu0 %v2998
    %3000 = vmatprep.subr.mxu0 0.0
    %v3001 = vand.u32 %v503, 4294901760
    %v3002 = vsub.f32 %v503, %v3001
    %3003 = vmatpush2.msra.mxu0 %v3002
    %3004 = vmatprep.subr.mxu0 0.0
    %v3005 = vand.u32 %v502, 4294901760
    %v3006 = vsub.f32 %v502, %v3005
    %3007 = vmatpush2.msra.mxu0 %v3006
    %3008 = vmatprep.subr.mxu0 0.0
    %v3009 = vand.u32 %v501, 4294901760
    %v3010 = vsub.f32 %v501, %v3009
    %3011 = vmatpush2.msra.mxu0 %v3010
    %3012 = vmatprep.subr.mxu0 0.0
    %v3013 = vand.u32 %v500, 4294901760
    %v3014 = vsub.f32 %v500, %v3013
    %3015 = vmatpush2.msra.mxu0 %v3014
    %3016 = vmatprep.subr.mxu0 0.0
    %v3017 = vand.u32 %v499, 4294901760
    %v3018 = vsub.f32 %v499, %v3017
    %3019 = vmatpush2.msra.mxu0 %v3018
    %3020 = vmatprep.subr.mxu0 0.0
    %v3021 = vand.u32 %v498, 4294901760
    %v3022 = vsub.f32 %v498, %v3021
    %3023 = vmatpush2.msra.mxu0 %v3022
    %3024 = vmatprep.subr.mxu0 0.0
    %v3025 = vand.u32 %v497, 4294901760
    %v3026 = vsub.f32 %v497, %v3025
    %3027 = vmatpush2.msra.mxu0 %v3026
    %3028 = vmatprep.subr.mxu0 0.0
    %v3029 = vand.u32 %v496, 4294901760
    %v3030 = vsub.f32 %v496, %v3029
    %3031 = vmatpush2.msra.mxu0 %v3030
    %v3032 = vand.u32 %v371, 4294901760
    %v3033 = vsub.f32 %v371, %v3032
    %3034 = vmatprep.mubr.f32.mxu0 %v3033
    %v3035 = vand.u32 %v370, 4294901760
    %v3036 = vsub.f32 %v370, %v3035
    %3037 = vmatmul.mubr.f32.gmra.mxu0 %v3036
    %v3038 = vpop.f32.mrf.mxu0
    %v3039 = vadd.f32 %v2796, %v3038
    %v3040 = vpop.f32.mrf.mxu0
    %v3041 = vand.u32 %v376, 4294901760
    %v3042 = vsub.f32 %v376, %v3041
    %3043 = vmatprep.mubr.f32.mxu0 %v3042
    %v3044 = vand.u32 %v375, 4294901760
    %v3045 = vsub.f32 %v375, %v3044
    %3046 = vmatmul.mubr.f32.gmra.mxu0 %v3045
    %v3047 = vpop.f32.mrf.mxu0
    %v3048 = vadd.f32 %v2803, %v3047
    %v3049 = vpop.f32.mrf.mxu0
    %v3050 = vand.u32 %v381, 4294901760
    %v3051 = vsub.f32 %v381, %v3050
    %3052 = vmatprep.mubr.f32.mxu0 %v3051
    %v3053 = vand.u32 %v380, 4294901760
    %v3054 = vsub.f32 %v380, %v3053
    %3055 = vmatmul.mubr.f32.gmra.mxu0 %v3054
    %v3056 = vpop.f32.mrf.mxu0
    %v3057 = vadd.f32 %v2810, %v3056
    %v3058 = vpop.f32.mrf.mxu0
    %v3059 = vand.u32 %v386, 4294901760
    %v3060 = vsub.f32 %v386, %v3059
    %3061 = vmatprep.mubr.f32.mxu0 %v3060
    %v3062 = vand.u32 %v385, 4294901760
    %v3063 = vsub.f32 %v385, %v3062
    %3064 = vmatmul.mubr.f32.gmra.mxu0 %v3063
    %v3065 = vpop.f32.mrf.mxu0
    %v3066 = vadd.f32 %v2817, %v3065
    %v3067 = vpop.f32.mrf.mxu0
    %v3068 = vand.u32 %v391, 4294901760
    %v3069 = vsub.f32 %v391, %v3068
    %3070 = vmatprep.mubr.f32.mxu0 %v3069
    %v3071 = vand.u32 %v390, 4294901760
    %v3072 = vsub.f32 %v390, %v3071
    %3073 = vmatmul.mubr.f32.gmra.mxu0 %v3072
    %v3074 = vpop.f32.mrf.mxu0
    %v3075 = vadd.f32 %v2824, %v3074
    %v3076 = vpop.f32.mrf.mxu0
    %v3077 = vand.u32 %v396, 4294901760
    %v3078 = vsub.f32 %v396, %v3077
    %3079 = vmatprep.mubr.f32.mxu0 %v3078
    %v3080 = vand.u32 %v395, 4294901760
    %v3081 = vsub.f32 %v395, %v3080
    %3082 = vmatmul.mubr.f32.gmra.mxu0 %v3081
    %v3083 = vpop.f32.mrf.mxu0
    %v3084 = vadd.f32 %v2831, %v3083
    %v3085 = vpop.f32.mrf.mxu0
    %v3086 = vand.u32 %v401, 4294901760
    %v3087 = vsub.f32 %v401, %v3086
    %3088 = vmatprep.mubr.f32.mxu0 %v3087
    %v3089 = vand.u32 %v400, 4294901760
    %v3090 = vsub.f32 %v400, %v3089
    %3091 = vmatmul.mubr.f32.gmra.mxu0 %v3090
    %v3092 = vpop.f32.mrf.mxu0
    %v3093 = vadd.f32 %v2838, %v3092
    %v3094 = vpop.f32.mrf.mxu0
    %v3095 = vand.u32 %v406, 4294901760
    %v3096 = vsub.f32 %v406, %v3095
    %3097 = vmatprep.mubr.f32.mxu0 %v3096
    %v3098 = vand.u32 %v405, 4294901760
    %v3099 = vsub.f32 %v405, %v3098
    %3100 = vmatmul.mubr.f32.gmra.mxu0 %v3099
    %v3101 = vpop.f32.mrf.mxu0
    %v3102 = vadd.f32 %v2845, %v3101
    %v3103 = vpop.f32.mrf.mxu0
    %v3104 = vand.u32 %v411, 4294901760
    %v3105 = vsub.f32 %v411, %v3104
    %3106 = vmatprep.mubr.f32.mxu0 %v3105
    %v3107 = vand.u32 %v410, 4294901760
    %v3108 = vsub.f32 %v410, %v3107
    %3109 = vmatmul.mubr.f32.gmra.mxu0 %v3108
    %v3110 = vpop.f32.mrf.mxu0
    %v3111 = vadd.f32 %v2852, %v3110
    %v3112 = vpop.f32.mrf.mxu0
    %v3113 = vand.u32 %v416, 4294901760
    %v3114 = vsub.f32 %v416, %v3113
    %3115 = vmatprep.mubr.f32.mxu0 %v3114
    %v3116 = vand.u32 %v415, 4294901760
    %v3117 = vsub.f32 %v415, %v3116
    %3118 = vmatmul.mubr.f32.gmra.mxu0 %v3117
    %v3119 = vpop.f32.mrf.mxu0
    %v3120 = vadd.f32 %v2859, %v3119
    %v3121 = vpop.f32.mrf.mxu0
    %v3122 = vand.u32 %v421, 4294901760
    %v3123 = vsub.f32 %v421, %v3122
    %3124 = vmatprep.mubr.f32.mxu0 %v3123
    %v3125 = vand.u32 %v420, 4294901760
    %v3126 = vsub.f32 %v420, %v3125
    %3127 = vmatmul.mubr.f32.gmra.mxu0 %v3126
    %v3128 = vpop.f32.mrf.mxu0
    %v3129 = vadd.f32 %v2866, %v3128
    %v3130 = vpop.f32.mrf.mxu0
    %v3131 = vand.u32 %v426, 4294901760
    %v3132 = vsub.f32 %v426, %v3131
    %3133 = vmatprep.mubr.f32.mxu0 %v3132
    %v3134 = vand.u32 %v425, 4294901760
    %v3135 = vsub.f32 %v425, %v3134
    %3136 = vmatmul.mubr.f32.gmra.mxu0 %v3135
    %v3137 = vpop.f32.mrf.mxu0
    %v3138 = vadd.f32 %v2873, %v3137
    %v3139 = vpop.f32.mrf.mxu0
    %v3140 = vand.u32 %v431, 4294901760
    %v3141 = vsub.f32 %v431, %v3140
    %3142 = vmatprep.mubr.f32.mxu0 %v3141
    %v3143 = vand.u32 %v430, 4294901760
    %v3144 = vsub.f32 %v430, %v3143
    %3145 = vmatmul.mubr.f32.gmra.mxu0 %v3144
    %v3146 = vpop.f32.mrf.mxu0
    %v3147 = vadd.f32 %v2880, %v3146
    %v3148 = vpop.f32.mrf.mxu0
    %v3149 = vand.u32 %v436, 4294901760
    %v3150 = vsub.f32 %v436, %v3149
    %3151 = vmatprep.mubr.f32.mxu0 %v3150
    %v3152 = vand.u32 %v435, 4294901760
    %v3153 = vsub.f32 %v435, %v3152
    %3154 = vmatmul.mubr.f32.gmra.mxu0 %v3153
    %v3155 = vpop.f32.mrf.mxu0
    %v3156 = vadd.f32 %v2887, %v3155
    %v3157 = vpop.f32.mrf.mxu0
    %v3158 = vand.u32 %v441, 4294901760
    %v3159 = vsub.f32 %v441, %v3158
    %3160 = vmatprep.mubr.f32.mxu0 %v3159
    %v3161 = vand.u32 %v440, 4294901760
    %v3162 = vsub.f32 %v440, %v3161
    %3163 = vmatmul.mubr.f32.gmra.mxu0 %v3162
    %v3164 = vpop.f32.mrf.mxu0
    %v3165 = vadd.f32 %v2894, %v3164
    %v3166 = vpop.f32.mrf.mxu0
    %v3167 = vand.u32 %v446, 4294901760
    %v3168 = vsub.f32 %v446, %v3167
    %3169 = vmatprep.mubr.f32.mxu0 %v3168
    %v3170 = vand.u32 %v445, 4294901760
    %v3171 = vsub.f32 %v445, %v3170
    %3172 = vmatmul.mubr.f32.gmra.mxu0 %v3171
    %v3173 = vpop.f32.mrf.mxu0
    %v3174 = vadd.f32 %v2901, %v3173
    %v3175 = vpop.f32.mrf.mxu0
    %3176 = vdwg.mxu0
    %3177 = vmatprep.subr.mxu0 0.0
    %v3178 = vand.u32 %v495, 4294901760
    %3179 = vmatpush1.msra.mxu0 %v3178
    %3180 = vmatprep.subr.mxu0 0.0
    %v3181 = vand.u32 %v494, 4294901760
    %3182 = vmatpush1.msra.mxu0 %v3181
    %3183 = vmatprep.subr.mxu0 0.0
    %v3184 = vand.u32 %v493, 4294901760
    %3185 = vmatpush1.msra.mxu0 %v3184
    %3186 = vmatprep.subr.mxu0 0.0
    %v3187 = vand.u32 %v492, 4294901760
    %3188 = vmatpush1.msra.mxu0 %v3187
    %3189 = vmatprep.subr.mxu0 0.0
    %v3190 = vand.u32 %v491, 4294901760
    %3191 = vmatpush1.msra.mxu0 %v3190
    %3192 = vmatprep.subr.mxu0 0.0
    %v3193 = vand.u32 %v490, 4294901760
    %3194 = vmatpush1.msra.mxu0 %v3193
    %3195 = vmatprep.subr.mxu0 0.0
    %v3196 = vand.u32 %v489, 4294901760
    %3197 = vmatpush1.msra.mxu0 %v3196
    %3198 = vmatprep.subr.mxu0 0.0
    %v3199 = vand.u32 %v488, 4294901760
    %3200 = vmatpush1.msra.mxu0 %v3199
    %3201 = vmatprep.subr.mxu0 0.0
    %v3202 = vand.u32 %v487, 4294901760
    %3203 = vmatpush1.msra.mxu0 %v3202
    %3204 = vmatprep.subr.mxu0 0.0
    %v3205 = vand.u32 %v486, 4294901760
    %3206 = vmatpush1.msra.mxu0 %v3205
    %3207 = vmatprep.subr.mxu0 0.0
    %v3208 = vand.u32 %v485, 4294901760
    %3209 = vmatpush1.msra.mxu0 %v3208
    %3210 = vmatprep.subr.mxu0 0.0
    %v3211 = vand.u32 %v484, 4294901760
    %3212 = vmatpush1.msra.mxu0 %v3211
    %3213 = vmatprep.subr.mxu0 0.0
    %v3214 = vand.u32 %v483, 4294901760
    %3215 = vmatpush1.msra.mxu0 %v3214
    %3216 = vmatprep.subr.mxu0 0.0
    %v3217 = vand.u32 %v482, 4294901760
    %3218 = vmatpush1.msra.mxu0 %v3217
    %3219 = vmatprep.subr.mxu0 0.0
    %v3220 = vand.u32 %v481, 4294901760
    %3221 = vmatpush1.msra.mxu0 %v3220
    %3222 = vmatprep.subr.mxu0 0.0
    %v3223 = vand.u32 %v480, 4294901760
    %3224 = vmatpush1.msra.mxu0 %v3223
    %3225 = vmatprep.subr.mxu0 0.0
    %v3226 = vand.u32 %v511, 4294901760
    %3227 = vmatpush2.msra.mxu0 %v3226
    %3228 = vmatprep.subr.mxu0 0.0
    %v3229 = vand.u32 %v510, 4294901760
    %3230 = vmatpush2.msra.mxu0 %v3229
    %3231 = vmatprep.subr.mxu0 0.0
    %v3232 = vand.u32 %v509, 4294901760
    %3233 = vmatpush2.msra.mxu0 %v3232
    %3234 = vmatprep.subr.mxu0 0.0
    %v3235 = vand.u32 %v508, 4294901760
    %3236 = vmatpush2.msra.mxu0 %v3235
    %3237 = vmatprep.subr.mxu0 0.0
    %v3238 = vand.u32 %v507, 4294901760
    %3239 = vmatpush2.msra.mxu0 %v3238
    %3240 = vmatprep.subr.mxu0 0.0
    %v3241 = vand.u32 %v506, 4294901760
    %3242 = vmatpush2.msra.mxu0 %v3241
    %3243 = vmatprep.subr.mxu0 0.0
    %v3244 = vand.u32 %v505, 4294901760
    %3245 = vmatpush2.msra.mxu0 %v3244
    %3246 = vmatprep.subr.mxu0 0.0
    %v3247 = vand.u32 %v504, 4294901760
    %3248 = vmatpush2.msra.mxu0 %v3247
    %3249 = vmatprep.subr.mxu0 0.0
    %v3250 = vand.u32 %v503, 4294901760
    %3251 = vmatpush2.msra.mxu0 %v3250
    %3252 = vmatprep.subr.mxu0 0.0
    %v3253 = vand.u32 %v502, 4294901760
    %3254 = vmatpush2.msra.mxu0 %v3253
    %3255 = vmatprep.subr.mxu0 0.0
    %v3256 = vand.u32 %v501, 4294901760
    %3257 = vmatpush2.msra.mxu0 %v3256
    %3258 = vmatprep.subr.mxu0 0.0
    %v3259 = vand.u32 %v500, 4294901760
    %3260 = vmatpush2.msra.mxu0 %v3259
    %3261 = vmatprep.subr.mxu0 0.0
    %v3262 = vand.u32 %v499, 4294901760
    %3263 = vmatpush2.msra.mxu0 %v3262
    %3264 = vmatprep.subr.mxu0 0.0
    %v3265 = vand.u32 %v498, 4294901760
    %3266 = vmatpush2.msra.mxu0 %v3265
    %3267 = vmatprep.subr.mxu0 0.0
    %v3268 = vand.u32 %v497, 4294901760
    %3269 = vmatpush2.msra.mxu0 %v3268
    %3270 = vmatprep.subr.mxu0 0.0
    %v3271 = vand.u32 %v496, 4294901760
    %3272 = vmatpush2.msra.mxu0 %v3271
    %v3273 = vand.u32 %v371, 4294901760
    %v3274 = vsub.f32 %v371, %v3273
    %v3275 = vand.u32 %v3274, 4294901760
    %3276 = vmatprep.mubr.f32.mxu0 %v3275
    %v3277 = vand.u32 %v370, 4294901760
    %v3278 = vsub.f32 %v370, %v3277
    %v3279 = vand.u32 %v3278, 4294901760
    %3280 = vmatmul.mubr.f32.gmra.mxu0 %v3279
    %v3281 = vpop.f32.mrf.mxu0
    %v3282 = vadd.f32 %v3039, %v3281
    %v3283 = vpop.f32.mrf.mxu0
    %v3284 = vand.u32 %v376, 4294901760
    %v3285 = vsub.f32 %v376, %v3284
    %v3286 = vand.u32 %v3285, 4294901760
    %3287 = vmatprep.mubr.f32.mxu0 %v3286
    %v3288 = vand.u32 %v375, 4294901760
    %v3289 = vsub.f32 %v375, %v3288
    %v3290 = vand.u32 %v3289, 4294901760
    %3291 = vmatmul.mubr.f32.gmra.mxu0 %v3290
    %v3292 = vpop.f32.mrf.mxu0
    %v3293 = vadd.f32 %v3048, %v3292
    %v3294 = vpop.f32.mrf.mxu0
    %v3295 = vand.u32 %v381, 4294901760
    %v3296 = vsub.f32 %v381, %v3295
    %v3297 = vand.u32 %v3296, 4294901760
    %3298 = vmatprep.mubr.f32.mxu0 %v3297
    %v3299 = vand.u32 %v380, 4294901760
    %v3300 = vsub.f32 %v380, %v3299
    %v3301 = vand.u32 %v3300, 4294901760
    %3302 = vmatmul.mubr.f32.gmra.mxu0 %v3301
    %v3303 = vpop.f32.mrf.mxu0
    %v3304 = vadd.f32 %v3057, %v3303
    %v3305 = vpop.f32.mrf.mxu0
    %v3306 = vand.u32 %v386, 4294901760
    %v3307 = vsub.f32 %v386, %v3306
    %v3308 = vand.u32 %v3307, 4294901760
    %3309 = vmatprep.mubr.f32.mxu0 %v3308
    %v3310 = vand.u32 %v385, 4294901760
    %v3311 = vsub.f32 %v385, %v3310
    %v3312 = vand.u32 %v3311, 4294901760
    %3313 = vmatmul.mubr.f32.gmra.mxu0 %v3312
    %v3314 = vpop.f32.mrf.mxu0
    %v3315 = vadd.f32 %v3066, %v3314
    %v3316 = vpop.f32.mrf.mxu0
    %v3317 = vand.u32 %v391, 4294901760
    %v3318 = vsub.f32 %v391, %v3317
    %v3319 = vand.u32 %v3318, 4294901760
    %3320 = vmatprep.mubr.f32.mxu0 %v3319
    %v3321 = vand.u32 %v390, 4294901760
    %v3322 = vsub.f32 %v390, %v3321
    %v3323 = vand.u32 %v3322, 4294901760
    %3324 = vmatmul.mubr.f32.gmra.mxu0 %v3323
    %v3325 = vpop.f32.mrf.mxu0
    %v3326 = vadd.f32 %v3075, %v3325
    %v3327 = vpop.f32.mrf.mxu0
    %v3328 = vand.u32 %v396, 4294901760
    %v3329 = vsub.f32 %v396, %v3328
    %v3330 = vand.u32 %v3329, 4294901760
    %3331 = vmatprep.mubr.f32.mxu0 %v3330
    %v3332 = vand.u32 %v395, 4294901760
    %v3333 = vsub.f32 %v395, %v3332
    %v3334 = vand.u32 %v3333, 4294901760
    %3335 = vmatmul.mubr.f32.gmra.mxu0 %v3334
    %v3336 = vpop.f32.mrf.mxu0
    %v3337 = vadd.f32 %v3084, %v3336
    %v3338 = vpop.f32.mrf.mxu0
    %v3339 = vand.u32 %v401, 4294901760
    %v3340 = vsub.f32 %v401, %v3339
    %v3341 = vand.u32 %v3340, 4294901760
    %3342 = vmatprep.mubr.f32.mxu0 %v3341
    %v3343 = vand.u32 %v400, 4294901760
    %v3344 = vsub.f32 %v400, %v3343
    %v3345 = vand.u32 %v3344, 4294901760
    %3346 = vmatmul.mubr.f32.gmra.mxu0 %v3345
    %v3347 = vpop.f32.mrf.mxu0
    %v3348 = vadd.f32 %v3093, %v3347
    %v3349 = vpop.f32.mrf.mxu0
    %v3350 = vand.u32 %v406, 4294901760
    %v3351 = vsub.f32 %v406, %v3350
    %v3352 = vand.u32 %v3351, 4294901760
    %3353 = vmatprep.mubr.f32.mxu0 %v3352
    %v3354 = vand.u32 %v405, 4294901760
    %v3355 = vsub.f32 %v405, %v3354
    %v3356 = vand.u32 %v3355, 4294901760
    %3357 = vmatmul.mubr.f32.gmra.mxu0 %v3356
    %v3358 = vpop.f32.mrf.mxu0
    %v3359 = vadd.f32 %v3102, %v3358
    %v3360 = vpop.f32.mrf.mxu0
    %v3361 = vand.u32 %v411, 4294901760
    %v3362 = vsub.f32 %v411, %v3361
    %v3363 = vand.u32 %v3362, 4294901760
    %3364 = vmatprep.mubr.f32.mxu0 %v3363
    %v3365 = vand.u32 %v410, 4294901760
    %v3366 = vsub.f32 %v410, %v3365
    %v3367 = vand.u32 %v3366, 4294901760
    %3368 = vmatmul.mubr.f32.gmra.mxu0 %v3367
    %v3369 = vpop.f32.mrf.mxu0
    %v3370 = vadd.f32 %v3111, %v3369
    %v3371 = vpop.f32.mrf.mxu0
    %v3372 = vand.u32 %v416, 4294901760
    %v3373 = vsub.f32 %v416, %v3372
    %v3374 = vand.u32 %v3373, 4294901760
    %3375 = vmatprep.mubr.f32.mxu0 %v3374
    %v3376 = vand.u32 %v415, 4294901760
    %v3377 = vsub.f32 %v415, %v3376
    %v3378 = vand.u32 %v3377, 4294901760
    %3379 = vmatmul.mubr.f32.gmra.mxu0 %v3378
    %v3380 = vpop.f32.mrf.mxu0
    %v3381 = vadd.f32 %v3120, %v3380
    %v3382 = vpop.f32.mrf.mxu0
    %v3383 = vand.u32 %v421, 4294901760
    %v3384 = vsub.f32 %v421, %v3383
    %v3385 = vand.u32 %v3384, 4294901760
    %3386 = vmatprep.mubr.f32.mxu0 %v3385
    %v3387 = vand.u32 %v420, 4294901760
    %v3388 = vsub.f32 %v420, %v3387
    %v3389 = vand.u32 %v3388, 4294901760
    %3390 = vmatmul.mubr.f32.gmra.mxu0 %v3389
    %v3391 = vpop.f32.mrf.mxu0
    %v3392 = vadd.f32 %v3129, %v3391
    %v3393 = vpop.f32.mrf.mxu0
    %v3394 = vand.u32 %v426, 4294901760
    %v3395 = vsub.f32 %v426, %v3394
    %v3396 = vand.u32 %v3395, 4294901760
    %3397 = vmatprep.mubr.f32.mxu0 %v3396
    %v3398 = vand.u32 %v425, 4294901760
    %v3399 = vsub.f32 %v425, %v3398
    %v3400 = vand.u32 %v3399, 4294901760
    %3401 = vmatmul.mubr.f32.gmra.mxu0 %v3400
    %v3402 = vpop.f32.mrf.mxu0
    %v3403 = vadd.f32 %v3138, %v3402
    %v3404 = vpop.f32.mrf.mxu0
    %v3405 = vand.u32 %v431, 4294901760
    %v3406 = vsub.f32 %v431, %v3405
    %v3407 = vand.u32 %v3406, 4294901760
    %3408 = vmatprep.mubr.f32.mxu0 %v3407
    %v3409 = vand.u32 %v430, 4294901760
    %v3410 = vsub.f32 %v430, %v3409
    %v3411 = vand.u32 %v3410, 4294901760
    %3412 = vmatmul.mubr.f32.gmra.mxu0 %v3411
    %v3413 = vpop.f32.mrf.mxu0
    %v3414 = vadd.f32 %v3147, %v3413
    %v3415 = vpop.f32.mrf.mxu0
    %v3416 = vand.u32 %v436, 4294901760
    %v3417 = vsub.f32 %v436, %v3416
    %v3418 = vand.u32 %v3417, 4294901760
    %3419 = vmatprep.mubr.f32.mxu0 %v3418
    %v3420 = vand.u32 %v435, 4294901760
    %v3421 = vsub.f32 %v435, %v3420
    %v3422 = vand.u32 %v3421, 4294901760
    %3423 = vmatmul.mubr.f32.gmra.mxu0 %v3422
    %v3424 = vpop.f32.mrf.mxu0
    %v3425 = vadd.f32 %v3156, %v3424
    %v3426 = vpop.f32.mrf.mxu0
    %v3427 = vand.u32 %v441, 4294901760
    %v3428 = vsub.f32 %v441, %v3427
    %v3429 = vand.u32 %v3428, 4294901760
    %3430 = vmatprep.mubr.f32.mxu0 %v3429
    %v3431 = vand.u32 %v440, 4294901760
    %v3432 = vsub.f32 %v440, %v3431
    %v3433 = vand.u32 %v3432, 4294901760
    %3434 = vmatmul.mubr.f32.gmra.mxu0 %v3433
    %v3435 = vpop.f32.mrf.mxu0
    %v3436 = vadd.f32 %v3165, %v3435
    %v3437 = vpop.f32.mrf.mxu0
    %v3438 = vand.u32 %v446, 4294901760
    %v3439 = vsub.f32 %v446, %v3438
    %v3440 = vand.u32 %v3439, 4294901760
    %3441 = vmatprep.mubr.f32.mxu0 %v3440
    %v3442 = vand.u32 %v445, 4294901760
    %v3443 = vsub.f32 %v445, %v3442
    %v3444 = vand.u32 %v3443, 4294901760
    %3445 = vmatmul.mubr.f32.gmra.mxu0 %v3444
    %v3446 = vpop.f32.mrf.mxu0
    %v3447 = vadd.f32 %v3174, %v3446
    %v3448 = vpop.f32.mrf.mxu0
    %3449 = vdwg.mxu0
    %3450 = vmatprep.subr.mxu0 0.0
    %v3451 = vand.u32 %v495, 4294901760
    %v3452 = vsub.f32 %v495, %v3451
    %v3453 = vand.u32 %v3452, 4294901760
    %3454 = vmatpush1.msra.mxu0 %v3453
    %3455 = vmatprep.subr.mxu0 0.0
    %v3456 = vand.u32 %v494, 4294901760
    %v3457 = vsub.f32 %v494, %v3456
    %v3458 = vand.u32 %v3457, 4294901760
    %3459 = vmatpush1.msra.mxu0 %v3458
    %3460 = vmatprep.subr.mxu0 0.0
    %v3461 = vand.u32 %v493, 4294901760
    %v3462 = vsub.f32 %v493, %v3461
    %v3463 = vand.u32 %v3462, 4294901760
    %3464 = vmatpush1.msra.mxu0 %v3463
    %3465 = vmatprep.subr.mxu0 0.0
    %v3466 = vand.u32 %v492, 4294901760
    %v3467 = vsub.f32 %v492, %v3466
    %v3468 = vand.u32 %v3467, 4294901760
    %3469 = vmatpush1.msra.mxu0 %v3468
    %3470 = vmatprep.subr.mxu0 0.0
    %v3471 = vand.u32 %v491, 4294901760
    %v3472 = vsub.f32 %v491, %v3471
    %v3473 = vand.u32 %v3472, 4294901760
    %3474 = vmatpush1.msra.mxu0 %v3473
    %3475 = vmatprep.subr.mxu0 0.0
    %v3476 = vand.u32 %v490, 4294901760
    %v3477 = vsub.f32 %v490, %v3476
    %v3478 = vand.u32 %v3477, 4294901760
    %3479 = vmatpush1.msra.mxu0 %v3478
    %3480 = vmatprep.subr.mxu0 0.0
    %v3481 = vand.u32 %v489, 4294901760
    %v3482 = vsub.f32 %v489, %v3481
    %v3483 = vand.u32 %v3482, 4294901760
    %3484 = vmatpush1.msra.mxu0 %v3483
    %3485 = vmatprep.subr.mxu0 0.0
    %v3486 = vand.u32 %v488, 4294901760
    %v3487 = vsub.f32 %v488, %v3486
    %v3488 = vand.u32 %v3487, 4294901760
    %3489 = vmatpush1.msra.mxu0 %v3488
    %3490 = vmatprep.subr.mxu0 0.0
    %v3491 = vand.u32 %v487, 4294901760
    %v3492 = vsub.f32 %v487, %v3491
    %v3493 = vand.u32 %v3492, 4294901760
    %3494 = vmatpush1.msra.mxu0 %v3493
    %3495 = vmatprep.subr.mxu0 0.0
    %v3496 = vand.u32 %v486, 4294901760
    %v3497 = vsub.f32 %v486, %v3496
    %v3498 = vand.u32 %v3497, 4294901760
    %3499 = vmatpush1.msra.mxu0 %v3498
    %3500 = vmatprep.subr.mxu0 0.0
    %v3501 = vand.u32 %v485, 4294901760
    %v3502 = vsub.f32 %v485, %v3501
    %v3503 = vand.u32 %v3502, 4294901760
    %3504 = vmatpush1.msra.mxu0 %v3503
    %3505 = vmatprep.subr.mxu0 0.0
    %v3506 = vand.u32 %v484, 4294901760
    %v3507 = vsub.f32 %v484, %v3506
    %v3508 = vand.u32 %v3507, 4294901760
    %3509 = vmatpush1.msra.mxu0 %v3508
    %3510 = vmatprep.subr.mxu0 0.0
    %v3511 = vand.u32 %v483, 4294901760
    %v3512 = vsub.f32 %v483, %v3511
    %v3513 = vand.u32 %v3512, 4294901760
    %3514 = vmatpush1.msra.mxu0 %v3513
    %3515 = vmatprep.subr.mxu0 0.0
    %v3516 = vand.u32 %v482, 4294901760
    %v3517 = vsub.f32 %v482, %v3516
    %v3518 = vand.u32 %v3517, 4294901760
    %3519 = vmatpush1.msra.mxu0 %v3518
    %3520 = vmatprep.subr.mxu0 0.0
    %v3521 = vand.u32 %v481, 4294901760
    %v3522 = vsub.f32 %v481, %v3521
    %v3523 = vand.u32 %v3522, 4294901760
    %3524 = vmatpush1.msra.mxu0 %v3523
    %3525 = vmatprep.subr.mxu0 0.0
    %v3526 = vand.u32 %v480, 4294901760
    %v3527 = vsub.f32 %v480, %v3526
    %v3528 = vand.u32 %v3527, 4294901760
    %3529 = vmatpush1.msra.mxu0 %v3528
    %3530 = vmatprep.subr.mxu0 0.0
    %v3531 = vand.u32 %v511, 4294901760
    %v3532 = vsub.f32 %v511, %v3531
    %v3533 = vand.u32 %v3532, 4294901760
    %3534 = vmatpush2.msra.mxu0 %v3533
    %3535 = vmatprep.subr.mxu0 0.0
    %v3536 = vand.u32 %v510, 4294901760
    %v3537 = vsub.f32 %v510, %v3536
    %v3538 = vand.u32 %v3537, 4294901760
    %3539 = vmatpush2.msra.mxu0 %v3538
    %3540 = vmatprep.subr.mxu0 0.0
    %v3541 = vand.u32 %v509, 4294901760
    %v3542 = vsub.f32 %v509, %v3541
    %v3543 = vand.u32 %v3542, 4294901760
    %3544 = vmatpush2.msra.mxu0 %v3543
    %3545 = vmatprep.subr.mxu0 0.0
    %v3546 = vand.u32 %v508, 4294901760
    %v3547 = vsub.f32 %v508, %v3546
    %v3548 = vand.u32 %v3547, 4294901760
    %3549 = vmatpush2.msra.mxu0 %v3548
    %3550 = vmatprep.subr.mxu0 0.0
    %v3551 = vand.u32 %v507, 4294901760
    %v3552 = vsub.f32 %v507, %v3551
    %v3553 = vand.u32 %v3552, 4294901760
    %3554 = vmatpush2.msra.mxu0 %v3553
    %3555 = vmatprep.subr.mxu0 0.0
    %v3556 = vand.u32 %v506, 4294901760
    %v3557 = vsub.f32 %v506, %v3556
    %v3558 = vand.u32 %v3557, 4294901760
    %3559 = vmatpush2.msra.mxu0 %v3558
    %3560 = vmatprep.subr.mxu0 0.0
    %v3561 = vand.u32 %v505, 4294901760
    %v3562 = vsub.f32 %v505, %v3561
    %v3563 = vand.u32 %v3562, 4294901760
    %3564 = vmatpush2.msra.mxu0 %v3563
    %3565 = vmatprep.subr.mxu0 0.0
    %v3566 = vand.u32 %v504, 4294901760
    %v3567 = vsub.f32 %v504, %v3566
    %v3568 = vand.u32 %v3567, 4294901760
    %3569 = vmatpush2.msra.mxu0 %v3568
    %3570 = vmatprep.subr.mxu0 0.0
    %v3571 = vand.u32 %v503, 4294901760
    %v3572 = vsub.f32 %v503, %v3571
    %v3573 = vand.u32 %v3572, 4294901760
    %3574 = vmatpush2.msra.mxu0 %v3573
    %3575 = vmatprep.subr.mxu0 0.0
    %v3576 = vand.u32 %v502, 4294901760
    %v3577 = vsub.f32 %v502, %v3576
    %v3578 = vand.u32 %v3577, 4294901760
    %3579 = vmatpush2.msra.mxu0 %v3578
    %3580 = vmatprep.subr.mxu0 0.0
    %v3581 = vand.u32 %v501, 4294901760
    %v3582 = vsub.f32 %v501, %v3581
    %v3583 = vand.u32 %v3582, 4294901760
    %3584 = vmatpush2.msra.mxu0 %v3583
    %3585 = vmatprep.subr.mxu0 0.0
    %v3586 = vand.u32 %v500, 4294901760
    %v3587 = vsub.f32 %v500, %v3586
    %v3588 = vand.u32 %v3587, 4294901760
    %3589 = vmatpush2.msra.mxu0 %v3588
    %3590 = vmatprep.subr.mxu0 0.0
    %v3591 = vand.u32 %v499, 4294901760
    %v3592 = vsub.f32 %v499, %v3591
    %v3593 = vand.u32 %v3592, 4294901760
    %3594 = vmatpush2.msra.mxu0 %v3593
    %3595 = vmatprep.subr.mxu0 0.0
    %v3596 = vand.u32 %v498, 4294901760
    %v3597 = vsub.f32 %v498, %v3596
    %v3598 = vand.u32 %v3597, 4294901760
    %3599 = vmatpush2.msra.mxu0 %v3598
    %3600 = vmatprep.subr.mxu0 0.0
    %v3601 = vand.u32 %v497, 4294901760
    %v3602 = vsub.f32 %v497, %v3601
    %v3603 = vand.u32 %v3602, 4294901760
    %3604 = vmatpush2.msra.mxu0 %v3603
    %3605 = vmatprep.subr.mxu0 0.0
    %v3606 = vand.u32 %v496, 4294901760
    %v3607 = vsub.f32 %v496, %v3606
    %v3608 = vand.u32 %v3607, 4294901760
    %3609 = vmatpush2.msra.mxu0 %v3608
    %v3610 = vand.u32 %v371, 4294901760
    %3611 = vmatprep.mubr.f32.mxu0 %v3610
    %v3612 = vand.u32 %v370, 4294901760
    %3613 = vmatmul.mubr.f32.gmra.mxu0 %v3612
    %v3614 = vpop.f32.mrf.mxu0
    %v3615 = vadd.f32 %v3282, %v3614
    %v3616 = vpop.f32.mrf.mxu0
    %v3617 = vand.u32 %v376, 4294901760
    %3618 = vmatprep.mubr.f32.mxu0 %v3617
    %v3619 = vand.u32 %v375, 4294901760
    %3620 = vmatmul.mubr.f32.gmra.mxu0 %v3619
    %v3621 = vpop.f32.mrf.mxu0
    %v3622 = vadd.f32 %v3293, %v3621
    %v3623 = vpop.f32.mrf.mxu0
    %v3624 = vand.u32 %v381, 4294901760
    %3625 = vmatprep.mubr.f32.mxu0 %v3624
    %v3626 = vand.u32 %v380, 4294901760
    %3627 = vmatmul.mubr.f32.gmra.mxu0 %v3626
    %v3628 = vpop.f32.mrf.mxu0
    %v3629 = vadd.f32 %v3304, %v3628
    %v3630 = vpop.f32.mrf.mxu0
    %v3631 = vand.u32 %v386, 4294901760
    %3632 = vmatprep.mubr.f32.mxu0 %v3631
    %v3633 = vand.u32 %v385, 4294901760
    %3634 = vmatmul.mubr.f32.gmra.mxu0 %v3633
    %v3635 = vpop.f32.mrf.mxu0
    %v3636 = vadd.f32 %v3315, %v3635
    %v3637 = vpop.f32.mrf.mxu0
    %v3638 = vand.u32 %v391, 4294901760
    %3639 = vmatprep.mubr.f32.mxu0 %v3638
    %v3640 = vand.u32 %v390, 4294901760
    %3641 = vmatmul.mubr.f32.gmra.mxu0 %v3640
    %v3642 = vpop.f32.mrf.mxu0
    %v3643 = vadd.f32 %v3326, %v3642
    %v3644 = vpop.f32.mrf.mxu0
    %v3645 = vand.u32 %v396, 4294901760
    %3646 = vmatprep.mubr.f32.mxu0 %v3645
    %v3647 = vand.u32 %v395, 4294901760
    %3648 = vmatmul.mubr.f32.gmra.mxu0 %v3647
    %v3649 = vpop.f32.mrf.mxu0
    %v3650 = vadd.f32 %v3337, %v3649
    %v3651 = vpop.f32.mrf.mxu0
    %v3652 = vand.u32 %v401, 4294901760
    %3653 = vmatprep.mubr.f32.mxu0 %v3652
    %v3654 = vand.u32 %v400, 4294901760
    %3655 = vmatmul.mubr.f32.gmra.mxu0 %v3654
    %v3656 = vpop.f32.mrf.mxu0
    %v3657 = vadd.f32 %v3348, %v3656
    %v3658 = vpop.f32.mrf.mxu0
    %v3659 = vand.u32 %v406, 4294901760
    %3660 = vmatprep.mubr.f32.mxu0 %v3659
    %v3661 = vand.u32 %v405, 4294901760
    %3662 = vmatmul.mubr.f32.gmra.mxu0 %v3661
    %v3663 = vpop.f32.mrf.mxu0
    %v3664 = vadd.f32 %v3359, %v3663
    %v3665 = vpop.f32.mrf.mxu0
    %v3666 = vand.u32 %v411, 4294901760
    %3667 = vmatprep.mubr.f32.mxu0 %v3666
    %v3668 = vand.u32 %v410, 4294901760
    %3669 = vmatmul.mubr.f32.gmra.mxu0 %v3668
    %v3670 = vpop.f32.mrf.mxu0
    %v3671 = vadd.f32 %v3370, %v3670
    %v3672 = vpop.f32.mrf.mxu0
    %v3673 = vand.u32 %v416, 4294901760
    %3674 = vmatprep.mubr.f32.mxu0 %v3673
    %v3675 = vand.u32 %v415, 4294901760
    %3676 = vmatmul.mubr.f32.gmra.mxu0 %v3675
    %v3677 = vpop.f32.mrf.mxu0
    %v3678 = vadd.f32 %v3381, %v3677
    %v3679 = vpop.f32.mrf.mxu0
    %v3680 = vand.u32 %v421, 4294901760
    %3681 = vmatprep.mubr.f32.mxu0 %v3680
    %v3682 = vand.u32 %v420, 4294901760
    %3683 = vmatmul.mubr.f32.gmra.mxu0 %v3682
    %v3684 = vpop.f32.mrf.mxu0
    %v3685 = vadd.f32 %v3392, %v3684
    %v3686 = vpop.f32.mrf.mxu0
    %v3687 = vand.u32 %v426, 4294901760
    %3688 = vmatprep.mubr.f32.mxu0 %v3687
    %v3689 = vand.u32 %v425, 4294901760
    %3690 = vmatmul.mubr.f32.gmra.mxu0 %v3689
    %v3691 = vpop.f32.mrf.mxu0
    %v3692 = vadd.f32 %v3403, %v3691
    %v3693 = vpop.f32.mrf.mxu0
    %v3694 = vand.u32 %v431, 4294901760
    %3695 = vmatprep.mubr.f32.mxu0 %v3694
    %v3696 = vand.u32 %v430, 4294901760
    %3697 = vmatmul.mubr.f32.gmra.mxu0 %v3696
    %v3698 = vpop.f32.mrf.mxu0
    %v3699 = vadd.f32 %v3414, %v3698
    %v3700 = vpop.f32.mrf.mxu0
    %v3701 = vand.u32 %v436, 4294901760
    %3702 = vmatprep.mubr.f32.mxu0 %v3701
    %v3703 = vand.u32 %v435, 4294901760
    %3704 = vmatmul.mubr.f32.gmra.mxu0 %v3703
    %v3705 = vpop.f32.mrf.mxu0
    %v3706 = vadd.f32 %v3425, %v3705
    %v3707 = vpop.f32.mrf.mxu0
    %v3708 = vand.u32 %v441, 4294901760
    %3709 = vmatprep.mubr.f32.mxu0 %v3708
    %v3710 = vand.u32 %v440, 4294901760
    %3711 = vmatmul.mubr.f32.gmra.mxu0 %v3710
    %v3712 = vpop.f32.mrf.mxu0
    %v3713 = vadd.f32 %v3436, %v3712
    %v3714 = vpop.f32.mrf.mxu0
    %v3715 = vand.u32 %v446, 4294901760
    %3716 = vmatprep.mubr.f32.mxu0 %v3715
    %v3717 = vand.u32 %v445, 4294901760
    %3718 = vmatmul.mubr.f32.gmra.mxu0 %v3717
    %v3719 = vpop.f32.mrf.mxu0
    %v3720 = vadd.f32 %v3447, %v3719
    %v3721 = vpop.f32.mrf.mxu0
    %3722 = vdwg.mxu0
    %3723 = vmatprep.subr.mxu0 0.0
    %v3724 = vand.u32 %v495, 4294901760
    %3725 = vmatpush1.msra.mxu0 %v3724
    %3726 = vmatprep.subr.mxu0 0.0
    %v3727 = vand.u32 %v494, 4294901760
    %3728 = vmatpush1.msra.mxu0 %v3727
    %3729 = vmatprep.subr.mxu0 0.0
    %v3730 = vand.u32 %v493, 4294901760
    %3731 = vmatpush1.msra.mxu0 %v3730
    %3732 = vmatprep.subr.mxu0 0.0
    %v3733 = vand.u32 %v492, 4294901760
    %3734 = vmatpush1.msra.mxu0 %v3733
    %3735 = vmatprep.subr.mxu0 0.0
    %v3736 = vand.u32 %v491, 4294901760
    %3737 = vmatpush1.msra.mxu0 %v3736
    %3738 = vmatprep.subr.mxu0 0.0
    %v3739 = vand.u32 %v490, 4294901760
    %3740 = vmatpush1.msra.mxu0 %v3739
    %3741 = vmatprep.subr.mxu0 0.0
    %v3742 = vand.u32 %v489, 4294901760
    %3743 = vmatpush1.msra.mxu0 %v3742
    %3744 = vmatprep.subr.mxu0 0.0
    %v3745 = vand.u32 %v488, 4294901760
    %3746 = vmatpush1.msra.mxu0 %v3745
    %3747 = vmatprep.subr.mxu0 0.0
    %v3748 = vand.u32 %v487, 4294901760
    %3749 = vmatpush1.msra.mxu0 %v3748
    %3750 = vmatprep.subr.mxu0 0.0
    %v3751 = vand.u32 %v486, 4294901760
    %3752 = vmatpush1.msra.mxu0 %v3751
    %3753 = vmatprep.subr.mxu0 0.0
    %v3754 = vand.u32 %v485, 4294901760
    %3755 = vmatpush1.msra.mxu0 %v3754
    %3756 = vmatprep.subr.mxu0 0.0
    %v3757 = vand.u32 %v484, 4294901760
    %3758 = vmatpush1.msra.mxu0 %v3757
    %3759 = vmatprep.subr.mxu0 0.0
    %v3760 = vand.u32 %v483, 4294901760
    %3761 = vmatpush1.msra.mxu0 %v3760
    %3762 = vmatprep.subr.mxu0 0.0
    %v3763 = vand.u32 %v482, 4294901760
    %3764 = vmatpush1.msra.mxu0 %v3763
    %3765 = vmatprep.subr.mxu0 0.0
    %v3766 = vand.u32 %v481, 4294901760
    %3767 = vmatpush1.msra.mxu0 %v3766
    %3768 = vmatprep.subr.mxu0 0.0
    %v3769 = vand.u32 %v480, 4294901760
    %3770 = vmatpush1.msra.mxu0 %v3769
    %3771 = vmatprep.subr.mxu0 0.0
    %v3772 = vand.u32 %v511, 4294901760
    %3773 = vmatpush2.msra.mxu0 %v3772
    %3774 = vmatprep.subr.mxu0 0.0
    %v3775 = vand.u32 %v510, 4294901760
    %3776 = vmatpush2.msra.mxu0 %v3775
    %3777 = vmatprep.subr.mxu0 0.0
    %v3778 = vand.u32 %v509, 4294901760
    %3779 = vmatpush2.msra.mxu0 %v3778
    %3780 = vmatprep.subr.mxu0 0.0
    %v3781 = vand.u32 %v508, 4294901760
    %3782 = vmatpush2.msra.mxu0 %v3781
    %3783 = vmatprep.subr.mxu0 0.0
    %v3784 = vand.u32 %v507, 4294901760
    %3785 = vmatpush2.msra.mxu0 %v3784
    %3786 = vmatprep.subr.mxu0 0.0
    %v3787 = vand.u32 %v506, 4294901760
    %3788 = vmatpush2.msra.mxu0 %v3787
    %3789 = vmatprep.subr.mxu0 0.0
    %v3790 = vand.u32 %v505, 4294901760
    %3791 = vmatpush2.msra.mxu0 %v3790
    %3792 = vmatprep.subr.mxu0 0.0
    %v3793 = vand.u32 %v504, 4294901760
    %3794 = vmatpush2.msra.mxu0 %v3793
    %3795 = vmatprep.subr.mxu0 0.0
    %v3796 = vand.u32 %v503, 4294901760
    %3797 = vmatpush2.msra.mxu0 %v3796
    %3798 = vmatprep.subr.mxu0 0.0
    %v3799 = vand.u32 %v502, 4294901760
    %3800 = vmatpush2.msra.mxu0 %v3799
    %3801 = vmatprep.subr.mxu0 0.0
    %v3802 = vand.u32 %v501, 4294901760
    %3803 = vmatpush2.msra.mxu0 %v3802
    %3804 = vmatprep.subr.mxu0 0.0
    %v3805 = vand.u32 %v500, 4294901760
    %3806 = vmatpush2.msra.mxu0 %v3805
    %3807 = vmatprep.subr.mxu0 0.0
    %v3808 = vand.u32 %v499, 4294901760
    %3809 = vmatpush2.msra.mxu0 %v3808
    %3810 = vmatprep.subr.mxu0 0.0
    %v3811 = vand.u32 %v498, 4294901760
    %3812 = vmatpush2.msra.mxu0 %v3811
    %3813 = vmatprep.subr.mxu0 0.0
    %v3814 = vand.u32 %v497, 4294901760
    %3815 = vmatpush2.msra.mxu0 %v3814
    %3816 = vmatprep.subr.mxu0 0.0
    %v3817 = vand.u32 %v496, 4294901760
    %3818 = vmatpush2.msra.mxu0 %v3817
    %v3819 = vand.u32 %v371, 4294901760
    %3820 = vmatprep.mubr.f32.mxu0 %v3819
    %v3821 = vand.u32 %v370, 4294901760
    %3822 = vmatmul.mubr.f32.gmra.mxu0 %v3821
    %v3823 = vpop.f32.mrf.mxu0
    %v3824 = vadd.f32 %v3615, %v3823
    %v3825 = vpop.f32.mrf.mxu0
    %v3826 = vand.u32 %v376, 4294901760
    %3827 = vmatprep.mubr.f32.mxu0 %v3826
    %v3828 = vand.u32 %v375, 4294901760
    %3829 = vmatmul.mubr.f32.gmra.mxu0 %v3828
    %v3830 = vpop.f32.mrf.mxu0
    %v3831 = vadd.f32 %v3622, %v3830
    %v3832 = vpop.f32.mrf.mxu0
    %v3833 = vand.u32 %v381, 4294901760
    %3834 = vmatprep.mubr.f32.mxu0 %v3833
    %v3835 = vand.u32 %v380, 4294901760
    %3836 = vmatmul.mubr.f32.gmra.mxu0 %v3835
    %v3837 = vpop.f32.mrf.mxu0
    %v3838 = vadd.f32 %v3629, %v3837
    %v3839 = vpop.f32.mrf.mxu0
    %v3840 = vand.u32 %v386, 4294901760
    %3841 = vmatprep.mubr.f32.mxu0 %v3840
    %v3842 = vand.u32 %v385, 4294901760
    %3843 = vmatmul.mubr.f32.gmra.mxu0 %v3842
    %v3844 = vpop.f32.mrf.mxu0
    %v3845 = vadd.f32 %v3636, %v3844
    %v3846 = vpop.f32.mrf.mxu0
    %v3847 = vand.u32 %v391, 4294901760
    %3848 = vmatprep.mubr.f32.mxu0 %v3847
    %v3849 = vand.u32 %v390, 4294901760
    %3850 = vmatmul.mubr.f32.gmra.mxu0 %v3849
    %v3851 = vpop.f32.mrf.mxu0
    %v3852 = vadd.f32 %v3643, %v3851
    %v3853 = vpop.f32.mrf.mxu0
    %v3854 = vand.u32 %v396, 4294901760
    %3855 = vmatprep.mubr.f32.mxu0 %v3854
    %v3856 = vand.u32 %v395, 4294901760
    %3857 = vmatmul.mubr.f32.gmra.mxu0 %v3856
    %v3858 = vpop.f32.mrf.mxu0
    %v3859 = vadd.f32 %v3650, %v3858
    %v3860 = vpop.f32.mrf.mxu0
    %v3861 = vand.u32 %v401, 4294901760
    %3862 = vmatprep.mubr.f32.mxu0 %v3861
    %v3863 = vand.u32 %v400, 4294901760
    %3864 = vmatmul.mubr.f32.gmra.mxu0 %v3863
    %v3865 = vpop.f32.mrf.mxu0
    %v3866 = vadd.f32 %v3657, %v3865
    %v3867 = vpop.f32.mrf.mxu0
    %v3868 = vand.u32 %v406, 4294901760
    %3869 = vmatprep.mubr.f32.mxu0 %v3868
    %v3870 = vand.u32 %v405, 4294901760
    %3871 = vmatmul.mubr.f32.gmra.mxu0 %v3870
    %v3872 = vpop.f32.mrf.mxu0
    %v3873 = vadd.f32 %v3664, %v3872
    %v3874 = vpop.f32.mrf.mxu0
    %v3875 = vand.u32 %v411, 4294901760
    %3876 = vmatprep.mubr.f32.mxu0 %v3875
    %v3877 = vand.u32 %v410, 4294901760
    %3878 = vmatmul.mubr.f32.gmra.mxu0 %v3877
    %v3879 = vpop.f32.mrf.mxu0
    %v3880 = vadd.f32 %v3671, %v3879
    %v3881 = vpop.f32.mrf.mxu0
    %v3882 = vand.u32 %v416, 4294901760
    %3883 = vmatprep.mubr.f32.mxu0 %v3882
    %v3884 = vand.u32 %v415, 4294901760
    %3885 = vmatmul.mubr.f32.gmra.mxu0 %v3884
    %v3886 = vpop.f32.mrf.mxu0
    %v3887 = vadd.f32 %v3678, %v3886
    %v3888 = vpop.f32.mrf.mxu0
    %v3889 = vand.u32 %v421, 4294901760
    %3890 = vmatprep.mubr.f32.mxu0 %v3889
    %v3891 = vand.u32 %v420, 4294901760
    %3892 = vmatmul.mubr.f32.gmra.mxu0 %v3891
    %v3893 = vpop.f32.mrf.mxu0
    %v3894 = vadd.f32 %v3685, %v3893
    %v3895 = vpop.f32.mrf.mxu0
    %v3896 = vand.u32 %v426, 4294901760
    %3897 = vmatprep.mubr.f32.mxu0 %v3896
    %v3898 = vand.u32 %v425, 4294901760
    %3899 = vmatmul.mubr.f32.gmra.mxu0 %v3898
    %v3900 = vpop.f32.mrf.mxu0
    %v3901 = vadd.f32 %v3692, %v3900
    %v3902 = vpop.f32.mrf.mxu0
    %v3903 = vand.u32 %v431, 4294901760
    %3904 = vmatprep.mubr.f32.mxu0 %v3903
    %v3905 = vand.u32 %v430, 4294901760
    %3906 = vmatmul.mubr.f32.gmra.mxu0 %v3905
    %v3907 = vpop.f32.mrf.mxu0
    %v3908 = vadd.f32 %v3699, %v3907
    %v3909 = vpop.f32.mrf.mxu0
    %v3910 = vand.u32 %v436, 4294901760
    %3911 = vmatprep.mubr.f32.mxu0 %v3910
    %v3912 = vand.u32 %v435, 4294901760
    %3913 = vmatmul.mubr.f32.gmra.mxu0 %v3912
    %v3914 = vpop.f32.mrf.mxu0
    %v3915 = vadd.f32 %v3706, %v3914
    %v3916 = vpop.f32.mrf.mxu0
    %v3917 = vand.u32 %v441, 4294901760
    %3918 = vmatprep.mubr.f32.mxu0 %v3917
    %v3919 = vand.u32 %v440, 4294901760
    %3920 = vmatmul.mubr.f32.gmra.mxu0 %v3919
    %v3921 = vpop.f32.mrf.mxu0
    %v3922 = vadd.f32 %v3713, %v3921
    %v3923 = vpop.f32.mrf.mxu0
    %v3924 = vand.u32 %v446, 4294901760
    %3925 = vmatprep.mubr.f32.mxu0 %v3924
    %v3926 = vand.u32 %v445, 4294901760
    %3927 = vmatmul.mubr.f32.gmra.mxu0 %v3926
    %v3928 = vpop.f32.mrf.mxu0
    %v3929 = vadd.f32 %v3720, %v3928
    %v3930 = vpop.f32.mrf.mxu0
    %3931 = vdwg.mxu0
    %3932 = vmatprep.subr.mxu0 0.0
    %v3933 = vand.u32 %v527, 4294901760
    %3934 = vmatpush1.msra.mxu0 %v3933
    %3935 = vmatprep.subr.mxu0 0.0
    %v3936 = vand.u32 %v526, 4294901760
    %3937 = vmatpush1.msra.mxu0 %v3936
    %3938 = vmatprep.subr.mxu0 0.0
    %v3939 = vand.u32 %v525, 4294901760
    %3940 = vmatpush1.msra.mxu0 %v3939
    %3941 = vmatprep.subr.mxu0 0.0
    %v3942 = vand.u32 %v524, 4294901760
    %3943 = vmatpush1.msra.mxu0 %v3942
    %3944 = vmatprep.subr.mxu0 0.0
    %v3945 = vand.u32 %v523, 4294901760
    %3946 = vmatpush1.msra.mxu0 %v3945
    %3947 = vmatprep.subr.mxu0 0.0
    %v3948 = vand.u32 %v522, 4294901760
    %3949 = vmatpush1.msra.mxu0 %v3948
    %3950 = vmatprep.subr.mxu0 0.0
    %v3951 = vand.u32 %v521, 4294901760
    %3952 = vmatpush1.msra.mxu0 %v3951
    %3953 = vmatprep.subr.mxu0 0.0
    %v3954 = vand.u32 %v520, 4294901760
    %3955 = vmatpush1.msra.mxu0 %v3954
    %3956 = vmatprep.subr.mxu0 0.0
    %v3957 = vand.u32 %v519, 4294901760
    %3958 = vmatpush1.msra.mxu0 %v3957
    %3959 = vmatprep.subr.mxu0 0.0
    %v3960 = vand.u32 %v518, 4294901760
    %3961 = vmatpush1.msra.mxu0 %v3960
    %3962 = vmatprep.subr.mxu0 0.0
    %v3963 = vand.u32 %v517, 4294901760
    %3964 = vmatpush1.msra.mxu0 %v3963
    %3965 = vmatprep.subr.mxu0 0.0
    %v3966 = vand.u32 %v516, 4294901760
    %3967 = vmatpush1.msra.mxu0 %v3966
    %3968 = vmatprep.subr.mxu0 0.0
    %v3969 = vand.u32 %v515, 4294901760
    %3970 = vmatpush1.msra.mxu0 %v3969
    %3971 = vmatprep.subr.mxu0 0.0
    %v3972 = vand.u32 %v514, 4294901760
    %3973 = vmatpush1.msra.mxu0 %v3972
    %3974 = vmatprep.subr.mxu0 0.0
    %v3975 = vand.u32 %v513, 4294901760
    %3976 = vmatpush1.msra.mxu0 %v3975
    %3977 = vmatprep.subr.mxu0 0.0
    %v3978 = vand.u32 %v512, 4294901760
    %3979 = vmatpush1.msra.mxu0 %v3978
    %3980 = vmatprep.subr.mxu0 0.0
    %3981 = vmatpush2.msra.mxu0 0.0
    %3982 = vmatprep.subr.mxu0 0.0
    %3983 = vmatpush2.msra.mxu0 0.0
    %3984 = vmatprep.subr.mxu0 0.0
    %3985 = vmatpush2.msra.mxu0 0.0
    %3986 = vmatprep.subr.mxu0 0.0
    %3987 = vmatpush2.msra.mxu0 0.0
    %3988 = vmatprep.subr.mxu0 0.0
    %3989 = vmatpush2.msra.mxu0 0.0
    %3990 = vmatprep.subr.mxu0 0.0
    %3991 = vmatpush2.msra.mxu0 0.0
    %3992 = vmatprep.subr.mxu0 0.0
    %3993 = vmatpush2.msra.mxu0 0.0
    %3994 = vmatprep.subr.mxu0 0.0
    %3995 = vmatpush2.msra.mxu0 0.0
    %3996 = vmatprep.subr.mxu0 0.0
    %3997 = vmatpush2.msra.mxu0 0.0
    %3998 = vmatprep.subr.mxu0 0.0
    %3999 = vmatpush2.msra.mxu0 0.0
    %4000 = vmatprep.subr.mxu0 0.0
    %4001 = vmatpush2.msra.mxu0 0.0
    %4002 = vmatprep.subr.mxu0 0.0
    %4003 = vmatpush2.msra.mxu0 0.0
    %4004 = vmatprep.subr.mxu0 0.0
    %4005 = vmatpush2.msra.mxu0 0.0
    %4006 = vmatprep.subr.mxu0 0.0
    %4007 = vmatpush2.msra.mxu0 0.0
    %4008 = vmatprep.subr.mxu0 0.0
    %4009 = vmatpush2.msra.mxu0 0.0
    %4010 = vmatprep.subr.mxu0 0.0
    %4011 = vmatpush2.msra.mxu0 0.0
    %4012 = vmatprep.mubr.f32.mxu0 0.0
    %v4013 = vand.u32 %v372, 4294901760
    %v4014 = vsub.f32 %v372, %v4013
    %v4015 = vand.u32 %v4014, 4294901760
    %v4016 = vsub.f32 %v4014, %v4015
    %v4017 = vand.u32 %v4016, 4294901760
    %4018 = vmatmul.mubr.f32.gmra.mxu0 %v4017
    %v4019 = vpop.f32.mrf.mxu0
    %v4020 = vadd.f32 %v3824, %v4019
    %v4021 = vpop.f32.mrf.mxu0
    %4022 = vmatprep.mubr.f32.mxu0 0.0
    %v4023 = vand.u32 %v377, 4294901760
    %v4024 = vsub.f32 %v377, %v4023
    %v4025 = vand.u32 %v4024, 4294901760
    %v4026 = vsub.f32 %v4024, %v4025
    %v4027 = vand.u32 %v4026, 4294901760
    %4028 = vmatmul.mubr.f32.gmra.mxu0 %v4027
    %v4029 = vpop.f32.mrf.mxu0
    %v4030 = vadd.f32 %v3831, %v4029
    %v4031 = vpop.f32.mrf.mxu0
    %4032 = vmatprep.mubr.f32.mxu0 0.0
    %v4033 = vand.u32 %v382, 4294901760
    %v4034 = vsub.f32 %v382, %v4033
    %v4035 = vand.u32 %v4034, 4294901760
    %v4036 = vsub.f32 %v4034, %v4035
    %v4037 = vand.u32 %v4036, 4294901760
    %4038 = vmatmul.mubr.f32.gmra.mxu0 %v4037
    %v4039 = vpop.f32.mrf.mxu0
    %v4040 = vadd.f32 %v3838, %v4039
    %v4041 = vpop.f32.mrf.mxu0
    %4042 = vmatprep.mubr.f32.mxu0 0.0
    %v4043 = vand.u32 %v387, 4294901760
    %v4044 = vsub.f32 %v387, %v4043
    %v4045 = vand.u32 %v4044, 4294901760
    %v4046 = vsub.f32 %v4044, %v4045
    %v4047 = vand.u32 %v4046, 4294901760
    %4048 = vmatmul.mubr.f32.gmra.mxu0 %v4047
    %v4049 = vpop.f32.mrf.mxu0
    %v4050 = vadd.f32 %v3845, %v4049
    %v4051 = vpop.f32.mrf.mxu0
    %4052 = vmatprep.mubr.f32.mxu0 0.0
    %v4053 = vand.u32 %v392, 4294901760
    %v4054 = vsub.f32 %v392, %v4053
    %v4055 = vand.u32 %v4054, 4294901760
    %v4056 = vsub.f32 %v4054, %v4055
    %v4057 = vand.u32 %v4056, 4294901760
    %4058 = vmatmul.mubr.f32.gmra.mxu0 %v4057
    %v4059 = vpop.f32.mrf.mxu0
    %v4060 = vadd.f32 %v3852, %v4059
    %v4061 = vpop.f32.mrf.mxu0
    %4062 = vmatprep.mubr.f32.mxu0 0.0
    %v4063 = vand.u32 %v397, 4294901760
    %v4064 = vsub.f32 %v397, %v4063
    %v4065 = vand.u32 %v4064, 4294901760
    %v4066 = vsub.f32 %v4064, %v4065
    %v4067 = vand.u32 %v4066, 4294901760
    %4068 = vmatmul.mubr.f32.gmra.mxu0 %v4067
    %v4069 = vpop.f32.mrf.mxu0
    %v4070 = vadd.f32 %v3859, %v4069
    %v4071 = vpop.f32.mrf.mxu0
    %4072 = vmatprep.mubr.f32.mxu0 0.0
    %v4073 = vand.u32 %v402, 4294901760
    %v4074 = vsub.f32 %v402, %v4073
    %v4075 = vand.u32 %v4074, 4294901760
    %v4076 = vsub.f32 %v4074, %v4075
    %v4077 = vand.u32 %v4076, 4294901760
    %4078 = vmatmul.mubr.f32.gmra.mxu0 %v4077
    %v4079 = vpop.f32.mrf.mxu0
    %v4080 = vadd.f32 %v3866, %v4079
    %v4081 = vpop.f32.mrf.mxu0
    %4082 = vmatprep.mubr.f32.mxu0 0.0
    %v4083 = vand.u32 %v407, 4294901760
    %v4084 = vsub.f32 %v407, %v4083
    %v4085 = vand.u32 %v4084, 4294901760
    %v4086 = vsub.f32 %v4084, %v4085
    %v4087 = vand.u32 %v4086, 4294901760
    %4088 = vmatmul.mubr.f32.gmra.mxu0 %v4087
    %v4089 = vpop.f32.mrf.mxu0
    %v4090 = vadd.f32 %v3873, %v4089
    %v4091 = vpop.f32.mrf.mxu0
    %4092 = vmatprep.mubr.f32.mxu0 0.0
    %v4093 = vand.u32 %v412, 4294901760
    %v4094 = vsub.f32 %v412, %v4093
    %v4095 = vand.u32 %v4094, 4294901760
    %v4096 = vsub.f32 %v4094, %v4095
    %v4097 = vand.u32 %v4096, 4294901760
    %4098 = vmatmul.mubr.f32.gmra.mxu0 %v4097
    %v4099 = vpop.f32.mrf.mxu0
    %v4100 = vadd.f32 %v3880, %v4099
    %v4101 = vpop.f32.mrf.mxu0
    %4102 = vmatprep.mubr.f32.mxu0 0.0
    %v4103 = vand.u32 %v417, 4294901760
    %v4104 = vsub.f32 %v417, %v4103
    %v4105 = vand.u32 %v4104, 4294901760
    %v4106 = vsub.f32 %v4104, %v4105
    %v4107 = vand.u32 %v4106, 4294901760
    %4108 = vmatmul.mubr.f32.gmra.mxu0 %v4107
    %v4109 = vpop.f32.mrf.mxu0
    %v4110 = vadd.f32 %v3887, %v4109
    %v4111 = vpop.f32.mrf.mxu0
    %4112 = vmatprep.mubr.f32.mxu0 0.0
    %v4113 = vand.u32 %v422, 4294901760
    %v4114 = vsub.f32 %v422, %v4113
    %v4115 = vand.u32 %v4114, 4294901760
    %v4116 = vsub.f32 %v4114, %v4115
    %v4117 = vand.u32 %v4116, 4294901760
    %4118 = vmatmul.mubr.f32.gmra.mxu0 %v4117
    %v4119 = vpop.f32.mrf.mxu0
    %v4120 = vadd.f32 %v3894, %v4119
    %v4121 = vpop.f32.mrf.mxu0
    %4122 = vmatprep.mubr.f32.mxu0 0.0
    %v4123 = vand.u32 %v427, 4294901760
    %v4124 = vsub.f32 %v427, %v4123
    %v4125 = vand.u32 %v4124, 4294901760
    %v4126 = vsub.f32 %v4124, %v4125
    %v4127 = vand.u32 %v4126, 4294901760
    %4128 = vmatmul.mubr.f32.gmra.mxu0 %v4127
    %v4129 = vpop.f32.mrf.mxu0
    %v4130 = vadd.f32 %v3901, %v4129
    %v4131 = vpop.f32.mrf.mxu0
    %4132 = vmatprep.mubr.f32.mxu0 0.0
    %v4133 = vand.u32 %v432, 4294901760
    %v4134 = vsub.f32 %v432, %v4133
    %v4135 = vand.u32 %v4134, 4294901760
    %v4136 = vsub.f32 %v4134, %v4135
    %v4137 = vand.u32 %v4136, 4294901760
    %4138 = vmatmul.mubr.f32.gmra.mxu0 %v4137
    %v4139 = vpop.f32.mrf.mxu0
    %v4140 = vadd.f32 %v3908, %v4139
    %v4141 = vpop.f32.mrf.mxu0
    %4142 = vmatprep.mubr.f32.mxu0 0.0
    %v4143 = vand.u32 %v437, 4294901760
    %v4144 = vsub.f32 %v437, %v4143
    %v4145 = vand.u32 %v4144, 4294901760
    %v4146 = vsub.f32 %v4144, %v4145
    %v4147 = vand.u32 %v4146, 4294901760
    %4148 = vmatmul.mubr.f32.gmra.mxu0 %v4147
    %v4149 = vpop.f32.mrf.mxu0
    %v4150 = vadd.f32 %v3915, %v4149
    %v4151 = vpop.f32.mrf.mxu0
    %4152 = vmatprep.mubr.f32.mxu0 0.0
    %v4153 = vand.u32 %v442, 4294901760
    %v4154 = vsub.f32 %v442, %v4153
    %v4155 = vand.u32 %v4154, 4294901760
    %v4156 = vsub.f32 %v4154, %v4155
    %v4157 = vand.u32 %v4156, 4294901760
    %4158 = vmatmul.mubr.f32.gmra.mxu0 %v4157
    %v4159 = vpop.f32.mrf.mxu0
    %v4160 = vadd.f32 %v3922, %v4159
    %v4161 = vpop.f32.mrf.mxu0
    %4162 = vmatprep.mubr.f32.mxu0 0.0
    %v4163 = vand.u32 %v447, 4294901760
    %v4164 = vsub.f32 %v447, %v4163
    %v4165 = vand.u32 %v4164, 4294901760
    %v4166 = vsub.f32 %v4164, %v4165
    %v4167 = vand.u32 %v4166, 4294901760
    %4168 = vmatmul.mubr.f32.gmra.mxu0 %v4167
    %v4169 = vpop.f32.mrf.mxu0
    %v4170 = vadd.f32 %v3929, %v4169
    %v4171 = vpop.f32.mrf.mxu0
    %4172 = vdwg.mxu0
    %4173 = vmatprep.subr.mxu0 0.0
    %v4174 = vand.u32 %v527, 4294901760
    %v4175 = vsub.f32 %v527, %v4174
    %v4176 = vand.u32 %v4175, 4294901760
    %v4177 = vsub.f32 %v4175, %v4176
    %v4178 = vand.u32 %v4177, 4294901760
    %4179 = vmatpush1.msra.mxu0 %v4178
    %4180 = vmatprep.subr.mxu0 0.0
    %v4181 = vand.u32 %v526, 4294901760
    %v4182 = vsub.f32 %v526, %v4181
    %v4183 = vand.u32 %v4182, 4294901760
    %v4184 = vsub.f32 %v4182, %v4183
    %v4185 = vand.u32 %v4184, 4294901760
    %4186 = vmatpush1.msra.mxu0 %v4185
    %4187 = vmatprep.subr.mxu0 0.0
    %v4188 = vand.u32 %v525, 4294901760
    %v4189 = vsub.f32 %v525, %v4188
    %v4190 = vand.u32 %v4189, 4294901760
    %v4191 = vsub.f32 %v4189, %v4190
    %v4192 = vand.u32 %v4191, 4294901760
    %4193 = vmatpush1.msra.mxu0 %v4192
    %4194 = vmatprep.subr.mxu0 0.0
    %v4195 = vand.u32 %v524, 4294901760
    %v4196 = vsub.f32 %v524, %v4195
    %v4197 = vand.u32 %v4196, 4294901760
    %v4198 = vsub.f32 %v4196, %v4197
    %v4199 = vand.u32 %v4198, 4294901760
    %4200 = vmatpush1.msra.mxu0 %v4199
    %4201 = vmatprep.subr.mxu0 0.0
    %v4202 = vand.u32 %v523, 4294901760
    %v4203 = vsub.f32 %v523, %v4202
    %v4204 = vand.u32 %v4203, 4294901760
    %v4205 = vsub.f32 %v4203, %v4204
    %v4206 = vand.u32 %v4205, 4294901760
    %4207 = vmatpush1.msra.mxu0 %v4206
    %4208 = vmatprep.subr.mxu0 0.0
    %v4209 = vand.u32 %v522, 4294901760
    %v4210 = vsub.f32 %v522, %v4209
    %v4211 = vand.u32 %v4210, 4294901760
    %v4212 = vsub.f32 %v4210, %v4211
    %v4213 = vand.u32 %v4212, 4294901760
    %4214 = vmatpush1.msra.mxu0 %v4213
    %4215 = vmatprep.subr.mxu0 0.0
    %v4216 = vand.u32 %v521, 4294901760
    %v4217 = vsub.f32 %v521, %v4216
    %v4218 = vand.u32 %v4217, 4294901760
    %v4219 = vsub.f32 %v4217, %v4218
    %v4220 = vand.u32 %v4219, 4294901760
    %4221 = vmatpush1.msra.mxu0 %v4220
    %4222 = vmatprep.subr.mxu0 0.0
    %v4223 = vand.u32 %v520, 4294901760
    %v4224 = vsub.f32 %v520, %v4223
    %v4225 = vand.u32 %v4224, 4294901760
    %v4226 = vsub.f32 %v4224, %v4225
    %v4227 = vand.u32 %v4226, 4294901760
    %4228 = vmatpush1.msra.mxu0 %v4227
    %4229 = vmatprep.subr.mxu0 0.0
    %v4230 = vand.u32 %v519, 4294901760
    %v4231 = vsub.f32 %v519, %v4230
    %v4232 = vand.u32 %v4231, 4294901760
    %v4233 = vsub.f32 %v4231, %v4232
    %v4234 = vand.u32 %v4233, 4294901760
    %4235 = vmatpush1.msra.mxu0 %v4234
    %4236 = vmatprep.subr.mxu0 0.0
    %v4237 = vand.u32 %v518, 4294901760
    %v4238 = vsub.f32 %v518, %v4237
    %v4239 = vand.u32 %v4238, 4294901760
    %v4240 = vsub.f32 %v4238, %v4239
    %v4241 = vand.u32 %v4240, 4294901760
    %4242 = vmatpush1.msra.mxu0 %v4241
    %4243 = vmatprep.subr.mxu0 0.0
    %v4244 = vand.u32 %v517, 4294901760
    %v4245 = vsub.f32 %v517, %v4244
    %v4246 = vand.u32 %v4245, 4294901760
    %v4247 = vsub.f32 %v4245, %v4246
    %v4248 = vand.u32 %v4247, 4294901760
    %4249 = vmatpush1.msra.mxu0 %v4248
    %4250 = vmatprep.subr.mxu0 0.0
    %v4251 = vand.u32 %v516, 4294901760
    %v4252 = vsub.f32 %v516, %v4251
    %v4253 = vand.u32 %v4252, 4294901760
    %v4254 = vsub.f32 %v4252, %v4253
    %v4255 = vand.u32 %v4254, 4294901760
    %4256 = vmatpush1.msra.mxu0 %v4255
    %4257 = vmatprep.subr.mxu0 0.0
    %v4258 = vand.u32 %v515, 4294901760
    %v4259 = vsub.f32 %v515, %v4258
    %v4260 = vand.u32 %v4259, 4294901760
    %v4261 = vsub.f32 %v4259, %v4260
    %v4262 = vand.u32 %v4261, 4294901760
    %4263 = vmatpush1.msra.mxu0 %v4262
    %4264 = vmatprep.subr.mxu0 0.0
    %v4265 = vand.u32 %v514, 4294901760
    %v4266 = vsub.f32 %v514, %v4265
    %v4267 = vand.u32 %v4266, 4294901760
    %v4268 = vsub.f32 %v4266, %v4267
    %v4269 = vand.u32 %v4268, 4294901760
    %4270 = vmatpush1.msra.mxu0 %v4269
    %4271 = vmatprep.subr.mxu0 0.0
    %v4272 = vand.u32 %v513, 4294901760
    %v4273 = vsub.f32 %v513, %v4272
    %v4274 = vand.u32 %v4273, 4294901760
    %v4275 = vsub.f32 %v4273, %v4274
    %v4276 = vand.u32 %v4275, 4294901760
    %4277 = vmatpush1.msra.mxu0 %v4276
    %4278 = vmatprep.subr.mxu0 0.0
    %v4279 = vand.u32 %v512, 4294901760
    %v4280 = vsub.f32 %v512, %v4279
    %v4281 = vand.u32 %v4280, 4294901760
    %v4282 = vsub.f32 %v4280, %v4281
    %v4283 = vand.u32 %v4282, 4294901760
    %4284 = vmatpush1.msra.mxu0 %v4283
    %4285 = vmatprep.subr.mxu0 0.0
    %4286 = vmatpush2.msra.mxu0 0.0
    %4287 = vmatprep.subr.mxu0 0.0
    %4288 = vmatpush2.msra.mxu0 0.0
    %4289 = vmatprep.subr.mxu0 0.0
    %4290 = vmatpush2.msra.mxu0 0.0
    %4291 = vmatprep.subr.mxu0 0.0
    %4292 = vmatpush2.msra.mxu0 0.0
    %4293 = vmatprep.subr.mxu0 0.0
    %4294 = vmatpush2.msra.mxu0 0.0
    %4295 = vmatprep.subr.mxu0 0.0
    %4296 = vmatpush2.msra.mxu0 0.0
    %4297 = vmatprep.subr.mxu0 0.0
    %4298 = vmatpush2.msra.mxu0 0.0
    %4299 = vmatprep.subr.mxu0 0.0
    %4300 = vmatpush2.msra.mxu0 0.0
    %4301 = vmatprep.subr.mxu0 0.0
    %4302 = vmatpush2.msra.mxu0 0.0
    %4303 = vmatprep.subr.mxu0 0.0
    %4304 = vmatpush2.msra.mxu0 0.0
    %4305 = vmatprep.subr.mxu0 0.0
    %4306 = vmatpush2.msra.mxu0 0.0
    %4307 = vmatprep.subr.mxu0 0.0
    %4308 = vmatpush2.msra.mxu0 0.0
    %4309 = vmatprep.subr.mxu0 0.0
    %4310 = vmatpush2.msra.mxu0 0.0
    %4311 = vmatprep.subr.mxu0 0.0
    %4312 = vmatpush2.msra.mxu0 0.0
    %4313 = vmatprep.subr.mxu0 0.0
    %4314 = vmatpush2.msra.mxu0 0.0
    %4315 = vmatprep.subr.mxu0 0.0
    %4316 = vmatpush2.msra.mxu0 0.0
    %4317 = vmatprep.mubr.f32.mxu0 0.0
    %v4318 = vand.u32 %v372, 4294901760
    %4319 = vmatmul.mubr.f32.gmra.mxu0 %v4318
    %v4320 = vpop.f32.mrf.mxu0
    %v4321 = vadd.f32 %v4020, %v4320
    %v4322 = vpop.f32.mrf.mxu0
    %4323 = vmatprep.mubr.f32.mxu0 0.0
    %v4324 = vand.u32 %v377, 4294901760
    %4325 = vmatmul.mubr.f32.gmra.mxu0 %v4324
    %v4326 = vpop.f32.mrf.mxu0
    %v4327 = vadd.f32 %v4030, %v4326
    %v4328 = vpop.f32.mrf.mxu0
    %4329 = vmatprep.mubr.f32.mxu0 0.0
    %v4330 = vand.u32 %v382, 4294901760
    %4331 = vmatmul.mubr.f32.gmra.mxu0 %v4330
    %v4332 = vpop.f32.mrf.mxu0
    %v4333 = vadd.f32 %v4040, %v4332
    %v4334 = vpop.f32.mrf.mxu0
    %4335 = vmatprep.mubr.f32.mxu0 0.0
    %v4336 = vand.u32 %v387, 4294901760
    %4337 = vmatmul.mubr.f32.gmra.mxu0 %v4336
    %v4338 = vpop.f32.mrf.mxu0
    %v4339 = vadd.f32 %v4050, %v4338
    %v4340 = vpop.f32.mrf.mxu0
    %4341 = vmatprep.mubr.f32.mxu0 0.0
    %v4342 = vand.u32 %v392, 4294901760
    %4343 = vmatmul.mubr.f32.gmra.mxu0 %v4342
    %v4344 = vpop.f32.mrf.mxu0
    %v4345 = vadd.f32 %v4060, %v4344
    %v4346 = vpop.f32.mrf.mxu0
    %4347 = vmatprep.mubr.f32.mxu0 0.0
    %v4348 = vand.u32 %v397, 4294901760
    %4349 = vmatmul.mubr.f32.gmra.mxu0 %v4348
    %v4350 = vpop.f32.mrf.mxu0
    %v4351 = vadd.f32 %v4070, %v4350
    %v4352 = vpop.f32.mrf.mxu0
    %4353 = vmatprep.mubr.f32.mxu0 0.0
    %v4354 = vand.u32 %v402, 4294901760
    %4355 = vmatmul.mubr.f32.gmra.mxu0 %v4354
    %v4356 = vpop.f32.mrf.mxu0
    %v4357 = vadd.f32 %v4080, %v4356
    %v4358 = vpop.f32.mrf.mxu0
    %4359 = vmatprep.mubr.f32.mxu0 0.0
    %v4360 = vand.u32 %v407, 4294901760
    %4361 = vmatmul.mubr.f32.gmra.mxu0 %v4360
    %v4362 = vpop.f32.mrf.mxu0
    %v4363 = vadd.f32 %v4090, %v4362
    %v4364 = vpop.f32.mrf.mxu0
    %4365 = vmatprep.mubr.f32.mxu0 0.0
    %v4366 = vand.u32 %v412, 4294901760
    %4367 = vmatmul.mubr.f32.gmra.mxu0 %v4366
    %v4368 = vpop.f32.mrf.mxu0
    %v4369 = vadd.f32 %v4100, %v4368
    %v4370 = vpop.f32.mrf.mxu0
    %4371 = vmatprep.mubr.f32.mxu0 0.0
    %v4372 = vand.u32 %v417, 4294901760
    %4373 = vmatmul.mubr.f32.gmra.mxu0 %v4372
    %v4374 = vpop.f32.mrf.mxu0
    %v4375 = vadd.f32 %v4110, %v4374
    %v4376 = vpop.f32.mrf.mxu0
    %4377 = vmatprep.mubr.f32.mxu0 0.0
    %v4378 = vand.u32 %v422, 4294901760
    %4379 = vmatmul.mubr.f32.gmra.mxu0 %v4378
    %v4380 = vpop.f32.mrf.mxu0
    %v4381 = vadd.f32 %v4120, %v4380
    %v4382 = vpop.f32.mrf.mxu0
    %4383 = vmatprep.mubr.f32.mxu0 0.0
    %v4384 = vand.u32 %v427, 4294901760
    %4385 = vmatmul.mubr.f32.gmra.mxu0 %v4384
    %v4386 = vpop.f32.mrf.mxu0
    %v4387 = vadd.f32 %v4130, %v4386
    %v4388 = vpop.f32.mrf.mxu0
    %4389 = vmatprep.mubr.f32.mxu0 0.0
    %v4390 = vand.u32 %v432, 4294901760
    %4391 = vmatmul.mubr.f32.gmra.mxu0 %v4390
    %v4392 = vpop.f32.mrf.mxu0
    %v4393 = vadd.f32 %v4140, %v4392
    %v4394 = vpop.f32.mrf.mxu0
    %4395 = vmatprep.mubr.f32.mxu0 0.0
    %v4396 = vand.u32 %v437, 4294901760
    %4397 = vmatmul.mubr.f32.gmra.mxu0 %v4396
    %v4398 = vpop.f32.mrf.mxu0
    %v4399 = vadd.f32 %v4150, %v4398
    %v4400 = vpop.f32.mrf.mxu0
    %4401 = vmatprep.mubr.f32.mxu0 0.0
    %v4402 = vand.u32 %v442, 4294901760
    %4403 = vmatmul.mubr.f32.gmra.mxu0 %v4402
    %v4404 = vpop.f32.mrf.mxu0
    %v4405 = vadd.f32 %v4160, %v4404
    %v4406 = vpop.f32.mrf.mxu0
    %4407 = vmatprep.mubr.f32.mxu0 0.0
    %v4408 = vand.u32 %v447, 4294901760
    %4409 = vmatmul.mubr.f32.gmra.mxu0 %v4408
    %v4410 = vpop.f32.mrf.mxu0
    %v4411 = vadd.f32 %v4170, %v4410
    %v4412 = vpop.f32.mrf.mxu0
    %4413 = vdwg.mxu0
    %4414 = vmatprep.subr.mxu0 0.0
    %v4415 = vand.u32 %v527, 4294901760
    %v4416 = vsub.f32 %v527, %v4415
    %4417 = vmatpush1.msra.mxu0 %v4416
    %4418 = vmatprep.subr.mxu0 0.0
    %v4419 = vand.u32 %v526, 4294901760
    %v4420 = vsub.f32 %v526, %v4419
    %4421 = vmatpush1.msra.mxu0 %v4420
    %4422 = vmatprep.subr.mxu0 0.0
    %v4423 = vand.u32 %v525, 4294901760
    %v4424 = vsub.f32 %v525, %v4423
    %4425 = vmatpush1.msra.mxu0 %v4424
    %4426 = vmatprep.subr.mxu0 0.0
    %v4427 = vand.u32 %v524, 4294901760
    %v4428 = vsub.f32 %v524, %v4427
    %4429 = vmatpush1.msra.mxu0 %v4428
    %4430 = vmatprep.subr.mxu0 0.0
    %v4431 = vand.u32 %v523, 4294901760
    %v4432 = vsub.f32 %v523, %v4431
    %4433 = vmatpush1.msra.mxu0 %v4432
    %4434 = vmatprep.subr.mxu0 0.0
    %v4435 = vand.u32 %v522, 4294901760
    %v4436 = vsub.f32 %v522, %v4435
    %4437 = vmatpush1.msra.mxu0 %v4436
    %4438 = vmatprep.subr.mxu0 0.0
    %v4439 = vand.u32 %v521, 4294901760
    %v4440 = vsub.f32 %v521, %v4439
    %4441 = vmatpush1.msra.mxu0 %v4440
    %4442 = vmatprep.subr.mxu0 0.0
    %v4443 = vand.u32 %v520, 4294901760
    %v4444 = vsub.f32 %v520, %v4443
    %4445 = vmatpush1.msra.mxu0 %v4444
    %4446 = vmatprep.subr.mxu0 0.0
    %v4447 = vand.u32 %v519, 4294901760
    %v4448 = vsub.f32 %v519, %v4447
    %4449 = vmatpush1.msra.mxu0 %v4448
    %4450 = vmatprep.subr.mxu0 0.0
    %v4451 = vand.u32 %v518, 4294901760
    %v4452 = vsub.f32 %v518, %v4451
    %4453 = vmatpush1.msra.mxu0 %v4452
    %4454 = vmatprep.subr.mxu0 0.0
    %v4455 = vand.u32 %v517, 4294901760
    %v4456 = vsub.f32 %v517, %v4455
    %4457 = vmatpush1.msra.mxu0 %v4456
    %4458 = vmatprep.subr.mxu0 0.0
    %v4459 = vand.u32 %v516, 4294901760
    %v4460 = vsub.f32 %v516, %v4459
    %4461 = vmatpush1.msra.mxu0 %v4460
    %4462 = vmatprep.subr.mxu0 0.0
    %v4463 = vand.u32 %v515, 4294901760
    %v4464 = vsub.f32 %v515, %v4463
    %4465 = vmatpush1.msra.mxu0 %v4464
    %4466 = vmatprep.subr.mxu0 0.0
    %v4467 = vand.u32 %v514, 4294901760
    %v4468 = vsub.f32 %v514, %v4467
    %4469 = vmatpush1.msra.mxu0 %v4468
    %4470 = vmatprep.subr.mxu0 0.0
    %v4471 = vand.u32 %v513, 4294901760
    %v4472 = vsub.f32 %v513, %v4471
    %4473 = vmatpush1.msra.mxu0 %v4472
    %4474 = vmatprep.subr.mxu0 0.0
    %v4475 = vand.u32 %v512, 4294901760
    %v4476 = vsub.f32 %v512, %v4475
    %4477 = vmatpush1.msra.mxu0 %v4476
    %4478 = vmatprep.subr.mxu0 0.0
    %4479 = vmatpush2.msra.mxu0 0.0
    %4480 = vmatprep.subr.mxu0 0.0
    %4481 = vmatpush2.msra.mxu0 0.0
    %4482 = vmatprep.subr.mxu0 0.0
    %4483 = vmatpush2.msra.mxu0 0.0
    %4484 = vmatprep.subr.mxu0 0.0
    %4485 = vmatpush2.msra.mxu0 0.0
    %4486 = vmatprep.subr.mxu0 0.0
    %4487 = vmatpush2.msra.mxu0 0.0
    %4488 = vmatprep.subr.mxu0 0.0
    %4489 = vmatpush2.msra.mxu0 0.0
    %4490 = vmatprep.subr.mxu0 0.0
    %4491 = vmatpush2.msra.mxu0 0.0
    %4492 = vmatprep.subr.mxu0 0.0
    %4493 = vmatpush2.msra.mxu0 0.0
    %4494 = vmatprep.subr.mxu0 0.0
    %4495 = vmatpush2.msra.mxu0 0.0
    %4496 = vmatprep.subr.mxu0 0.0
    %4497 = vmatpush2.msra.mxu0 0.0
    %4498 = vmatprep.subr.mxu0 0.0
    %4499 = vmatpush2.msra.mxu0 0.0
    %4500 = vmatprep.subr.mxu0 0.0
    %4501 = vmatpush2.msra.mxu0 0.0
    %4502 = vmatprep.subr.mxu0 0.0
    %4503 = vmatpush2.msra.mxu0 0.0
    %4504 = vmatprep.subr.mxu0 0.0
    %4505 = vmatpush2.msra.mxu0 0.0
    %4506 = vmatprep.subr.mxu0 0.0
    %4507 = vmatpush2.msra.mxu0 0.0
    %4508 = vmatprep.subr.mxu0 0.0
    %4509 = vmatpush2.msra.mxu0 0.0
    %4510 = vmatprep.mubr.f32.mxu0 0.0
    %v4511 = vand.u32 %v372, 4294901760
    %v4512 = vsub.f32 %v372, %v4511
    %4513 = vmatmul.mubr.f32.gmra.mxu0 %v4512
    %v4514 = vpop.f32.mrf.mxu0
    %v4515 = vadd.f32 %v4321, %v4514
    %v4516 = vpop.f32.mrf.mxu0
    %4517 = vmatprep.mubr.f32.mxu0 0.0
    %v4518 = vand.u32 %v377, 4294901760
    %v4519 = vsub.f32 %v377, %v4518
    %4520 = vmatmul.mubr.f32.gmra.mxu0 %v4519
    %v4521 = vpop.f32.mrf.mxu0
    %v4522 = vadd.f32 %v4327, %v4521
    %v4523 = vpop.f32.mrf.mxu0
    %4524 = vmatprep.mubr.f32.mxu0 0.0
    %v4525 = vand.u32 %v382, 4294901760
    %v4526 = vsub.f32 %v382, %v4525
    %4527 = vmatmul.mubr.f32.gmra.mxu0 %v4526
    %v4528 = vpop.f32.mrf.mxu0
    %v4529 = vadd.f32 %v4333, %v4528
    %v4530 = vpop.f32.mrf.mxu0
    %4531 = vmatprep.mubr.f32.mxu0 0.0
    %v4532 = vand.u32 %v387, 4294901760
    %v4533 = vsub.f32 %v387, %v4532
    %4534 = vmatmul.mubr.f32.gmra.mxu0 %v4533
    %v4535 = vpop.f32.mrf.mxu0
    %v4536 = vadd.f32 %v4339, %v4535
    %v4537 = vpop.f32.mrf.mxu0
    %4538 = vmatprep.mubr.f32.mxu0 0.0
    %v4539 = vand.u32 %v392, 4294901760
    %v4540 = vsub.f32 %v392, %v4539
    %4541 = vmatmul.mubr.f32.gmra.mxu0 %v4540
    %v4542 = vpop.f32.mrf.mxu0
    %v4543 = vadd.f32 %v4345, %v4542
    %v4544 = vpop.f32.mrf.mxu0
    %4545 = vmatprep.mubr.f32.mxu0 0.0
    %v4546 = vand.u32 %v397, 4294901760
    %v4547 = vsub.f32 %v397, %v4546
    %4548 = vmatmul.mubr.f32.gmra.mxu0 %v4547
    %v4549 = vpop.f32.mrf.mxu0
    %v4550 = vadd.f32 %v4351, %v4549
    %v4551 = vpop.f32.mrf.mxu0
    %4552 = vmatprep.mubr.f32.mxu0 0.0
    %v4553 = vand.u32 %v402, 4294901760
    %v4554 = vsub.f32 %v402, %v4553
    %4555 = vmatmul.mubr.f32.gmra.mxu0 %v4554
    %v4556 = vpop.f32.mrf.mxu0
    %v4557 = vadd.f32 %v4357, %v4556
    %v4558 = vpop.f32.mrf.mxu0
    %4559 = vmatprep.mubr.f32.mxu0 0.0
    %v4560 = vand.u32 %v407, 4294901760
    %v4561 = vsub.f32 %v407, %v4560
    %4562 = vmatmul.mubr.f32.gmra.mxu0 %v4561
    %v4563 = vpop.f32.mrf.mxu0
    %v4564 = vadd.f32 %v4363, %v4563
    %v4565 = vpop.f32.mrf.mxu0
    %4566 = vmatprep.mubr.f32.mxu0 0.0
    %v4567 = vand.u32 %v412, 4294901760
    %v4568 = vsub.f32 %v412, %v4567
    %4569 = vmatmul.mubr.f32.gmra.mxu0 %v4568
    %v4570 = vpop.f32.mrf.mxu0
    %v4571 = vadd.f32 %v4369, %v4570
    %v4572 = vpop.f32.mrf.mxu0
    %4573 = vmatprep.mubr.f32.mxu0 0.0
    %v4574 = vand.u32 %v417, 4294901760
    %v4575 = vsub.f32 %v417, %v4574
    %4576 = vmatmul.mubr.f32.gmra.mxu0 %v4575
    %v4577 = vpop.f32.mrf.mxu0
    %v4578 = vadd.f32 %v4375, %v4577
    %v4579 = vpop.f32.mrf.mxu0
    %4580 = vmatprep.mubr.f32.mxu0 0.0
    %v4581 = vand.u32 %v422, 4294901760
    %v4582 = vsub.f32 %v422, %v4581
    %4583 = vmatmul.mubr.f32.gmra.mxu0 %v4582
    %v4584 = vpop.f32.mrf.mxu0
    %v4585 = vadd.f32 %v4381, %v4584
    %v4586 = vpop.f32.mrf.mxu0
    %4587 = vmatprep.mubr.f32.mxu0 0.0
    %v4588 = vand.u32 %v427, 4294901760
    %v4589 = vsub.f32 %v427, %v4588
    %4590 = vmatmul.mubr.f32.gmra.mxu0 %v4589
    %v4591 = vpop.f32.mrf.mxu0
    %v4592 = vadd.f32 %v4387, %v4591
    %v4593 = vpop.f32.mrf.mxu0
    %4594 = vmatprep.mubr.f32.mxu0 0.0
    %v4595 = vand.u32 %v432, 4294901760
    %v4596 = vsub.f32 %v432, %v4595
    %4597 = vmatmul.mubr.f32.gmra.mxu0 %v4596
    %v4598 = vpop.f32.mrf.mxu0
    %v4599 = vadd.f32 %v4393, %v4598
    %v4600 = vpop.f32.mrf.mxu0
    %4601 = vmatprep.mubr.f32.mxu0 0.0
    %v4602 = vand.u32 %v437, 4294901760
    %v4603 = vsub.f32 %v437, %v4602
    %4604 = vmatmul.mubr.f32.gmra.mxu0 %v4603
    %v4605 = vpop.f32.mrf.mxu0
    %v4606 = vadd.f32 %v4399, %v4605
    %v4607 = vpop.f32.mrf.mxu0
    %4608 = vmatprep.mubr.f32.mxu0 0.0
    %v4609 = vand.u32 %v442, 4294901760
    %v4610 = vsub.f32 %v442, %v4609
    %4611 = vmatmul.mubr.f32.gmra.mxu0 %v4610
    %v4612 = vpop.f32.mrf.mxu0
    %v4613 = vadd.f32 %v4405, %v4612
    %v4614 = vpop.f32.mrf.mxu0
    %4615 = vmatprep.mubr.f32.mxu0 0.0
    %v4616 = vand.u32 %v447, 4294901760
    %v4617 = vsub.f32 %v447, %v4616
    %4618 = vmatmul.mubr.f32.gmra.mxu0 %v4617
    %v4619 = vpop.f32.mrf.mxu0
    %v4620 = vadd.f32 %v4411, %v4619
    %v4621 = vpop.f32.mrf.mxu0
    %4622 = vdwg.mxu0
    %4623 = vmatprep.subr.mxu0 0.0
    %v4624 = vand.u32 %v527, 4294901760
    %4625 = vmatpush1.msra.mxu0 %v4624
    %4626 = vmatprep.subr.mxu0 0.0
    %v4627 = vand.u32 %v526, 4294901760
    %4628 = vmatpush1.msra.mxu0 %v4627
    %4629 = vmatprep.subr.mxu0 0.0
    %v4630 = vand.u32 %v525, 4294901760
    %4631 = vmatpush1.msra.mxu0 %v4630
    %4632 = vmatprep.subr.mxu0 0.0
    %v4633 = vand.u32 %v524, 4294901760
    %4634 = vmatpush1.msra.mxu0 %v4633
    %4635 = vmatprep.subr.mxu0 0.0
    %v4636 = vand.u32 %v523, 4294901760
    %4637 = vmatpush1.msra.mxu0 %v4636
    %4638 = vmatprep.subr.mxu0 0.0
    %v4639 = vand.u32 %v522, 4294901760
    %4640 = vmatpush1.msra.mxu0 %v4639
    %4641 = vmatprep.subr.mxu0 0.0
    %v4642 = vand.u32 %v521, 4294901760
    %4643 = vmatpush1.msra.mxu0 %v4642
    %4644 = vmatprep.subr.mxu0 0.0
    %v4645 = vand.u32 %v520, 4294901760
    %4646 = vmatpush1.msra.mxu0 %v4645
    %4647 = vmatprep.subr.mxu0 0.0
    %v4648 = vand.u32 %v519, 4294901760
    %4649 = vmatpush1.msra.mxu0 %v4648
    %4650 = vmatprep.subr.mxu0 0.0
    %v4651 = vand.u32 %v518, 4294901760
    %4652 = vmatpush1.msra.mxu0 %v4651
    %4653 = vmatprep.subr.mxu0 0.0
    %v4654 = vand.u32 %v517, 4294901760
    %4655 = vmatpush1.msra.mxu0 %v4654
    %4656 = vmatprep.subr.mxu0 0.0
    %v4657 = vand.u32 %v516, 4294901760
    %4658 = vmatpush1.msra.mxu0 %v4657
    %4659 = vmatprep.subr.mxu0 0.0
    %v4660 = vand.u32 %v515, 4294901760
    %4661 = vmatpush1.msra.mxu0 %v4660
    %4662 = vmatprep.subr.mxu0 0.0
    %v4663 = vand.u32 %v514, 4294901760
    %4664 = vmatpush1.msra.mxu0 %v4663
    %4665 = vmatprep.subr.mxu0 0.0
    %v4666 = vand.u32 %v513, 4294901760
    %4667 = vmatpush1.msra.mxu0 %v4666
    %4668 = vmatprep.subr.mxu0 0.0
    %v4669 = vand.u32 %v512, 4294901760
    %4670 = vmatpush1.msra.mxu0 %v4669
    %4671 = vmatprep.subr.mxu0 0.0
    %4672 = vmatpush2.msra.mxu0 0.0
    %4673 = vmatprep.subr.mxu0 0.0
    %4674 = vmatpush2.msra.mxu0 0.0
    %4675 = vmatprep.subr.mxu0 0.0
    %4676 = vmatpush2.msra.mxu0 0.0
    %4677 = vmatprep.subr.mxu0 0.0
    %4678 = vmatpush2.msra.mxu0 0.0
    %4679 = vmatprep.subr.mxu0 0.0
    %4680 = vmatpush2.msra.mxu0 0.0
    %4681 = vmatprep.subr.mxu0 0.0
    %4682 = vmatpush2.msra.mxu0 0.0
    %4683 = vmatprep.subr.mxu0 0.0
    %4684 = vmatpush2.msra.mxu0 0.0
    %4685 = vmatprep.subr.mxu0 0.0
    %4686 = vmatpush2.msra.mxu0 0.0
    %4687 = vmatprep.subr.mxu0 0.0
    %4688 = vmatpush2.msra.mxu0 0.0
    %4689 = vmatprep.subr.mxu0 0.0
    %4690 = vmatpush2.msra.mxu0 0.0
    %4691 = vmatprep.subr.mxu0 0.0
    %4692 = vmatpush2.msra.mxu0 0.0
    %4693 = vmatprep.subr.mxu0 0.0
    %4694 = vmatpush2.msra.mxu0 0.0
    %4695 = vmatprep.subr.mxu0 0.0
    %4696 = vmatpush2.msra.mxu0 0.0
    %4697 = vmatprep.subr.mxu0 0.0
    %4698 = vmatpush2.msra.mxu0 0.0
    %4699 = vmatprep.subr.mxu0 0.0
    %4700 = vmatpush2.msra.mxu0 0.0
    %4701 = vmatprep.subr.mxu0 0.0
    %4702 = vmatpush2.msra.mxu0 0.0
    %4703 = vmatprep.mubr.f32.mxu0 0.0
    %v4704 = vand.u32 %v372, 4294901760
    %v4705 = vsub.f32 %v372, %v4704
    %v4706 = vand.u32 %v4705, 4294901760
    %4707 = vmatmul.mubr.f32.gmra.mxu0 %v4706
    %v4708 = vpop.f32.mrf.mxu0
    %v4709 = vadd.f32 %v4515, %v4708
    %v4710 = vpop.f32.mrf.mxu0
    %4711 = vmatprep.mubr.f32.mxu0 0.0
    %v4712 = vand.u32 %v377, 4294901760
    %v4713 = vsub.f32 %v377, %v4712
    %v4714 = vand.u32 %v4713, 4294901760
    %4715 = vmatmul.mubr.f32.gmra.mxu0 %v4714
    %v4716 = vpop.f32.mrf.mxu0
    %v4717 = vadd.f32 %v4522, %v4716
    %v4718 = vpop.f32.mrf.mxu0
    %4719 = vmatprep.mubr.f32.mxu0 0.0
    %v4720 = vand.u32 %v382, 4294901760
    %v4721 = vsub.f32 %v382, %v4720
    %v4722 = vand.u32 %v4721, 4294901760
    %4723 = vmatmul.mubr.f32.gmra.mxu0 %v4722
    %v4724 = vpop.f32.mrf.mxu0
    %v4725 = vadd.f32 %v4529, %v4724
    %v4726 = vpop.f32.mrf.mxu0
    %4727 = vmatprep.mubr.f32.mxu0 0.0
    %v4728 = vand.u32 %v387, 4294901760
    %v4729 = vsub.f32 %v387, %v4728
    %v4730 = vand.u32 %v4729, 4294901760
    %4731 = vmatmul.mubr.f32.gmra.mxu0 %v4730
    %v4732 = vpop.f32.mrf.mxu0
    %v4733 = vadd.f32 %v4536, %v4732
    %v4734 = vpop.f32.mrf.mxu0
    %4735 = vmatprep.mubr.f32.mxu0 0.0
    %v4736 = vand.u32 %v392, 4294901760
    %v4737 = vsub.f32 %v392, %v4736
    %v4738 = vand.u32 %v4737, 4294901760
    %4739 = vmatmul.mubr.f32.gmra.mxu0 %v4738
    %v4740 = vpop.f32.mrf.mxu0
    %v4741 = vadd.f32 %v4543, %v4740
    %v4742 = vpop.f32.mrf.mxu0
    %4743 = vmatprep.mubr.f32.mxu0 0.0
    %v4744 = vand.u32 %v397, 4294901760
    %v4745 = vsub.f32 %v397, %v4744
    %v4746 = vand.u32 %v4745, 4294901760
    %4747 = vmatmul.mubr.f32.gmra.mxu0 %v4746
    %v4748 = vpop.f32.mrf.mxu0
    %v4749 = vadd.f32 %v4550, %v4748
    %v4750 = vpop.f32.mrf.mxu0
    %4751 = vmatprep.mubr.f32.mxu0 0.0
    %v4752 = vand.u32 %v402, 4294901760
    %v4753 = vsub.f32 %v402, %v4752
    %v4754 = vand.u32 %v4753, 4294901760
    %4755 = vmatmul.mubr.f32.gmra.mxu0 %v4754
    %v4756 = vpop.f32.mrf.mxu0
    %v4757 = vadd.f32 %v4557, %v4756
    %v4758 = vpop.f32.mrf.mxu0
    %4759 = vmatprep.mubr.f32.mxu0 0.0
    %v4760 = vand.u32 %v407, 4294901760
    %v4761 = vsub.f32 %v407, %v4760
    %v4762 = vand.u32 %v4761, 4294901760
    %4763 = vmatmul.mubr.f32.gmra.mxu0 %v4762
    %v4764 = vpop.f32.mrf.mxu0
    %v4765 = vadd.f32 %v4564, %v4764
    %v4766 = vpop.f32.mrf.mxu0
    %4767 = vmatprep.mubr.f32.mxu0 0.0
    %v4768 = vand.u32 %v412, 4294901760
    %v4769 = vsub.f32 %v412, %v4768
    %v4770 = vand.u32 %v4769, 4294901760
    %4771 = vmatmul.mubr.f32.gmra.mxu0 %v4770
    %v4772 = vpop.f32.mrf.mxu0
    %v4773 = vadd.f32 %v4571, %v4772
    %v4774 = vpop.f32.mrf.mxu0
    %4775 = vmatprep.mubr.f32.mxu0 0.0
    %v4776 = vand.u32 %v417, 4294901760
    %v4777 = vsub.f32 %v417, %v4776
    %v4778 = vand.u32 %v4777, 4294901760
    %4779 = vmatmul.mubr.f32.gmra.mxu0 %v4778
    %v4780 = vpop.f32.mrf.mxu0
    %v4781 = vadd.f32 %v4578, %v4780
    %v4782 = vpop.f32.mrf.mxu0
    %4783 = vmatprep.mubr.f32.mxu0 0.0
    %v4784 = vand.u32 %v422, 4294901760
    %v4785 = vsub.f32 %v422, %v4784
    %v4786 = vand.u32 %v4785, 4294901760
    %4787 = vmatmul.mubr.f32.gmra.mxu0 %v4786
    %v4788 = vpop.f32.mrf.mxu0
    %v4789 = vadd.f32 %v4585, %v4788
    %v4790 = vpop.f32.mrf.mxu0
    %4791 = vmatprep.mubr.f32.mxu0 0.0
    %v4792 = vand.u32 %v427, 4294901760
    %v4793 = vsub.f32 %v427, %v4792
    %v4794 = vand.u32 %v4793, 4294901760
    %4795 = vmatmul.mubr.f32.gmra.mxu0 %v4794
    %v4796 = vpop.f32.mrf.mxu0
    %v4797 = vadd.f32 %v4592, %v4796
    %v4798 = vpop.f32.mrf.mxu0
    %4799 = vmatprep.mubr.f32.mxu0 0.0
    %v4800 = vand.u32 %v432, 4294901760
    %v4801 = vsub.f32 %v432, %v4800
    %v4802 = vand.u32 %v4801, 4294901760
    %4803 = vmatmul.mubr.f32.gmra.mxu0 %v4802
    %v4804 = vpop.f32.mrf.mxu0
    %v4805 = vadd.f32 %v4599, %v4804
    %v4806 = vpop.f32.mrf.mxu0
    %4807 = vmatprep.mubr.f32.mxu0 0.0
    %v4808 = vand.u32 %v437, 4294901760
    %v4809 = vsub.f32 %v437, %v4808
    %v4810 = vand.u32 %v4809, 4294901760
    %4811 = vmatmul.mubr.f32.gmra.mxu0 %v4810
    %v4812 = vpop.f32.mrf.mxu0
    %v4813 = vadd.f32 %v4606, %v4812
    %v4814 = vpop.f32.mrf.mxu0
    %4815 = vmatprep.mubr.f32.mxu0 0.0
    %v4816 = vand.u32 %v442, 4294901760
    %v4817 = vsub.f32 %v442, %v4816
    %v4818 = vand.u32 %v4817, 4294901760
    %4819 = vmatmul.mubr.f32.gmra.mxu0 %v4818
    %v4820 = vpop.f32.mrf.mxu0
    %v4821 = vadd.f32 %v4613, %v4820
    %v4822 = vpop.f32.mrf.mxu0
    %4823 = vmatprep.mubr.f32.mxu0 0.0
    %v4824 = vand.u32 %v447, 4294901760
    %v4825 = vsub.f32 %v447, %v4824
    %v4826 = vand.u32 %v4825, 4294901760
    %4827 = vmatmul.mubr.f32.gmra.mxu0 %v4826
    %v4828 = vpop.f32.mrf.mxu0
    %v4829 = vadd.f32 %v4620, %v4828
    %v4830 = vpop.f32.mrf.mxu0
    %4831 = vdwg.mxu0
    %4832 = vmatprep.subr.mxu0 0.0
    %v4833 = vand.u32 %v527, 4294901760
    %v4834 = vsub.f32 %v527, %v4833
    %v4835 = vand.u32 %v4834, 4294901760
    %4836 = vmatpush1.msra.mxu0 %v4835
    %4837 = vmatprep.subr.mxu0 0.0
    %v4838 = vand.u32 %v526, 4294901760
    %v4839 = vsub.f32 %v526, %v4838
    %v4840 = vand.u32 %v4839, 4294901760
    %4841 = vmatpush1.msra.mxu0 %v4840
    %4842 = vmatprep.subr.mxu0 0.0
    %v4843 = vand.u32 %v525, 4294901760
    %v4844 = vsub.f32 %v525, %v4843
    %v4845 = vand.u32 %v4844, 4294901760
    %4846 = vmatpush1.msra.mxu0 %v4845
    %4847 = vmatprep.subr.mxu0 0.0
    %v4848 = vand.u32 %v524, 4294901760
    %v4849 = vsub.f32 %v524, %v4848
    %v4850 = vand.u32 %v4849, 4294901760
    %4851 = vmatpush1.msra.mxu0 %v4850
    %4852 = vmatprep.subr.mxu0 0.0
    %v4853 = vand.u32 %v523, 4294901760
    %v4854 = vsub.f32 %v523, %v4853
    %v4855 = vand.u32 %v4854, 4294901760
    %4856 = vmatpush1.msra.mxu0 %v4855
    %4857 = vmatprep.subr.mxu0 0.0
    %v4858 = vand.u32 %v522, 4294901760
    %v4859 = vsub.f32 %v522, %v4858
    %v4860 = vand.u32 %v4859, 4294901760
    %4861 = vmatpush1.msra.mxu0 %v4860
    %4862 = vmatprep.subr.mxu0 0.0
    %v4863 = vand.u32 %v521, 4294901760
    %v4864 = vsub.f32 %v521, %v4863
    %v4865 = vand.u32 %v4864, 4294901760
    %4866 = vmatpush1.msra.mxu0 %v4865
    %4867 = vmatprep.subr.mxu0 0.0
    %v4868 = vand.u32 %v520, 4294901760
    %v4869 = vsub.f32 %v520, %v4868
    %v4870 = vand.u32 %v4869, 4294901760
    %4871 = vmatpush1.msra.mxu0 %v4870
    %4872 = vmatprep.subr.mxu0 0.0
    %v4873 = vand.u32 %v519, 4294901760
    %v4874 = vsub.f32 %v519, %v4873
    %v4875 = vand.u32 %v4874, 4294901760
    %4876 = vmatpush1.msra.mxu0 %v4875
    %4877 = vmatprep.subr.mxu0 0.0
    %v4878 = vand.u32 %v518, 4294901760
    %v4879 = vsub.f32 %v518, %v4878
    %v4880 = vand.u32 %v4879, 4294901760
    %4881 = vmatpush1.msra.mxu0 %v4880
    %4882 = vmatprep.subr.mxu0 0.0
    %v4883 = vand.u32 %v517, 4294901760
    %v4884 = vsub.f32 %v517, %v4883
    %v4885 = vand.u32 %v4884, 4294901760
    %4886 = vmatpush1.msra.mxu0 %v4885
    %4887 = vmatprep.subr.mxu0 0.0
    %v4888 = vand.u32 %v516, 4294901760
    %v4889 = vsub.f32 %v516, %v4888
    %v4890 = vand.u32 %v4889, 4294901760
    %4891 = vmatpush1.msra.mxu0 %v4890
    %4892 = vmatprep.subr.mxu0 0.0
    %v4893 = vand.u32 %v515, 4294901760
    %v4894 = vsub.f32 %v515, %v4893
    %v4895 = vand.u32 %v4894, 4294901760
    %4896 = vmatpush1.msra.mxu0 %v4895
    %4897 = vmatprep.subr.mxu0 0.0
    %v4898 = vand.u32 %v514, 4294901760
    %v4899 = vsub.f32 %v514, %v4898
    %v4900 = vand.u32 %v4899, 4294901760
    %4901 = vmatpush1.msra.mxu0 %v4900
    %4902 = vmatprep.subr.mxu0 0.0
    %v4903 = vand.u32 %v513, 4294901760
    %v4904 = vsub.f32 %v513, %v4903
    %v4905 = vand.u32 %v4904, 4294901760
    %4906 = vmatpush1.msra.mxu0 %v4905
    %4907 = vmatprep.subr.mxu0 0.0
    %v4908 = vand.u32 %v512, 4294901760
    %v4909 = vsub.f32 %v512, %v4908
    %v4910 = vand.u32 %v4909, 4294901760
    %4911 = vmatpush1.msra.mxu0 %v4910
    %4912 = vmatprep.subr.mxu0 0.0
    %4913 = vmatpush2.msra.mxu0 0.0
    %4914 = vmatprep.subr.mxu0 0.0
    %4915 = vmatpush2.msra.mxu0 0.0
    %4916 = vmatprep.subr.mxu0 0.0
    %4917 = vmatpush2.msra.mxu0 0.0
    %4918 = vmatprep.subr.mxu0 0.0
    %4919 = vmatpush2.msra.mxu0 0.0
    %4920 = vmatprep.subr.mxu0 0.0
    %4921 = vmatpush2.msra.mxu0 0.0
    %4922 = vmatprep.subr.mxu0 0.0
    %4923 = vmatpush2.msra.mxu0 0.0
    %4924 = vmatprep.subr.mxu0 0.0
    %4925 = vmatpush2.msra.mxu0 0.0
    %4926 = vmatprep.subr.mxu0 0.0
    %4927 = vmatpush2.msra.mxu0 0.0
    %4928 = vmatprep.subr.mxu0 0.0
    %4929 = vmatpush2.msra.mxu0 0.0
    %4930 = vmatprep.subr.mxu0 0.0
    %4931 = vmatpush2.msra.mxu0 0.0
    %4932 = vmatprep.subr.mxu0 0.0
    %4933 = vmatpush2.msra.mxu0 0.0
    %4934 = vmatprep.subr.mxu0 0.0
    %4935 = vmatpush2.msra.mxu0 0.0
    %4936 = vmatprep.subr.mxu0 0.0
    %4937 = vmatpush2.msra.mxu0 0.0
    %4938 = vmatprep.subr.mxu0 0.0
    %4939 = vmatpush2.msra.mxu0 0.0
    %4940 = vmatprep.subr.mxu0 0.0
    %4941 = vmatpush2.msra.mxu0 0.0
    %4942 = vmatprep.subr.mxu0 0.0
    %4943 = vmatpush2.msra.mxu0 0.0
    %4944 = vmatprep.mubr.f32.mxu0 0.0
    %v4945 = vand.u32 %v372, 4294901760
    %4946 = vmatmul.mubr.f32.gmra.mxu0 %v4945
    %v4947 = vpop.f32.mrf.mxu0
    %v4948 = vadd.f32 %v4709, %v4947
    %v4949 = vpop.f32.mrf.mxu0
    %4950 = vmatprep.mubr.f32.mxu0 0.0
    %v4951 = vand.u32 %v377, 4294901760
    %4952 = vmatmul.mubr.f32.gmra.mxu0 %v4951
    %v4953 = vpop.f32.mrf.mxu0
    %v4954 = vadd.f32 %v4717, %v4953
    %v4955 = vpop.f32.mrf.mxu0
    %4956 = vmatprep.mubr.f32.mxu0 0.0
    %v4957 = vand.u32 %v382, 4294901760
    %4958 = vmatmul.mubr.f32.gmra.mxu0 %v4957
    %v4959 = vpop.f32.mrf.mxu0
    %v4960 = vadd.f32 %v4725, %v4959
    %v4961 = vpop.f32.mrf.mxu0
    %4962 = vmatprep.mubr.f32.mxu0 0.0
    %v4963 = vand.u32 %v387, 4294901760
    %4964 = vmatmul.mubr.f32.gmra.mxu0 %v4963
    %v4965 = vpop.f32.mrf.mxu0
    %v4966 = vadd.f32 %v4733, %v4965
    %v4967 = vpop.f32.mrf.mxu0
    %4968 = vmatprep.mubr.f32.mxu0 0.0
    %v4969 = vand.u32 %v392, 4294901760
    %4970 = vmatmul.mubr.f32.gmra.mxu0 %v4969
    %v4971 = vpop.f32.mrf.mxu0
    %v4972 = vadd.f32 %v4741, %v4971
    %v4973 = vpop.f32.mrf.mxu0
    %4974 = vmatprep.mubr.f32.mxu0 0.0
    %v4975 = vand.u32 %v397, 4294901760
    %4976 = vmatmul.mubr.f32.gmra.mxu0 %v4975
    %v4977 = vpop.f32.mrf.mxu0
    %v4978 = vadd.f32 %v4749, %v4977
    %v4979 = vpop.f32.mrf.mxu0
    %4980 = vmatprep.mubr.f32.mxu0 0.0
    %v4981 = vand.u32 %v402, 4294901760
    %4982 = vmatmul.mubr.f32.gmra.mxu0 %v4981
    %v4983 = vpop.f32.mrf.mxu0
    %v4984 = vadd.f32 %v4757, %v4983
    %v4985 = vpop.f32.mrf.mxu0
    %4986 = vmatprep.mubr.f32.mxu0 0.0
    %v4987 = vand.u32 %v407, 4294901760
    %4988 = vmatmul.mubr.f32.gmra.mxu0 %v4987
    %v4989 = vpop.f32.mrf.mxu0
    %v4990 = vadd.f32 %v4765, %v4989
    %v4991 = vpop.f32.mrf.mxu0
    %4992 = vmatprep.mubr.f32.mxu0 0.0
    %v4993 = vand.u32 %v412, 4294901760
    %4994 = vmatmul.mubr.f32.gmra.mxu0 %v4993
    %v4995 = vpop.f32.mrf.mxu0
    %v4996 = vadd.f32 %v4773, %v4995
    %v4997 = vpop.f32.mrf.mxu0
    %4998 = vmatprep.mubr.f32.mxu0 0.0
    %v4999 = vand.u32 %v417, 4294901760
    %5000 = vmatmul.mubr.f32.gmra.mxu0 %v4999
    %v5001 = vpop.f32.mrf.mxu0
    %v5002 = vadd.f32 %v4781, %v5001
    %v5003 = vpop.f32.mrf.mxu0
    %5004 = vmatprep.mubr.f32.mxu0 0.0
    %v5005 = vand.u32 %v422, 4294901760
    %5006 = vmatmul.mubr.f32.gmra.mxu0 %v5005
    %v5007 = vpop.f32.mrf.mxu0
    %v5008 = vadd.f32 %v4789, %v5007
    %v5009 = vpop.f32.mrf.mxu0
    %5010 = vmatprep.mubr.f32.mxu0 0.0
    %v5011 = vand.u32 %v427, 4294901760
    %5012 = vmatmul.mubr.f32.gmra.mxu0 %v5011
    %v5013 = vpop.f32.mrf.mxu0
    %v5014 = vadd.f32 %v4797, %v5013
    %v5015 = vpop.f32.mrf.mxu0
    %5016 = vmatprep.mubr.f32.mxu0 0.0
    %v5017 = vand.u32 %v432, 4294901760
    %5018 = vmatmul.mubr.f32.gmra.mxu0 %v5017
    %v5019 = vpop.f32.mrf.mxu0
    %v5020 = vadd.f32 %v4805, %v5019
    %v5021 = vpop.f32.mrf.mxu0
    %5022 = vmatprep.mubr.f32.mxu0 0.0
    %v5023 = vand.u32 %v437, 4294901760
    %5024 = vmatmul.mubr.f32.gmra.mxu0 %v5023
    %v5025 = vpop.f32.mrf.mxu0
    %v5026 = vadd.f32 %v4813, %v5025
    %v5027 = vpop.f32.mrf.mxu0
    %5028 = vmatprep.mubr.f32.mxu0 0.0
    %v5029 = vand.u32 %v442, 4294901760
    %5030 = vmatmul.mubr.f32.gmra.mxu0 %v5029
    %v5031 = vpop.f32.mrf.mxu0
    %v5032 = vadd.f32 %v4821, %v5031
    %v5033 = vpop.f32.mrf.mxu0
    %5034 = vmatprep.mubr.f32.mxu0 0.0
    %v5035 = vand.u32 %v447, 4294901760
    %5036 = vmatmul.mubr.f32.gmra.mxu0 %v5035
    %v5037 = vpop.f32.mrf.mxu0
    %v5038 = vadd.f32 %v4829, %v5037
    %v5039 = vpop.f32.mrf.mxu0
    %5040 = vdwg.mxu0
    %5041 = vmatprep.subr.mxu0 0.0
    %v5042 = vand.u32 %v527, 4294901760
    %5043 = vmatpush1.msra.mxu0 %v5042
    %5044 = vmatprep.subr.mxu0 0.0
    %v5045 = vand.u32 %v526, 4294901760
    %5046 = vmatpush1.msra.mxu0 %v5045
    %5047 = vmatprep.subr.mxu0 0.0
    %v5048 = vand.u32 %v525, 4294901760
    %5049 = vmatpush1.msra.mxu0 %v5048
    %5050 = vmatprep.subr.mxu0 0.0
    %v5051 = vand.u32 %v524, 4294901760
    %5052 = vmatpush1.msra.mxu0 %v5051
    %5053 = vmatprep.subr.mxu0 0.0
    %v5054 = vand.u32 %v523, 4294901760
    %5055 = vmatpush1.msra.mxu0 %v5054
    %5056 = vmatprep.subr.mxu0 0.0
    %v5057 = vand.u32 %v522, 4294901760
    %5058 = vmatpush1.msra.mxu0 %v5057
    %5059 = vmatprep.subr.mxu0 0.0
    %v5060 = vand.u32 %v521, 4294901760
    %5061 = vmatpush1.msra.mxu0 %v5060
    %5062 = vmatprep.subr.mxu0 0.0
    %v5063 = vand.u32 %v520, 4294901760
    %5064 = vmatpush1.msra.mxu0 %v5063
    %5065 = vmatprep.subr.mxu0 0.0
    %v5066 = vand.u32 %v519, 4294901760
    %5067 = vmatpush1.msra.mxu0 %v5066
    %5068 = vmatprep.subr.mxu0 0.0
    %v5069 = vand.u32 %v518, 4294901760
    %5070 = vmatpush1.msra.mxu0 %v5069
    %5071 = vmatprep.subr.mxu0 0.0
    %v5072 = vand.u32 %v517, 4294901760
    %5073 = vmatpush1.msra.mxu0 %v5072
    %5074 = vmatprep.subr.mxu0 0.0
    %v5075 = vand.u32 %v516, 4294901760
    %5076 = vmatpush1.msra.mxu0 %v5075
    %5077 = vmatprep.subr.mxu0 0.0
    %v5078 = vand.u32 %v515, 4294901760
    %5079 = vmatpush1.msra.mxu0 %v5078
    %5080 = vmatprep.subr.mxu0 0.0
    %v5081 = vand.u32 %v514, 4294901760
    %5082 = vmatpush1.msra.mxu0 %v5081
    %5083 = vmatprep.subr.mxu0 0.0
    %v5084 = vand.u32 %v513, 4294901760
    %5085 = vmatpush1.msra.mxu0 %v5084
    %5086 = vmatprep.subr.mxu0 0.0
    %v5087 = vand.u32 %v512, 4294901760
    %5088 = vmatpush1.msra.mxu0 %v5087
    %5089 = vmatprep.subr.mxu0 0.0
    %5090 = vmatpush2.msra.mxu0 0.0
    %5091 = vmatprep.subr.mxu0 0.0
    %5092 = vmatpush2.msra.mxu0 0.0
    %5093 = vmatprep.subr.mxu0 0.0
    %5094 = vmatpush2.msra.mxu0 0.0
    %5095 = vmatprep.subr.mxu0 0.0
    %5096 = vmatpush2.msra.mxu0 0.0
    %5097 = vmatprep.subr.mxu0 0.0
    %5098 = vmatpush2.msra.mxu0 0.0
    %5099 = vmatprep.subr.mxu0 0.0
    %5100 = vmatpush2.msra.mxu0 0.0
    %5101 = vmatprep.subr.mxu0 0.0
    %5102 = vmatpush2.msra.mxu0 0.0
    %5103 = vmatprep.subr.mxu0 0.0
    %5104 = vmatpush2.msra.mxu0 0.0
    %5105 = vmatprep.subr.mxu0 0.0
    %5106 = vmatpush2.msra.mxu0 0.0
    %5107 = vmatprep.subr.mxu0 0.0
    %5108 = vmatpush2.msra.mxu0 0.0
    %5109 = vmatprep.subr.mxu0 0.0
    %5110 = vmatpush2.msra.mxu0 0.0
    %5111 = vmatprep.subr.mxu0 0.0
    %5112 = vmatpush2.msra.mxu0 0.0
    %5113 = vmatprep.subr.mxu0 0.0
    %5114 = vmatpush2.msra.mxu0 0.0
    %5115 = vmatprep.subr.mxu0 0.0
    %5116 = vmatpush2.msra.mxu0 0.0
    %5117 = vmatprep.subr.mxu0 0.0
    %5118 = vmatpush2.msra.mxu0 0.0
    %5119 = vmatprep.subr.mxu0 0.0
    %5120 = vmatpush2.msra.mxu0 0.0
    %5121 = vmatprep.mubr.f32.mxu0 0.0
    %v5122 = vand.u32 %v372, 4294901760
    %5123 = vmatmul.mubr.f32.gmra.mxu0 %v5122
    %v5124 = vpop.f32.mrf.mxu0
    %v5125 = vadd.f32 %v4948, %v5124
    %v5126 = vpop.f32.mrf.mxu0
    %5127 = vmatprep.mubr.f32.mxu0 0.0
    %v5128 = vand.u32 %v377, 4294901760
    %5129 = vmatmul.mubr.f32.gmra.mxu0 %v5128
    %v5130 = vpop.f32.mrf.mxu0
    %v5131 = vadd.f32 %v4954, %v5130
    %v5132 = vpop.f32.mrf.mxu0
    %5133 = vmatprep.mubr.f32.mxu0 0.0
    %v5134 = vand.u32 %v382, 4294901760
    %5135 = vmatmul.mubr.f32.gmra.mxu0 %v5134
    %v5136 = vpop.f32.mrf.mxu0
    %v5137 = vadd.f32 %v4960, %v5136
    %v5138 = vpop.f32.mrf.mxu0
    %5139 = vmatprep.mubr.f32.mxu0 0.0
    %v5140 = vand.u32 %v387, 4294901760
    %5141 = vmatmul.mubr.f32.gmra.mxu0 %v5140
    %v5142 = vpop.f32.mrf.mxu0
    %v5143 = vadd.f32 %v4966, %v5142
    %v5144 = vpop.f32.mrf.mxu0
    %5145 = vmatprep.mubr.f32.mxu0 0.0
    %v5146 = vand.u32 %v392, 4294901760
    %5147 = vmatmul.mubr.f32.gmra.mxu0 %v5146
    %v5148 = vpop.f32.mrf.mxu0
    %v5149 = vadd.f32 %v4972, %v5148
    %v5150 = vpop.f32.mrf.mxu0
    %5151 = vmatprep.mubr.f32.mxu0 0.0
    %v5152 = vand.u32 %v397, 4294901760
    %5153 = vmatmul.mubr.f32.gmra.mxu0 %v5152
    %v5154 = vpop.f32.mrf.mxu0
    %v5155 = vadd.f32 %v4978, %v5154
    %v5156 = vpop.f32.mrf.mxu0
    %5157 = vmatprep.mubr.f32.mxu0 0.0
    %v5158 = vand.u32 %v402, 4294901760
    %5159 = vmatmul.mubr.f32.gmra.mxu0 %v5158
    %v5160 = vpop.f32.mrf.mxu0
    %v5161 = vadd.f32 %v4984, %v5160
    %v5162 = vpop.f32.mrf.mxu0
    %5163 = vmatprep.mubr.f32.mxu0 0.0
    %v5164 = vand.u32 %v407, 4294901760
    %5165 = vmatmul.mubr.f32.gmra.mxu0 %v5164
    %v5166 = vpop.f32.mrf.mxu0
    %v5167 = vadd.f32 %v4990, %v5166
    %v5168 = vpop.f32.mrf.mxu0
    %5169 = vmatprep.mubr.f32.mxu0 0.0
    %v5170 = vand.u32 %v412, 4294901760
    %5171 = vmatmul.mubr.f32.gmra.mxu0 %v5170
    %v5172 = vpop.f32.mrf.mxu0
    %v5173 = vadd.f32 %v4996, %v5172
    %v5174 = vpop.f32.mrf.mxu0
    %5175 = vmatprep.mubr.f32.mxu0 0.0
    %v5176 = vand.u32 %v417, 4294901760
    %5177 = vmatmul.mubr.f32.gmra.mxu0 %v5176
    %v5178 = vpop.f32.mrf.mxu0
    %v5179 = vadd.f32 %v5002, %v5178
    %v5180 = vpop.f32.mrf.mxu0
    %5181 = vmatprep.mubr.f32.mxu0 0.0
    %v5182 = vand.u32 %v422, 4294901760
    %5183 = vmatmul.mubr.f32.gmra.mxu0 %v5182
    %v5184 = vpop.f32.mrf.mxu0
    %v5185 = vadd.f32 %v5008, %v5184
    %v5186 = vpop.f32.mrf.mxu0
    %5187 = vmatprep.mubr.f32.mxu0 0.0
    %v5188 = vand.u32 %v427, 4294901760
    %5189 = vmatmul.mubr.f32.gmra.mxu0 %v5188
    %v5190 = vpop.f32.mrf.mxu0
    %v5191 = vadd.f32 %v5014, %v5190
    %v5192 = vpop.f32.mrf.mxu0
    %5193 = vmatprep.mubr.f32.mxu0 0.0
    %v5194 = vand.u32 %v432, 4294901760
    %5195 = vmatmul.mubr.f32.gmra.mxu0 %v5194
    %v5196 = vpop.f32.mrf.mxu0
    %v5197 = vadd.f32 %v5020, %v5196
    %v5198 = vpop.f32.mrf.mxu0
    %5199 = vmatprep.mubr.f32.mxu0 0.0
    %v5200 = vand.u32 %v437, 4294901760
    %5201 = vmatmul.mubr.f32.gmra.mxu0 %v5200
    %v5202 = vpop.f32.mrf.mxu0
    %v5203 = vadd.f32 %v5026, %v5202
    %v5204 = vpop.f32.mrf.mxu0
    %5205 = vmatprep.mubr.f32.mxu0 0.0
    %v5206 = vand.u32 %v442, 4294901760
    %5207 = vmatmul.mubr.f32.gmra.mxu0 %v5206
    %v5208 = vpop.f32.mrf.mxu0
    %v5209 = vadd.f32 %v5032, %v5208
    %v5210 = vpop.f32.mrf.mxu0
    %5211 = vmatprep.mubr.f32.mxu0 0.0
    %v5212 = vand.u32 %v447, 4294901760
    %5213 = vmatmul.mubr.f32.gmra.mxu0 %v5212
    %v5214 = vpop.f32.mrf.mxu0
    %v5215 = vadd.f32 %v5038, %v5214
    %v5216 = vpop.f32.mrf.mxu0
    %5217 = vdwg.mxu0
    %5218 = vst [vmem:[#allocation6] sm:$0xff] %v5125
    %5219 = vst [vmem:[#allocation6 + $0x8] sm:$0xff] %v5131
    %5220 = vst [vmem:[#allocation6 + $0x10] sm:$0xff] %v5137
    %5221 = vst [vmem:[#allocation6 + $0x18] sm:$0xff] %v5143
    %5222 = vst [vmem:[#allocation6 + $0x20] sm:$0xff] %v5149
    %5223 = vst [vmem:[#allocation6 + $0x28] sm:$0xff] %v5155
    %5224 = vst [vmem:[#allocation6 + $0x30] sm:$0xff] %v5161
    %5225 = vst [vmem:[#allocation6 + $0x38] sm:$0xff] %v5167
    %5226 = vst [vmem:[#allocation6 + $0x40] sm:$0xff] %v5173
    %5227 = vst [vmem:[#allocation6 + $0x48] sm:$0xff] %v5179
    %5228 = vst [vmem:[#allocation6 + $0x50] sm:$0xff] %v5185
    %5229 = vst [vmem:[#allocation6 + $0x58] sm:$0xff] %v5191
    %5230 = vst [vmem:[#allocation6 + $0x60] sm:$0xff] %v5197
    %5231 = vst [vmem:[#allocation6 + $0x68] sm:$0xff] %v5203
    %5232 = vst [vmem:[#allocation6 + $0x70] sm:$0xff] %v5209
    %5233 = vst [vmem:[#allocation6 + $0x78] sm:$0xff] %v5215
    // Predicated region
    $region18: #{tpu_custom_call.1} parent=1 // pred_check
      _
    $region19: #{tpu_custom_call.1} parent=1 // pred_check_branch
      %5235 = sbr.rel (0) target = $region21
    $region20: #{tpu_custom_call.1} parent=1 // pred_region
      %s5237 = ssub.s32 2048, 2048
      %5238 = vsyncadd [#allocation5], %s5237
      %s5239 = sshll.u32 [#allocation6], 4
      %s5240 = int_to_ptr.vmem [resolvable:$true] %s5239
      %5245 = dma.vmem_to_hbm [thread:$0]  %s5240, 2048, %s2, [#allocation5], 128, 128, 8
    $region21: #{tpu_custom_call.1} parent=1 // pred_fallthru
      _
    // Predicated region
    $region22: #{tpu_custom_call.1} parent=1 // pred_check
      _
    $region23: #{tpu_custom_call.1} parent=1 // pred_check_branch
      %5247 = sbr.rel (0) target = $region25
    $region24: #{tpu_custom_call.1} parent=1 // pred_region
      %5248 = dma.done [#allocation5], 2048
    $region25: #{tpu_custom_call.1} parent=1 // pred_fallthru
      _
    %5249 = vsyncpa [#allocation4], 1
    %5250 = vsyncpa [#allocation5], 1

</llo_original>
